<compile_context>
chip_gen: v6e
topology: v6e:2x2x1
jax: 0.10.0
libtpu: 0.0.40
codegen_flags: <defaults>
</compile_context>

<pallas_src>
import functools

import jax
import jax.numpy as jnp
from jax.experimental import pallas as pl
from jax.experimental.pallas import tpu as pltpu

EPS = 1e-5                         # nn.InstanceNorm2d default eps
VMEM_LIMIT = 64 * 1024 * 1024      # explicit scoped-VMEM limit


# ---------------------------------------------------------------- kernels ---

def _conv_in_relu_kernel(p_ref, w_ref, o_ref):
    # p_ref: (K, P) bf16 im2col patches    w_ref: (Cout, K) bf16
    # o_ref: (Cout, P) bf16
    # Conv bias omitted: InstanceNorm2d(affine=False) cancels it exactly.
    y = jnp.dot(w_ref[...], p_ref[...], preferred_element_type=jnp.float32)
    inv_p = 1.0 / y.shape[-1]
    mean = jnp.sum(y, axis=-1, keepdims=True) * inv_p
    d = y - mean
    var = jnp.sum(d * d, axis=-1, keepdims=True) * inv_p      # two-pass variance
    o_ref[...] = jnp.maximum(d * jax.lax.rsqrt(var + EPS), 0.0).astype(o_ref.dtype)


def _res_block_kernel(x_ref, w1_ref, w2_ref, b2_ref, m_ref, o_ref, h_ref, *, H, W):
    # x_ref : (C, Lp) bf16  padded, row-flattened activation, Lp = (H+3)*(W+2)
    # w*_ref: (9, C, C) bf16  3x3 taps; tap t = 3*di+dj holds weight[:, :, di, dj]
    # b2_ref: (C, 1) f32      bias of the 2nd conv (the only bias not killed by IN)
    # m_ref : (1, L) f32      validity mask of the H*(W+2) working window
    # o_ref : (C, Lp)         output, same padded flattened layout as x_ref
    # h_ref : (C, Lp) bf16    VMEM scratch holding the IN+ReLU intermediate
    Wp = W + 2
    L = H * Wp
    C = h_ref.shape[0]
    offs = [di * Wp + dj for di in range(3) for dj in range(3)]
    maskf = m_ref[...]                       # 1.0 at real pixels, 0.0 at pad cols
    inv_cnt = 1.0 / float(H * W)

    # conv1 (3x3, pad 1) as 9 shifted-tap matmuls (bias dropped: IN cancels it).
    acc = jnp.zeros((C, L), jnp.float32)
    for t, off in enumerate(offs):
        acc += jnp.dot(w1_ref[t], x_ref[:, pl.ds(off, L)],
                       preferred_element_type=jnp.float32)

    # InstanceNorm2d(affine=False) + ReLU; stats over valid pixels only (f32).
    mean = jnp.sum(acc * maskf, axis=-1, keepdims=True) * inv_cnt
    d = (acc - mean) * maskf
    var = jnp.sum(d * d, axis=-1, keepdims=True) * inv_cnt
    h = jnp.maximum(d * jax.lax.rsqrt(var + EPS), 0.0)

    # Stage h in the same zero-padded flattened layout so conv2's taps can read
    # it with plain shifted lane slices (borders stay zero = conv padding).
    h_ref[...] = jnp.zeros_like(h_ref)
    h_ref[:, pl.ds(Wp + 1, L)] = h.astype(h_ref.dtype)

    # conv2 (3x3, pad 1) + bias + residual add (residual = center tap of x).
    acc2 = b2_ref[...] + x_ref[:, pl.ds(Wp + 1, L)].astype(jnp.float32)
    for t, off in enumerate(offs):
        acc2 += jnp.dot(w2_ref[t], h_ref[:, pl.ds(off, L)],
                        preferred_element_type=jnp.float32)

    # Store in the canonical padded flattened layout (zeros in the border),
    # so the next residual block consumes this output directly.
    o_ref[...] = jnp.zeros_like(o_ref)
    o_ref[:, pl.ds(Wp + 1, L)] = (acc2 * maskf).astype(o_ref.dtype)


# --------------------------------------------------------------- wrappers ---

def _im2col_nchw(x, kh, kw, stride, pad):
    """x: (N, C, H, W) -> patches (N, K=C*kh*kw, P=Ho*Wo), same dtype as x."""
    N, C, H, W = x.shape
    xp = jnp.pad(x, ((0, 0), (0, 0), (pad, pad), (pad, pad)))
    Ho = (H + 2 * pad - kh) // stride + 1
    Wo = (W + 2 * pad - kw) // stride + 1
    cols = []
    for i in range(kh):
        for j in range(kw):
            cols.append(
                xp[:, :, i:i + stride * Ho:stride, j:j + stride * Wo:stride])
    patches = jnp.stack(cols, axis=2)              # (N, C, kh*kw, Ho, Wo)
    return patches.reshape(N, C * kh * kw, Ho * Wo), Ho, Wo


def conv_in_relu(x, w, stride, pad):
    """Conv2d + InstanceNorm2d(affine=False) + ReLU (stem). x is NCHW."""
    Cout, Cin, kh, kw = w.shape
    # bf16 BEFORE im2col: the replicated patch tensor is written/read in bf16.
    patches, Ho, Wo = _im2col_nchw(x.astype(jnp.bfloat16), kh, kw, stride, pad)
    N, K, P = patches.shape
    w_mat = w.reshape(Cout, Cin * kh * kw).astype(jnp.bfloat16)
    out = pl.pallas_call(
        _conv_in_relu_kernel,
        out_shape=jax.ShapeDtypeStruct((N, Cout, P), jnp.bfloat16),
        grid=(N,),
        in_specs=[
            pl.BlockSpec((None, K, P), lambda n: (n, 0, 0)),
            pl.BlockSpec((Cout, K), lambda n: (0, 0)),
        ],
        out_specs=pl.BlockSpec((None, Cout, P), lambda n: (n, 0, 0)),
        compiler_params=pltpu.CompilerParams(
            dimension_semantics=("parallel",),
            vmem_limit_bytes=VMEM_LIMIT),
    )(patches, w_mat)
    return out.reshape(N, Cout, Ho, Wo)


def _to_padded_flat(x):
    """(N, C, H, W) -> (N, C, (H+3)*(W+2)) zero-padded, row-flattened, bf16."""
    N, C, H, W = x.shape
    xp = jnp.pad(x, ((0, 0), (0, 0), (1, 2), (1, 1)))
    return xp.reshape(N, C, (H + 3) * (W + 2)).astype(jnp.bfloat16)


def _from_padded_flat(y, H, W):
    N, C, _ = y.shape
    return y.reshape(N, C, H + 3, W + 2)[:, :, 1:H + 1, 1:W + 1]


def residual_block(x_flat, w1, w2, b2, H, W, out_dtype):
    """x + conv2(relu(IN(conv1(x)))), fused into a single pallas_call.

    x_flat: (N, C, (H+3)*(W+2)) bf16 padded flattened activations; the output
    has the same layout and is directly consumable by the next block.
    """
    N, C, Lp = x_flat.shape
    Wp = W + 2
    L = H * Wp
    assert Lp == (H + 3) * Wp
    w1_t = jnp.transpose(w1, (2, 3, 0, 1)).reshape(9, C, C).astype(jnp.bfloat16)
    w2_t = jnp.transpose(w2, (2, 3, 0, 1)).reshape(9, C, C).astype(jnp.bfloat16)
    b2_m = b2.reshape(C, 1).astype(jnp.float32)
    # 1.0 where the flattened working window holds a real pixel, 0.0 at the
    # two padding columns of each Wp-wide row.
    maskf = ((jnp.arange(L) % Wp) < W).astype(jnp.float32).reshape(1, L)
    kernel = functools.partial(_res_block_kernel, H=H, W=W)
    return pl.pallas_call(
        kernel,
        out_shape=jax.ShapeDtypeStruct((N, C, Lp), out_dtype),
        grid=(N,),
        in_specs=[
            pl.BlockSpec((None, C, Lp), lambda n: (n, 0, 0)),
            pl.BlockSpec((9, C, C), lambda n: (0, 0, 0)),
            pl.BlockSpec((9, C, C), lambda n: (0, 0, 0)),
            pl.BlockSpec((C, 1), lambda n: (0, 0)),
            pl.BlockSpec((1, L), lambda n: (0, 0)),
        ],
        out_specs=pl.BlockSpec((None, C, Lp), lambda n: (n, 0, 0)),
        scratch_shapes=[pltpu.VMEM((C, Lp), jnp.bfloat16)],
        compiler_params=pltpu.CompilerParams(
            dimension_semantics=("parallel",),
            vmem_limit_bytes=VMEM_LIMIT),
    )(x_flat, w1_t, w2_t, b2_m, maskf)


# --------------------------------------------------------- model assembly ---

def init_params(key, channel_size):
    # Parameter set mirrors the PyTorch module.  Biases that are immediately
    # followed by InstanceNorm2d(affine=False) (c*_b, r*a_b) are kept for
    # parity but never used: IN's mean subtraction cancels them exactly.
    C = channel_size
    shapes = {
        "c1_w": (C, 3, 7, 7), "c1_b": (C,),
        "c2_w": (2 * C, C, 4, 4), "c2_b": (2 * C,),
        "c3_w": (4 * C, 2 * C, 4, 4), "c3_b": (4 * C,),
    }
    for i in range(1, 5):
        shapes[f"r{i}a_w"] = (4 * C, 4 * C, 3, 3)
        shapes[f"r{i}a_b"] = (4 * C,)
        shapes[f"r{i}b_w"] = (4 * C, 4 * C, 3, 3)
        shapes[f"r{i}b_b"] = (4 * C,)
    params = {}
    keys = jax.random.split(key, len(shapes))
    for k, (name, shp) in zip(keys, sorted(shapes.items())):
        params[name] = 0.1 * jax.random.normal(k, shp, dtype=jnp.float32)
    return params


def content_encoder_forward(x_nchw, params, channel_size, code_h, code_w):
    x = x_nchw.astype(jnp.bfloat16)                  # bf16 before any im2col
    # stem: 3x (conv + InstanceNorm + ReLU)  (biases are no-ops under IN)
    x = conv_in_relu(x, params["c1_w"], stride=1, pad=3)
    x = conv_in_relu(x, params["c2_w"], stride=2, pad=1)
    x = conv_in_relu(x, params["c3_w"], stride=2, pad=1)
    N, C, H, W = x.shape
    # 4 fused residual blocks chained on the padded flattened layout.
    xf = _to_padded_flat(x)
    for i in range(1, 5):
        out_dtype = jnp.float32 if i == 4 else jnp.bfloat16
        xf = residual_block(xf, params[f"r{i}a_w"], params[f"r{i}b_w"],
                            params[f"r{i}b_b"], H, W, out_dtype)
    x = _from_padded_flat(xf, H, W).astype(jnp.float32)
    return x.reshape(-1, channel_size * 4, code_h, code_w)      # final .view


# -------------------------------------------------------------------- main ---

if __name__ == "__main__":
    # Small config consistent with the module: input H=W=16 -> content code 4x4
    CHANNEL_SIZE = 8
    CODE_H, CODE_W = 4, 4
    key = jax.random.PRNGKey(0)
    k_x, k_p = jax.random.split(key)
    x = jax.random.normal(k_x, (2, 3, 16, 16), dtype=jnp.float32)  # NCHW input
    params = init_params(k_p, CHANNEL_SIZE)

    fwd = jax.jit(lambda inp: content_encoder_forward(
        inp, params, CHANNEL_SIZE, CODE_H, CODE_W))
    out = jax.block_until_ready(fwd(x))
    assert out.shape == (2, CHANNEL_SIZE * 4, CODE_H, CODE_W), out.shape
    assert bool(jnp.all(jnp.isfinite(out)))
    print("KERNEL_OK")
</pallas_src>

<mosaic_0001>
module attributes {stable_mosaic.version = 11 : i64} {
  func.func @_conv_in_relu_kernel(%arg0: i32, %arg1: memref<1x147x256xbf16, #tpu.memory_space<vmem>>, %arg2: memref<8x147xbf16, #tpu.memory_space<vmem>>, %arg3: memref<1x8x256xbf16, #tpu.memory_space<vmem>>) attributes {dimension_semantics = [#tpu.dimension_semantics<parallel>], iteration_bounds = array<i64: 2>, scalar_prefetch = 0 : i64, scratch_operands = 0 : i64, tpu.core_type = #tpu.core_type<tc>, window_params = [{transform_indices = @transform_0, window_bounds = array<i64: 1, 147, 256>}, {pipeline_mode = #tpu.pipeline_mode<synchronous>, transform_indices = @transform_1, window_bounds = array<i64: 8, 147>}, {transform_indices = @transform_2, window_bounds = array<i64: 1, 8, 256>}]} {
    %c0 = arith.constant 0 : index
    %c0_0 = arith.constant 0 : index
    %0 = vector.load %arg2[%c0, %c0_0] : memref<8x147xbf16, #tpu.memory_space<vmem>>, vector<8x147xbf16>
    %c0_1 = arith.constant 0 : index
    %c0_2 = arith.constant 0 : index
    %c0_3 = arith.constant 0 : index
    %1 = vector.load %arg1[%c0_1, %c0_2, %c0_3] : memref<1x147x256xbf16, #tpu.memory_space<vmem>>, vector<1x147x256xbf16>
    %2 = vector.shape_cast %1 : vector<1x147x256xbf16> to vector<147x256xbf16>
    %cst = arith.constant dense<0.000000e+00> : vector<8x256xf32>
    %3 = tpu.matmul %0, %2, %cst {dimension_numbers = #tpu.dot_dimension_numbers<[1], [0], [0], [1], [0, 0, 1, 1], [], []>} : vector<8x147xbf16>, vector<147x256xbf16>, vector<8x256xf32> -> vector<8x256xf32>
    %cst_4 = arith.constant dense<0.000000e+00> : vector<8xf32>
    %4 = vector.multi_reduction <add>, %3, %cst_4 [1] : vector<8x256xf32> to vector<8xf32>
    %5 = vector.shape_cast %4 : vector<8xf32> to vector<8x1xf32>
    %cst_5 = arith.constant 3.906250e-03 : f32
    %6 = vector.broadcast %cst_5 : f32 to vector<8x1xf32>
    %7 = arith.mulf %5, %6 : vector<8x1xf32>
    %8 = vector.broadcast %7 : vector<8x1xf32> to vector<8x256xf32>
    %9 = arith.subf %3, %8 : vector<8x256xf32>
    %10 = arith.mulf %9, %9 : vector<8x256xf32>
    %cst_6 = arith.constant dense<0.000000e+00> : vector<8xf32>
    %11 = vector.multi_reduction <add>, %10, %cst_6 [1] : vector<8x256xf32> to vector<8xf32>
    %12 = vector.shape_cast %11 : vector<8xf32> to vector<8x1xf32>
    %cst_7 = arith.constant 3.906250e-03 : f32
    %13 = vector.broadcast %cst_7 : f32 to vector<8x1xf32>
    %14 = arith.mulf %12, %13 : vector<8x1xf32>
    %cst_8 = arith.constant 9.99999974E-6 : f32
    %15 = vector.broadcast %cst_8 : f32 to vector<8x1xf32>
    %16 = arith.addf %14, %15 : vector<8x1xf32>
    %17 = math.rsqrt %16 : vector<8x1xf32>
    %18 = vector.broadcast %17 : vector<8x1xf32> to vector<8x256xf32>
    %19 = arith.mulf %9, %18 : vector<8x256xf32>
    %cst_9 = arith.constant 0.000000e+00 : f32
    %20 = vector.broadcast %cst_9 : f32 to vector<8x256xf32>
    %21 = arith.maximumf %19, %20 : vector<8x256xf32>
    %22 = arith.truncf %21 : vector<8x256xf32> to vector<8x256xbf16>
    %c0_10 = arith.constant 0 : index
    %c0_11 = arith.constant 0 : index
    %c0_12 = arith.constant 0 : index
    %23 = vector.load %arg3[%c0_10, %c0_11, %c0_12] : memref<1x8x256xbf16, #tpu.memory_space<vmem>>, vector<1x8x256xbf16>
    %24 = vector.shape_cast %23 : vector<1x8x256xbf16> to vector<8x256xbf16>
    %25 = vector.shape_cast %22 : vector<8x256xbf16> to vector<1x8x256xbf16>
    tpu.vector_store %arg3[%c0_10, %c0_11, %c0_12], %25 {strides = array<i32>} : memref<1x8x256xbf16, #tpu.memory_space<vmem>>, vector<1x8x256xbf16>,
    return
  }
  func.func @transform_0(%arg0: i32) -> (i32, i32, i32) {
    %c0_i32 = arith.constant 0 : i32
    %c0_i32_0 = arith.constant 0 : i32
    %c0_i32_1 = arith.constant 0 : i32
    return %arg0, %c0_i32, %c0_i32_0 : i32, i32, i32
  }
  func.func @transform_1(%arg0: i32) -> (i32, i32) {
    %c0_i32 = arith.constant 0 : i32
    %c0_i32_0 = arith.constant 0 : i32
    %c0_i32_1 = arith.constant 0 : i32
    return %c0_i32, %c0_i32_0 : i32, i32
  }
  func.func @transform_2(%arg0: i32) -> (i32, i32, i32) {
    %c0_i32 = arith.constant 0 : i32
    %c0_i32_0 = arith.constant 0 : i32
    %c0_i32_1 = arith.constant 0 : i32
    return %arg0, %c0_i32, %c0_i32_0 : i32, i32, i32
  }
}

module attributes {stable_mosaic.version = 11 : i64} {
  func.func @_conv_in_relu_kernel(%arg0: i32, %arg1: memref<1x128x64xbf16, #tpu.memory_space<vmem>>, %arg2: memref<16x128xbf16, #tpu.memory_space<vmem>>, %arg3: memref<1x16x64xbf16, #tpu.memory_space<vmem>>) attributes {dimension_semantics = [#tpu.dimension_semantics<parallel>], iteration_bounds = array<i64: 2>, scalar_prefetch = 0 : i64, scratch_operands = 0 : i64, tpu.core_type = #tpu.core_type<tc>, window_params = [{transform_indices = @transform_0, window_bounds = array<i64: 1, 128, 64>}, {pipeline_mode = #tpu.pipeline_mode<synchronous>, transform_indices = @transform_1, window_bounds = array<i64: 16, 128>}, {transform_indices = @transform_2, window_bounds = array<i64: 1, 16, 64>}]} {
    %c0 = arith.constant 0 : index
    %c0_0 = arith.constant 0 : index
    %0 = vector.load %arg2[%c0, %c0_0] : memref<16x128xbf16, #tpu.memory_space<vmem>>, vector<16x128xbf16>
    %c0_1 = arith.constant 0 : index
    %c0_2 = arith.constant 0 : index
    %c0_3 = arith.constant 0 : index
    %1 = vector.load %arg1[%c0_1, %c0_2, %c0_3] : memref<1x128x64xbf16, #tpu.memory_space<vmem>>, vector<1x128x64xbf16>
    %2 = vector.shape_cast %1 : vector<1x128x64xbf16> to vector<128x64xbf16>
    %cst = arith.constant dense<0.000000e+00> : vector<16x64xf32>
    %3 = tpu.matmul %0, %2, %cst {dimension_numbers = #tpu.dot_dimension_numbers<[1], [0], [0], [1], [0, 0, 1, 1], [], []>} : vector<16x128xbf16>, vector<128x64xbf16>, vector<16x64xf32> -> vector<16x64xf32>
    %cst_4 = arith.constant dense<0.000000e+00> : vector<16xf32>
    %4 = vector.multi_reduction <add>, %3, %cst_4 [1] : vector<16x64xf32> to vector<16xf32>
    %5 = vector.shape_cast %4 : vector<16xf32> to vector<16x1xf32>
    %cst_5 = arith.constant 1.562500e-02 : f32
    %6 = vector.broadcast %cst_5 : f32 to vector<16x1xf32>
    %7 = arith.mulf %5, %6 : vector<16x1xf32>
    %8 = vector.broadcast %7 : vector<16x1xf32> to vector<16x64xf32>
    %9 = arith.subf %3, %8 : vector<16x64xf32>
    %10 = arith.mulf %9, %9 : vector<16x64xf32>
    %cst_6 = arith.constant dense<0.000000e+00> : vector<16xf32>
    %11 = vector.multi_reduction <add>, %10, %cst_6 [1] : vector<16x64xf32> to vector<16xf32>
    %12 = vector.shape_cast %11 : vector<16xf32> to vector<16x1xf32>
    %cst_7 = arith.constant 1.562500e-02 : f32
    %13 = vector.broadcast %cst_7 : f32 to vector<16x1xf32>
    %14 = arith.mulf %12, %13 : vector<16x1xf32>
    %cst_8 = arith.constant 9.99999974E-6 : f32
    %15 = vector.broadcast %cst_8 : f32 to vector<16x1xf32>
    %16 = arith.addf %14, %15 : vector<16x1xf32>
    %17 = math.rsqrt %16 : vector<16x1xf32>
    %18 = vector.broadcast %17 : vector<16x1xf32> to vector<16x64xf32>
    %19 = arith.mulf %9, %18 : vector<16x64xf32>
    %cst_9 = arith.constant 0.000000e+00 : f32
    %20 = vector.broadcast %cst_9 : f32 to vector<16x64xf32>
    %21 = arith.maximumf %19, %20 : vector<16x64xf32>
    %22 = arith.truncf %21 : vector<16x64xf32> to vector<16x64xbf16>
    %c0_10 = arith.constant 0 : index
    %c0_11 = arith.constant 0 : index
    %c0_12 = arith.constant 0 : index
    %23 = vector.load %arg3[%c0_10, %c0_11, %c0_12] : memref<1x16x64xbf16, #tpu.memory_space<vmem>>, vector<1x16x64xbf16>
    %24 = vector.shape_cast %23 : vector<1x16x64xbf16> to vector<16x64xbf16>
    %25 = vector.shape_cast %22 : vector<16x64xbf16> to vector<1x16x64xbf16>
    tpu.vector_store %arg3[%c0_10, %c0_11, %c0_12], %25 {strides = array<i32>} : memref<1x16x64xbf16, #tpu.memory_space<vmem>>, vector<1x16x64xbf16>,
    return
  }
  func.func @transform_0(%arg0: i32) -> (i32, i32, i32) {
    %c0_i32 = arith.constant 0 : i32
    %c0_i32_0 = arith.constant 0 : i32
    %c0_i32_1 = arith.constant 0 : i32
    return %arg0, %c0_i32, %c0_i32_0 : i32, i32, i32
  }
  func.func @transform_1(%arg0: i32) -> (i32, i32) {
    %c0_i32 = arith.constant 0 : i32
    %c0_i32_0 = arith.constant 0 : i32
    %c0_i32_1 = arith.constant 0 : i32
    return %c0_i32, %c0_i32_0 : i32, i32
  }
  func.func @transform_2(%arg0: i32) -> (i32, i32, i32) {
    %c0_i32 = arith.constant 0 : i32
    %c0_i32_0 = arith.constant 0 : i32
    %c0_i32_1 = arith.constant 0 : i32
    return %arg0, %c0_i32, %c0_i32_0 : i32, i32, i32
  }
}

module attributes {stable_mosaic.version = 11 : i64} {
  func.func @_conv_in_relu_kernel(%arg0: i32, %arg1: memref<1x256x16xbf16, #tpu.memory_space<vmem>>, %arg2: memref<32x256xbf16, #tpu.memory_space<vmem>>, %arg3: memref<1x32x16xbf16, #tpu.memory_space<vmem>>) attributes {dimension_semantics = [#tpu.dimension_semantics<parallel>], iteration_bounds = array<i64: 2>, scalar_prefetch = 0 : i64, scratch_operands = 0 : i64, tpu.core_type = #tpu.core_type<tc>, window_params = [{transform_indices = @transform_0, window_bounds = array<i64: 1, 256, 16>}, {pipeline_mode = #tpu.pipeline_mode<synchronous>, transform_indices = @transform_1, window_bounds = array<i64: 32, 256>}, {transform_indices = @transform_2, window_bounds = array<i64: 1, 32, 16>}]} {
    %c0 = arith.constant 0 : index
    %c0_0 = arith.constant 0 : index
    %0 = vector.load %arg2[%c0, %c0_0] : memref<32x256xbf16, #tpu.memory_space<vmem>>, vector<32x256xbf16>
    %c0_1 = arith.constant 0 : index
    %c0_2 = arith.constant 0 : index
    %c0_3 = arith.constant 0 : index
    %1 = vector.load %arg1[%c0_1, %c0_2, %c0_3] : memref<1x256x16xbf16, #tpu.memory_space<vmem>>, vector<1x256x16xbf16>
    %2 = vector.shape_cast %1 : vector<1x256x16xbf16> to vector<256x16xbf16>
    %cst = arith.constant dense<0.000000e+00> : vector<32x16xf32>
    %3 = tpu.matmul %0, %2, %cst {dimension_numbers = #tpu.dot_dimension_numbers<[1], [0], [0], [1], [0, 0, 1, 1], [], []>} : vector<32x256xbf16>, vector<256x16xbf16>, vector<32x16xf32> -> vector<32x16xf32>
    %cst_4 = arith.constant dense<0.000000e+00> : vector<32xf32>
    %4 = vector.multi_reduction <add>, %3, %cst_4 [1] : vector<32x16xf32> to vector<32xf32>
    %5 = vector.shape_cast %4 : vector<32xf32> to vector<32x1xf32>
    %cst_5 = arith.constant 6.250000e-02 : f32
    %6 = vector.broadcast %cst_5 : f32 to vector<32x1xf32>
    %7 = arith.mulf %5, %6 : vector<32x1xf32>
    %8 = vector.broadcast %7 : vector<32x1xf32> to vector<32x16xf32>
    %9 = arith.subf %3, %8 : vector<32x16xf32>
    %10 = arith.mulf %9, %9 : vector<32x16xf32>
    %cst_6 = arith.constant dense<0.000000e+00> : vector<32xf32>
    %11 = vector.multi_reduction <add>, %10, %cst_6 [1] : vector<32x16xf32> to vector<32xf32>
    %12 = vector.shape_cast %11 : vector<32xf32> to vector<32x1xf32>
    %cst_7 = arith.constant 6.250000e-02 : f32
    %13 = vector.broadcast %cst_7 : f32 to vector<32x1xf32>
    %14 = arith.mulf %12, %13 : vector<32x1xf32>
    %cst_8 = arith.constant 9.99999974E-6 : f32
    %15 = vector.broadcast %cst_8 : f32 to vector<32x1xf32>
    %16 = arith.addf %14, %15 : vector<32x1xf32>
    %17 = math.rsqrt %16 : vector<32x1xf32>
    %18 = vector.broadcast %17 : vector<32x1xf32> to vector<32x16xf32>
    %19 = arith.mulf %9, %18 : vector<32x16xf32>
    %cst_9 = arith.constant 0.000000e+00 : f32
    %20 = vector.broadcast %cst_9 : f32 to vector<32x16xf32>
    %21 = arith.maximumf %19, %20 : vector<32x16xf32>
    %22 = arith.truncf %21 : vector<32x16xf32> to vector<32x16xbf16>
    %c0_10 = arith.constant 0 : index
    %c0_11 = arith.constant 0 : index
    %c0_12 = arith.constant 0 : index
    %23 = vector.load %arg3[%c0_10, %c0_11, %c0_12] : memref<1x32x16xbf16, #tpu.memory_space<vmem>>, vector<1x32x16xbf16>
    %24 = vector.shape_cast %23 : vector<1x32x16xbf16> to vector<32x16xbf16>
    %25 = vector.shape_cast %22 : vector<32x16xbf16> to vector<1x32x16xbf16>
    tpu.vector_store %arg3[%c0_10, %c0_11, %c0_12], %25 {strides = array<i32>} : memref<1x32x16xbf16, #tpu.memory_space<vmem>>, vector<1x32x16xbf16>,
    return
  }
  func.func @transform_0(%arg0: i32) -> (i32, i32, i32) {
    %c0_i32 = arith.constant 0 : i32
    %c0_i32_0 = arith.constant 0 : i32
    %c0_i32_1 = arith.constant 0 : i32
    return %arg0, %c0_i32, %c0_i32_0 : i32, i32, i32
  }
  func.func @transform_1(%arg0: i32) -> (i32, i32) {
    %c0_i32 = arith.constant 0 : i32
    %c0_i32_0 = arith.constant 0 : i32
    %c0_i32_1 = arith.constant 0 : i32
    return %c0_i32, %c0_i32_0 : i32, i32
  }
  func.func @transform_2(%arg0: i32) -> (i32, i32, i32) {
    %c0_i32 = arith.constant 0 : i32
    %c0_i32_0 = arith.constant 0 : i32
    %c0_i32_1 = arith.constant 0 : i32
    return %arg0, %c0_i32, %c0_i32_0 : i32, i32, i32
  }
}

module attributes {stable_mosaic.version = 11 : i64} {
  func.func @_res_block_kernel(%arg0: i32, %arg1: memref<1x32x42xbf16, #tpu.memory_space<vmem>>, %arg2: memref<9x32x32xbf16, #tpu.memory_space<vmem>>, %arg3: memref<9x32x32xbf16, #tpu.memory_space<vmem>>, %arg4: memref<32x1xf32, #tpu.memory_space<vmem>>, %arg5: memref<1x24xf32, #tpu.memory_space<vmem>>, %arg6: memref<1x32x42xbf16, #tpu.memory_space<vmem>>, %arg7: memref<32x42xbf16, #tpu.memory_space<vmem>>) attributes {dimension_semantics = [#tpu.dimension_semantics<parallel>], iteration_bounds = array<i64: 2>, scalar_prefetch = 0 : i64, scratch_operands = 1 : i64, tpu.core_type = #tpu.core_type<tc>, window_params = [{transform_indices = @transform_0, window_bounds = array<i64: 1, 32, 42>}, {pipeline_mode = #tpu.pipeline_mode<synchronous>, transform_indices = @transform_1, window_bounds = array<i64: 9, 32, 32>}, {pipeline_mode = #tpu.pipeline_mode<synchronous>, transform_indices = @transform_2, window_bounds = array<i64: 9, 32, 32>}, {pipeline_mode = #tpu.pipeline_mode<synchronous>, transform_indices = @transform_3, window_bounds = array<i64: 32, 1>}, {pipeline_mode = #tpu.pipeline_mode<synchronous>, transform_indices = @transform_4, window_bounds = array<i64: 1, 24>}, {transform_indices = @transform_5, window_bounds = array<i64: 1, 32, 42>}]} {
    %c0 = arith.constant 0 : index
    %c0_0 = arith.constant 0 : index
    %0 = vector.load %arg5[%c0, %c0_0] : memref<1x24xf32, #tpu.memory_space<vmem>>, vector<1x24xf32>
    %cst = arith.constant 0.000000e+00 : f32
    %1 = vector.broadcast %cst : f32 to vector<32x24xf32>
    %c0_1 = arith.constant 0 : index
    %c0_2 = arith.constant 0 : index
    %c0_3 = arith.constant 0 : index
    %2 = vector.load %arg2[%c0_1, %c0_2, %c0_3] : memref<9x32x32xbf16, #tpu.memory_space<vmem>>, vector<1x32x32xbf16>
    %3 = vector.shape_cast %2 : vector<1x32x32xbf16> to vector<32x32xbf16>
    %c0_4 = arith.constant 0 : index
    %c0_5 = arith.constant 0 : index
    %c0_6 = arith.constant 0 : index
    %4 = vector.load %arg1[%c0_4, %c0_5, %c0_6] : memref<1x32x42xbf16, #tpu.memory_space<vmem>>, vector<1x32x24xbf16>
    %5 = vector.shape_cast %4 : vector<1x32x24xbf16> to vector<32x24xbf16>
    %cst_7 = arith.constant dense<0.000000e+00> : vector<32x24xf32>
    %6 = tpu.matmul %3, %5, %cst_7 {dimension_numbers = #tpu.dot_dimension_numbers<[1], [0], [0], [1], [0, 0, 1, 1], [], []>} : vector<32x32xbf16>, vector<32x24xbf16>, vector<32x24xf32> -> vector<32x24xf32>
    %7 = arith.addf %1, %6 : vector<32x24xf32>
    %c1 = arith.constant 1 : index
    %c0_8 = arith.constant 0 : index
    %c0_9 = arith.constant 0 : index
    %8 = vector.load %arg2[%c1, %c0_8, %c0_9] : memref<9x32x32xbf16, #tpu.memory_space<vmem>>, vector<1x32x32xbf16>
    %9 = vector.shape_cast %8 : vector<1x32x32xbf16> to vector<32x32xbf16>
    %c0_10 = arith.constant 0 : index
    %c0_11 = arith.constant 0 : index
    %c1_12 = arith.constant 1 : index
    %10 = vector.load %arg1[%c0_10, %c0_11, %c1_12] : memref<1x32x42xbf16, #tpu.memory_space<vmem>>, vector<1x32x24xbf16>
    %11 = vector.shape_cast %10 : vector<1x32x24xbf16> to vector<32x24xbf16>
    %cst_13 = arith.constant dense<0.000000e+00> : vector<32x24xf32>
    %12 = tpu.matmul %9, %11, %cst_13 {dimension_numbers = #tpu.dot_dimension_numbers<[1], [0], [0], [1], [0, 0, 1, 1], [], []>} : vector<32x32xbf16>, vector<32x24xbf16>, vector<32x24xf32> -> vector<32x24xf32>
    %13 = arith.addf %7, %12 : vector<32x24xf32>
    %c2 = arith.constant 2 : index
    %c0_14 = arith.constant 0 : index
    %c0_15 = arith.constant 0 : index
    %14 = vector.load %arg2[%c2, %c0_14, %c0_15] : memref<9x32x32xbf16, #tpu.memory_space<vmem>>, vector<1x32x32xbf16>
    %15 = vector.shape_cast %14 : vector<1x32x32xbf16> to vector<32x32xbf16>
    %c0_16 = arith.constant 0 : index
    %c0_17 = arith.constant 0 : index
    %c2_18 = arith.constant 2 : index
    %16 = vector.load %arg1[%c0_16, %c0_17, %c2_18] : memref<1x32x42xbf16, #tpu.memory_space<vmem>>, vector<1x32x24xbf16>
    %17 = vector.shape_cast %16 : vector<1x32x24xbf16> to vector<32x24xbf16>
    %cst_19 = arith.constant dense<0.000000e+00> : vector<32x24xf32>
    %18 = tpu.matmul %15, %17, %cst_19 {dimension_numbers = #tpu.dot_dimension_numbers<[1], [0], [0], [1], [0, 0, 1, 1], [], []>} : vector<32x32xbf16>, vector<32x24xbf16>, vector<32x24xf32> -> vector<32x24xf32>
    %19 = arith.addf %13, %18 : vector<32x24xf32>
    %c3 = arith.constant 3 : index
    %c0_20 = arith.constant 0 : index
    %c0_21 = arith.constant 0 : index
    %20 = vector.load %arg2[%c3, %c0_20, %c0_21] : memref<9x32x32xbf16, #tpu.memory_space<vmem>>, vector<1x32x32xbf16>
    %21 = vector.shape_cast %20 : vector<1x32x32xbf16> to vector<32x32xbf16>
    %c0_22 = arith.constant 0 : index
    %c0_23 = arith.constant 0 : index
    %c6 = arith.constant 6 : index
    %22 = vector.load %arg1[%c0_22, %c0_23, %c6] : memref<1x32x42xbf16, #tpu.memory_space<vmem>>, vector<1x32x24xbf16>
    %23 = vector.shape_cast %22 : vector<1x32x24xbf16> to vector<32x24xbf16>
    %cst_24 = arith.constant dense<0.000000e+00> : vector<32x24xf32>
    %24 = tpu.matmul %21, %23, %cst_24 {dimension_numbers = #tpu.dot_dimension_numbers<[1], [0], [0], [1], [0, 0, 1, 1], [], []>} : vector<32x32xbf16>, vector<32x24xbf16>, vector<32x24xf32> -> vector<32x24xf32>
    %25 = arith.addf %19, %24 : vector<32x24xf32>
    %c4 = arith.constant 4 : index
    %c0_25 = arith.constant 0 : index
    %c0_26 = arith.constant 0 : index
    %26 = vector.load %arg2[%c4, %c0_25, %c0_26] : memref<9x32x32xbf16, #tpu.memory_space<vmem>>, vector<1x32x32xbf16>
    %27 = vector.shape_cast %26 : vector<1x32x32xbf16> to vector<32x32xbf16>
    %c0_27 = arith.constant 0 : index
    %c0_28 = arith.constant 0 : index
    %c7 = arith.constant 7 : index
    %28 = vector.load %arg1[%c0_27, %c0_28, %c7] : memref<1x32x42xbf16, #tpu.memory_space<vmem>>, vector<1x32x24xbf16>
    %29 = vector.shape_cast %28 : vector<1x32x24xbf16> to vector<32x24xbf16>
    %cst_29 = arith.constant dense<0.000000e+00> : vector<32x24xf32>
    %30 = tpu.matmul %27, %29, %cst_29 {dimension_numbers = #tpu.dot_dimension_numbers<[1], [0], [0], [1], [0, 0, 1, 1], [], []>} : vector<32x32xbf16>, vector<32x24xbf16>, vector<32x24xf32> -> vector<32x24xf32>
    %31 = arith.addf %25, %30 : vector<32x24xf32>
    %c5 = arith.constant 5 : index
    %c0_30 = arith.constant 0 : index
    %c0_31 = arith.constant 0 : index
    %32 = vector.load %arg2[%c5, %c0_30, %c0_31] : memref<9x32x32xbf16, #tpu.memory_space<vmem>>, vector<1x32x32xbf16>
    %33 = vector.shape_cast %32 : vector<1x32x32xbf16> to vector<32x32xbf16>
    %c0_32 = arith.constant 0 : index
    %c0_33 = arith.constant 0 : index
    %c8 = arith.constant 8 : index
    %34 = vector.load %arg1[%c0_32, %c0_33, %c8] : memref<1x32x42xbf16, #tpu.memory_space<vmem>>, vector<1x32x24xbf16>
    %35 = vector.shape_cast %34 : vector<1x32x24xbf16> to vector<32x24xbf16>
    %cst_34 = arith.constant dense<0.000000e+00> : vector<32x24xf32>
    %36 = tpu.matmul %33, %35, %cst_34 {dimension_numbers = #tpu.dot_dimension_numbers<[1], [0], [0], [1], [0, 0, 1, 1], [], []>} : vector<32x32xbf16>, vector<32x24xbf16>, vector<32x24xf32> -> vector<32x24xf32>
    %37 = arith.addf %31, %36 : vector<32x24xf32>
    %c6_35 = arith.constant 6 : index
    %c0_36 = arith.constant 0 : index
    %c0_37 = arith.constant 0 : index
    %38 = vector.load %arg2[%c6_35, %c0_36, %c0_37] : memref<9x32x32xbf16, #tpu.memory_space<vmem>>, vector<1x32x32xbf16>
    %39 = vector.shape_cast %38 : vector<1x32x32xbf16> to vector<32x32xbf16>
    %c0_38 = arith.constant 0 : index
    %c0_39 = arith.constant 0 : index
    %c12 = arith.constant 12 : index
    %40 = vector.load %arg1[%c0_38, %c0_39, %c12] : memref<1x32x42xbf16, #tpu.memory_space<vmem>>, vector<1x32x24xbf16>
    %41 = vector.shape_cast %40 : vector<1x32x24xbf16> to vector<32x24xbf16>
    %cst_40 = arith.constant dense<0.000000e+00> : vector<32x24xf32>
    %42 = tpu.matmul %39, %41, %cst_40 {dimension_numbers = #tpu.dot_dimension_numbers<[1], [0], [0], [1], [0, 0, 1, 1], [], []>} : vector<32x32xbf16>, vector<32x24xbf16>, vector<32x24xf32> -> vector<32x24xf32>
    %43 = arith.addf %37, %42 : vector<32x24xf32>
    %c7_41 = arith.constant 7 : index
    %c0_42 = arith.constant 0 : index
    %c0_43 = arith.constant 0 : index
    %44 = vector.load %arg2[%c7_41, %c0_42, %c0_43] : memref<9x32x32xbf16, #tpu.memory_space<vmem>>, vector<1x32x32xbf16>
    %45 = vector.shape_cast %44 : vector<1x32x32xbf16> to vector<32x32xbf16>
    %c0_44 = arith.constant 0 : index
    %c0_45 = arith.constant 0 : index
    %c13 = arith.constant 13 : index
    %46 = vector.load %arg1[%c0_44, %c0_45, %c13] : memref<1x32x42xbf16, #tpu.memory_space<vmem>>, vector<1x32x24xbf16>
    %47 = vector.shape_cast %46 : vector<1x32x24xbf16> to vector<32x24xbf16>
    %cst_46 = arith.constant dense<0.000000e+00> : vector<32x24xf32>
    %48 = tpu.matmul %45, %47, %cst_46 {dimension_numbers = #tpu.dot_dimension_numbers<[1], [0], [0], [1], [0, 0, 1, 1], [], []>} : vector<32x32xbf16>, vector<32x24xbf16>, vector<32x24xf32> -> vector<32x24xf32>
    %49 = arith.addf %43, %48 : vector<32x24xf32>
    %c8_47 = arith.constant 8 : index
    %c0_48 = arith.constant 0 : index
    %c0_49 = arith.constant 0 : index
    %50 = vector.load %arg2[%c8_47, %c0_48, %c0_49] : memref<9x32x32xbf16, #tpu.memory_space<vmem>>, vector<1x32x32xbf16>
    %51 = vector.shape_cast %50 : vector<1x32x32xbf16> to vector<32x32xbf16>
    %c0_50 = arith.constant 0 : index
    %c0_51 = arith.constant 0 : index
    %c14 = arith.constant 14 : index
    %52 = vector.load %arg1[%c0_50, %c0_51, %c14] : memref<1x32x42xbf16, #tpu.memory_space<vmem>>, vector<1x32x24xbf16>
    %53 = vector.shape_cast %52 : vector<1x32x24xbf16> to vector<32x24xbf16>
    %cst_52 = arith.constant dense<0.000000e+00> : vector<32x24xf32>
    %54 = tpu.matmul %51, %53, %cst_52 {dimension_numbers = #tpu.dot_dimension_numbers<[1], [0], [0], [1], [0, 0, 1, 1], [], []>} : vector<32x32xbf16>, vector<32x24xbf16>, vector<32x24xf32> -> vector<32x24xf32>
    %55 = arith.addf %49, %54 : vector<32x24xf32>
    %56 = vector.broadcast %0 : vector<1x24xf32> to vector<32x24xf32>
    %57 = arith.mulf %55, %56 : vector<32x24xf32>
    %cst_53 = arith.constant dense<0.000000e+00> : vector<32xf32>
    %58 = vector.multi_reduction <add>, %57, %cst_53 [1] : vector<32x24xf32> to vector<32xf32>
    %59 = vector.shape_cast %58 : vector<32xf32> to vector<32x1xf32>
    %cst_54 = arith.constant 6.250000e-02 : f32
    %60 = vector.broadcast %cst_54 : f32 to vector<32x1xf32>
    %61 = arith.mulf %59, %60 : vector<32x1xf32>
    %62 = vector.broadcast %61 : vector<32x1xf32> to vector<32x24xf32>
    %63 = arith.subf %55, %62 : vector<32x24xf32>
    %64 = vector.broadcast %0 : vector<1x24xf32> to vector<32x24xf32>
    %65 = arith.mulf %63, %64 : vector<32x24xf32>
    %66 = arith.mulf %65, %65 : vector<32x24xf32>
    %cst_55 = arith.constant dense<0.000000e+00> : vector<32xf32>
    %67 = vector.multi_reduction <add>, %66, %cst_55 [1] : vector<32x24xf32> to vector<32xf32>
    %68 = vector.shape_cast %67 : vector<32xf32> to vector<32x1xf32>
    %cst_56 = arith.constant 6.250000e-02 : f32
    %69 = vector.broadcast %cst_56 : f32 to vector<32x1xf32>
    %70 = arith.mulf %68, %69 : vector<32x1xf32>
    %cst_57 = arith.constant 9.99999974E-6 : f32
    %71 = vector.broadcast %cst_57 : f32 to vector<32x1xf32>
    %72 = arith.addf %70, %71 : vector<32x1xf32>
    %73 = math.rsqrt %72 : vector<32x1xf32>
    %74 = vector.broadcast %73 : vector<32x1xf32> to vector<32x24xf32>
    %75 = arith.mulf %65, %74 : vector<32x24xf32>
    %cst_58 = arith.constant 0.000000e+00 : f32
    %76 = vector.broadcast %cst_58 : f32 to vector<32x24xf32>
    %77 = arith.maximumf %75, %76 : vector<32x24xf32>
    %cst_59 = arith.constant 0.000000e+00 : bf16
    %78 = vector.broadcast %cst_59 : bf16 to vector<32x42xbf16>
    %c0_60 = arith.constant 0 : index
    %c0_61 = arith.constant 0 : index
    %79 = vector.load %arg7[%c0_60, %c0_61] : memref<32x42xbf16, #tpu.memory_space<vmem>>, vector<32x42xbf16>
    tpu.vector_store %arg7[%c0_60, %c0_61], %78 {strides = array<i32>} : memref<32x42xbf16, #tpu.memory_space<vmem>>, vector<32x42xbf16>,
    %80 = arith.truncf %77 : vector<32x24xf32> to vector<32x24xbf16>
    %c0_62 = arith.constant 0 : index
    %c7_63 = arith.constant 7 : index
    %81 = vector.load %arg7[%c0_62, %c7_63] : memref<32x42xbf16, #tpu.memory_space<vmem>>, vector<32x24xbf16>
    tpu.vector_store %arg7[%c0_62, %c7_63], %80 {strides = array<i32>} : memref<32x42xbf16, #tpu.memory_space<vmem>>, vector<32x24xbf16>,
    %c0_64 = arith.constant 0 : index
    %c0_65 = arith.constant 0 : index
    %82 = vector.load %arg4[%c0_64, %c0_65] : memref<32x1xf32, #tpu.memory_space<vmem>>, vector<32x1xf32>
    %c0_66 = arith.constant 0 : index
    %c0_67 = arith.constant 0 : index
    %c7_68 = arith.constant 7 : index
    %83 = vector.load %arg1[%c0_66, %c0_67, %c7_68] : memref<1x32x42xbf16, #tpu.memory_space<vmem>>, vector<1x32x24xbf16>
    %84 = vector.shape_cast %83 : vector<1x32x24xbf16> to vector<32x24xbf16>
    %85 = arith.extf %84 : vector<32x24xbf16> to vector<32x24xf32>
    %86 = vector.broadcast %82 : vector<32x1xf32> to vector<32x24xf32>
    %87 = arith.addf %86, %85 : vector<32x24xf32>
    %c0_69 = arith.constant 0 : index
    %c0_70 = arith.constant 0 : index
    %c0_71 = arith.constant 0 : index
    %88 = vector.load %arg3[%c0_69, %c0_70, %c0_71] : memref<9x32x32xbf16, #tpu.memory_space<vmem>>, vector<1x32x32xbf16>
    %89 = vector.shape_cast %88 : vector<1x32x32xbf16> to vector<32x32xbf16>
    %c0_72 = arith.constant 0 : index
    %c0_73 = arith.constant 0 : index
    %90 = vector.load %arg7[%c0_72, %c0_73] : memref<32x42xbf16, #tpu.memory_space<vmem>>, vector<32x24xbf16>
    %cst_74 = arith.constant dense<0.000000e+00> : vector<32x24xf32>
    %91 = tpu.matmul %89, %90, %cst_74 {dimension_numbers = #tpu.dot_dimension_numbers<[1], [0], [0], [1], [0, 0, 1, 1], [], []>} : vector<32x32xbf16>, vector<32x24xbf16>, vector<32x24xf32> -> vector<32x24xf32>
    %92 = arith.addf %87, %91 : vector<32x24xf32>
    %c1_75 = arith.constant 1 : index
    %c0_76 = arith.constant 0 : index
    %c0_77 = arith.constant 0 : index
    %93 = vector.load %arg3[%c1_75, %c0_76, %c0_77] : memref<9x32x32xbf16, #tpu.memory_space<vmem>>, vector<1x32x32xbf16>
    %94 = vector.shape_cast %93 : vector<1x32x32xbf16> to vector<32x32xbf16>
    %c0_78 = arith.constant 0 : index
    %c1_79 = arith.constant 1 : index
    %95 = vector.load %arg7[%c0_78, %c1_79] : memref<32x42xbf16, #tpu.memory_space<vmem>>, vector<32x24xbf16>
    %cst_80 = arith.constant dense<0.000000e+00> : vector<32x24xf32>
    %96 = tpu.matmul %94, %95, %cst_80 {dimension_numbers = #tpu.dot_dimension_numbers<[1], [0], [0], [1], [0, 0, 1, 1], [], []>} : vector<32x32xbf16>, vector<32x24xbf16>, vector<32x24xf32> -> vector<32x24xf32>
    %97 = arith.addf %92, %96 : vector<32x24xf32>
    %c2_81 = arith.constant 2 : index
    %c0_82 = arith.constant 0 : index
    %c0_83 = arith.constant 0 : index
    %98 = vector.load %arg3[%c2_81, %c0_82, %c0_83] : memref<9x32x32xbf16, #tpu.memory_space<vmem>>, vector<1x32x32xbf16>
    %99 = vector.shape_cast %98 : vector<1x32x32xbf16> to vector<32x32xbf16>
    %c0_84 = arith.constant 0 : index
    %c2_85 = arith.constant 2 : index
    %100 = vector.load %arg7[%c0_84, %c2_85] : memref<32x42xbf16, #tpu.memory_space<vmem>>, vector<32x24xbf16>
    %cst_86 = arith.constant dense<0.000000e+00> : vector<32x24xf32>
    %101 = tpu.matmul %99, %100, %cst_86 {dimension_numbers = #tpu.dot_dimension_numbers<[1], [0], [0], [1], [0, 0, 1, 1], [], []>} : vector<32x32xbf16>, vector<32x24xbf16>, vector<32x24xf32> -> vector<32x24xf32>
    %102 = arith.addf %97, %101 : vector<32x24xf32>
    %c3_87 = arith.constant 3 : index
    %c0_88 = arith.constant 0 : index
    %c0_89 = arith.constant 0 : index
    %103 = vector.load %arg3[%c3_87, %c0_88, %c0_89] : memref<9x32x32xbf16, #tpu.memory_space<vmem>>, vector<1x32x32xbf16>
    %104 = vector.shape_cast %103 : vector<1x32x32xbf16> to vector<32x32xbf16>
    %c0_90 = arith.constant 0 : index
    %c6_91 = arith.constant 6 : index
    %105 = vector.load %arg7[%c0_90, %c6_91] : memref<32x42xbf16, #tpu.memory_space<vmem>>, vector<32x24xbf16>
    %cst_92 = arith.constant dense<0.000000e+00> : vector<32x24xf32>
    %106 = tpu.matmul %104, %105, %cst_92 {dimension_numbers = #tpu.dot_dimension_numbers<[1], [0], [0], [1], [0, 0, 1, 1], [], []>} : vector<32x32xbf16>, vector<32x24xbf16>, vector<32x24xf32> -> vector<32x24xf32>
    %107 = arith.addf %102, %106 : vector<32x24xf32>
    %c4_93 = arith.constant 4 : index
    %c0_94 = arith.constant 0 : index
    %c0_95 = arith.constant 0 : index
    %108 = vector.load %arg3[%c4_93, %c0_94, %c0_95] : memref<9x32x32xbf16, #tpu.memory_space<vmem>>, vector<1x32x32xbf16>
    %109 = vector.shape_cast %108 : vector<1x32x32xbf16> to vector<32x32xbf16>
    %c0_96 = arith.constant 0 : index
    %c7_97 = arith.constant 7 : index
    %110 = vector.load %arg7[%c0_96, %c7_97] : memref<32x42xbf16, #tpu.memory_space<vmem>>, vector<32x24xbf16>
    %cst_98 = arith.constant dense<0.000000e+00> : vector<32x24xf32>
    %111 = tpu.matmul %109, %110, %cst_98 {dimension_numbers = #tpu.dot_dimension_numbers<[1], [0], [0], [1], [0, 0, 1, 1], [], []>} : vector<32x32xbf16>, vector<32x24xbf16>, vector<32x24xf32> -> vector<32x24xf32>
    %112 = arith.addf %107, %111 : vector<32x24xf32>
    %c5_99 = arith.constant 5 : index
    %c0_100 = arith.constant 0 : index
    %c0_101 = arith.constant 0 : index
    %113 = vector.load %arg3[%c5_99, %c0_100, %c0_101] : memref<9x32x32xbf16, #tpu.memory_space<vmem>>, vector<1x32x32xbf16>
    %114 = vector.shape_cast %113 : vector<1x32x32xbf16> to vector<32x32xbf16>
    %c0_102 = arith.constant 0 : index
    %c8_103 = arith.constant 8 : index
    %115 = vector.load %arg7[%c0_102, %c8_103] : memref<32x42xbf16, #tpu.memory_space<vmem>>, vector<32x24xbf16>
    %cst_104 = arith.constant dense<0.000000e+00> : vector<32x24xf32>
    %116 = tpu.matmul %114, %115, %cst_104 {dimension_numbers = #tpu.dot_dimension_numbers<[1], [0], [0], [1], [0, 0, 1, 1], [], []>} : vector<32x32xbf16>, vector<32x24xbf16>, vector<32x24xf32> -> vector<32x24xf32>
    %117 = arith.addf %112, %116 : vector<32x24xf32>
    %c6_105 = arith.constant 6 : index
    %c0_106 = arith.constant 0 : index
    %c0_107 = arith.constant 0 : index
    %118 = vector.load %arg3[%c6_105, %c0_106, %c0_107] : memref<9x32x32xbf16, #tpu.memory_space<vmem>>, vector<1x32x32xbf16>
    %119 = vector.shape_cast %118 : vector<1x32x32xbf16> to vector<32x32xbf16>
    %c0_108 = arith.constant 0 : index
    %c12_109 = arith.constant 12 : index
    %120 = vector.load %arg7[%c0_108, %c12_109] : memref<32x42xbf16, #tpu.memory_space<vmem>>, vector<32x24xbf16>
    %cst_110 = arith.constant dense<0.000000e+00> : vector<32x24xf32>
    %121 = tpu.matmul %119, %120, %cst_110 {dimension_numbers = #tpu.dot_dimension_numbers<[1], [0], [0], [1], [0, 0, 1, 1], [], []>} : vector<32x32xbf16>, vector<32x24xbf16>, vector<32x24xf32> -> vector<32x24xf32>
    %122 = arith.addf %117, %121 : vector<32x24xf32>
    %c7_111 = arith.constant 7 : index
    %c0_112 = arith.constant 0 : index
    %c0_113 = arith.constant 0 : index
    %123 = vector.load %arg3[%c7_111, %c0_112, %c0_113] : memref<9x32x32xbf16, #tpu.memory_space<vmem>>, vector<1x32x32xbf16>
    %124 = vector.shape_cast %123 : vector<1x32x32xbf16> to vector<32x32xbf16>
    %c0_114 = arith.constant 0 : index
    %c13_115 = arith.constant 13 : index
    %125 = vector.load %arg7[%c0_114, %c13_115] : memref<32x42xbf16, #tpu.memory_space<vmem>>, vector<32x24xbf16>
    %cst_116 = arith.constant dense<0.000000e+00> : vector<32x24xf32>
    %126 = tpu.matmul %124, %125, %cst_116 {dimension_numbers = #tpu.dot_dimension_numbers<[1], [0], [0], [1], [0, 0, 1, 1], [], []>} : vector<32x32xbf16>, vector<32x24xbf16>, vector<32x24xf32> -> vector<32x24xf32>
    %127 = arith.addf %122, %126 : vector<32x24xf32>
    %c8_117 = arith.constant 8 : index
    %c0_118 = arith.constant 0 : index
    %c0_119 = arith.constant 0 : index
    %128 = vector.load %arg3[%c8_117, %c0_118, %c0_119] : memref<9x32x32xbf16, #tpu.memory_space<vmem>>, vector<1x32x32xbf16>
    %129 = vector.shape_cast %128 : vector<1x32x32xbf16> to vector<32x32xbf16>
    %c0_120 = arith.constant 0 : index
    %c14_121 = arith.constant 14 : index
    %130 = vector.load %arg7[%c0_120, %c14_121] : memref<32x42xbf16, #tpu.memory_space<vmem>>, vector<32x24xbf16>
    %cst_122 = arith.constant dense<0.000000e+00> : vector<32x24xf32>
    %131 = tpu.matmul %129, %130, %cst_122 {dimension_numbers = #tpu.dot_dimension_numbers<[1], [0], [0], [1], [0, 0, 1, 1], [], []>} : vector<32x32xbf16>, vector<32x24xbf16>, vector<32x24xf32> -> vector<32x24xf32>
    %132 = arith.addf %127, %131 : vector<32x24xf32>
    %cst_123 = arith.constant 0.000000e+00 : bf16
    %133 = vector.broadcast %cst_123 : bf16 to vector<32x42xbf16>
    %c0_124 = arith.constant 0 : index
    %c0_125 = arith.constant 0 : index
    %c0_126 = arith.constant 0 : index
    %134 = vector.load %arg6[%c0_124, %c0_125, %c0_126] : memref<1x32x42xbf16, #tpu.memory_space<vmem>>, vector<1x32x42xbf16>
    %135 = vector.shape_cast %134 : vector<1x32x42xbf16> to vector<32x42xbf16>
    %136 = vector.shape_cast %133 : vector<32x42xbf16> to vector<1x32x42xbf16>
    tpu.vector_store %arg6[%c0_124, %c0_125, %c0_126], %136 {strides = array<i32>} : memref<1x32x42xbf16, #tpu.memory_space<vmem>>, vector<1x32x42xbf16>,
    %137 = vector.broadcast %0 : vector<1x24xf32> to vector<32x24xf32>
    %138 = arith.mulf %132, %137 : vector<32x24xf32>
    %139 = arith.truncf %138 : vector<32x24xf32> to vector<32x24xbf16>
    %c0_127 = arith.constant 0 : index
    %c0_128 = arith.constant 0 : index
    %c7_129 = arith.constant 7 : index
    %140 = vector.load %arg6[%c0_127, %c0_128, %c7_129] : memref<1x32x42xbf16, #tpu.memory_space<vmem>>, vector<1x32x24xbf16>
    %141 = vector.shape_cast %140 : vector<1x32x24xbf16> to vector<32x24xbf16>
    %142 = vector.shape_cast %139 : vector<32x24xbf16> to vector<1x32x24xbf16>
    tpu.vector_store %arg6[%c0_127, %c0_128, %c7_129], %142 {strides = array<i32>} : memref<1x32x42xbf16, #tpu.memory_space<vmem>>, vector<1x32x24xbf16>,
    return
  }
  func.func @transform_0(%arg0: i32) -> (i32, i32, i32) {
    %c0_i32 = arith.constant 0 : i32
    %c0_i32_0 = arith.constant 0 : i32
    %c0_i32_1 = arith.constant 0 : i32
    return %arg0, %c0_i32, %c0_i32_0 : i32, i32, i32
  }
  func.func @transform_1(%arg0: i32) -> (i32, i32, i32) {
    %c0_i32 = arith.constant 0 : i32
    %c0_i32_0 = arith.constant 0 : i32
    %c0_i32_1 = arith.constant 0 : i32
    %c0_i32_2 = arith.constant 0 : i32
    return %c0_i32, %c0_i32_0, %c0_i32_1 : i32, i32, i32
  }
  func.func @transform_2(%arg0: i32) -> (i32, i32, i32) {
    %c0_i32 = arith.constant 0 : i32
    %c0_i32_0 = arith.constant 0 : i32
    %c0_i32_1 = arith.constant 0 : i32
    %c0_i32_2 = arith.constant 0 : i32
    return %c0_i32, %c0_i32_0, %c0_i32_1 : i32, i32, i32
  }
  func.func @transform_3(%arg0: i32) -> (i32, i32) {
    %c0_i32 = arith.constant 0 : i32
    %c0_i32_0 = arith.constant 0 : i32
    %c0_i32_1 = arith.constant 0 : i32
    return %c0_i32, %c0_i32_0 : i32, i32
  }
  func.func @transform_4(%arg0: i32) -> (i32, i32) {
    %c0_i32 = arith.constant 0 : i32
    %c0_i32_0 = arith.constant 0 : i32
    %c0_i32_1 = arith.constant 0 : i32
    return %c0_i32, %c0_i32_0 : i32, i32
  }
  func.func @transform_5(%arg0: i32) -> (i32, i32, i32) {
    %c0_i32 = arith.constant 0 : i32
    %c0_i32_0 = arith.constant 0 : i32
    %c0_i32_1 = arith.constant 0 : i32
    return %arg0, %c0_i32, %c0_i32_0 : i32, i32, i32
  }
}

module attributes {stable_mosaic.version = 11 : i64} {
  func.func @_res_block_kernel(%arg0: i32, %arg1: memref<1x32x42xbf16, #tpu.memory_space<vmem>>, %arg2: memref<9x32x32xbf16, #tpu.memory_space<vmem>>, %arg3: memref<9x32x32xbf16, #tpu.memory_space<vmem>>, %arg4: memref<32x1xf32, #tpu.memory_space<vmem>>, %arg5: memref<1x24xf32, #tpu.memory_space<vmem>>, %arg6: memref<1x32x42xf32, #tpu.memory_space<vmem>>, %arg7: memref<32x42xbf16, #tpu.memory_space<vmem>>) attributes {dimension_semantics = [#tpu.dimension_semantics<parallel>], iteration_bounds = array<i64: 2>, scalar_prefetch = 0 : i64, scratch_operands = 1 : i64, tpu.core_type = #tpu.core_type<tc>, window_params = [{transform_indices = @transform_0, window_bounds = array<i64: 1, 32, 42>}, {pipeline_mode = #tpu.pipeline_mode<synchronous>, transform_indices = @transform_1, window_bounds = array<i64: 9, 32, 32>}, {pipeline_mode = #tpu.pipeline_mode<synchronous>, transform_indices = @transform_2, window_bounds = array<i64: 9, 32, 32>}, {pipeline_mode = #tpu.pipeline_mode<synchronous>, transform_indices = @transform_3, window_bounds = array<i64: 32, 1>}, {pipeline_mode = #tpu.pipeline_mode<synchronous>, transform_indices = @transform_4, window_bounds = array<i64: 1, 24>}, {transform_indices = @transform_5, window_bounds = array<i64: 1, 32, 42>}]} {
    %c0 = arith.constant 0 : index
    %c0_0 = arith.constant 0 : index
    %0 = vector.load %arg5[%c0, %c0_0] : memref<1x24xf32, #tpu.memory_space<vmem>>, vector<1x24xf32>
    %cst = arith.constant 0.000000e+00 : f32
    %1 = vector.broadcast %cst : f32 to vector<32x24xf32>
    %c0_1 = arith.constant 0 : index
    %c0_2 = arith.constant 0 : index
    %c0_3 = arith.constant 0 : index
    %2 = vector.load %arg2[%c0_1, %c0_2, %c0_3] : memref<9x32x32xbf16, #tpu.memory_space<vmem>>, vector<1x32x32xbf16>
    %3 = vector.shape_cast %2 : vector<1x32x32xbf16> to vector<32x32xbf16>
    %c0_4 = arith.constant 0 : index
    %c0_5 = arith.constant 0 : index
    %c0_6 = arith.constant 0 : index
    %4 = vector.load %arg1[%c0_4, %c0_5, %c0_6] : memref<1x32x42xbf16, #tpu.memory_space<vmem>>, vector<1x32x24xbf16>
    %5 = vector.shape_cast %4 : vector<1x32x24xbf16> to vector<32x24xbf16>
    %cst_7 = arith.constant dense<0.000000e+00> : vector<32x24xf32>
    %6 = tpu.matmul %3, %5, %cst_7 {dimension_numbers = #tpu.dot_dimension_numbers<[1], [0], [0], [1], [0, 0, 1, 1], [], []>} : vector<32x32xbf16>, vector<32x24xbf16>, vector<32x24xf32> -> vector<32x24xf32>
    %7 = arith.addf %1, %6 : vector<32x24xf32>
    %c1 = arith.constant 1 : index
    %c0_8 = arith.constant 0 : index
    %c0_9 = arith.constant 0 : index
    %8 = vector.load %arg2[%c1, %c0_8, %c0_9] : memref<9x32x32xbf16, #tpu.memory_space<vmem>>, vector<1x32x32xbf16>
    %9 = vector.shape_cast %8 : vector<1x32x32xbf16> to vector<32x32xbf16>
    %c0_10 = arith.constant 0 : index
    %c0_11 = arith.constant 0 : index
    %c1_12 = arith.constant 1 : index
    %10 = vector.load %arg1[%c0_10, %c0_11, %c1_12] : memref<1x32x42xbf16, #tpu.memory_space<vmem>>, vector<1x32x24xbf16>
    %11 = vector.shape_cast %10 : vector<1x32x24xbf16> to vector<32x24xbf16>
    %cst_13 = arith.constant dense<0.000000e+00> : vector<32x24xf32>
    %12 = tpu.matmul %9, %11, %cst_13 {dimension_numbers = #tpu.dot_dimension_numbers<[1], [0], [0], [1], [0, 0, 1, 1], [], []>} : vector<32x32xbf16>, vector<32x24xbf16>, vector<32x24xf32> -> vector<32x24xf32>
    %13 = arith.addf %7, %12 : vector<32x24xf32>
    %c2 = arith.constant 2 : index
    %c0_14 = arith.constant 0 : index
    %c0_15 = arith.constant 0 : index
    %14 = vector.load %arg2[%c2, %c0_14, %c0_15] : memref<9x32x32xbf16, #tpu.memory_space<vmem>>, vector<1x32x32xbf16>
    %15 = vector.shape_cast %14 : vector<1x32x32xbf16> to vector<32x32xbf16>
    %c0_16 = arith.constant 0 : index
    %c0_17 = arith.constant 0 : index
    %c2_18 = arith.constant 2 : index
    %16 = vector.load %arg1[%c0_16, %c0_17, %c2_18] : memref<1x32x42xbf16, #tpu.memory_space<vmem>>, vector<1x32x24xbf16>
    %17 = vector.shape_cast %16 : vector<1x32x24xbf16> to vector<32x24xbf16>
    %cst_19 = arith.constant dense<0.000000e+00> : vector<32x24xf32>
    %18 = tpu.matmul %15, %17, %cst_19 {dimension_numbers = #tpu.dot_dimension_numbers<[1], [0], [0], [1], [0, 0, 1, 1], [], []>} : vector<32x32xbf16>, vector<32x24xbf16>, vector<32x24xf32> -> vector<32x24xf32>
    %19 = arith.addf %13, %18 : vector<32x24xf32>
    %c3 = arith.constant 3 : index
    %c0_20 = arith.constant 0 : index
    %c0_21 = arith.constant 0 : index
    %20 = vector.load %arg2[%c3, %c0_20, %c0_21] : memref<9x32x32xbf16, #tpu.memory_space<vmem>>, vector<1x32x32xbf16>
    %21 = vector.shape_cast %20 : vector<1x32x32xbf16> to vector<32x32xbf16>
    %c0_22 = arith.constant 0 : index
    %c0_23 = arith.constant 0 : index
    %c6 = arith.constant 6 : index
    %22 = vector.load %arg1[%c0_22, %c0_23, %c6] : memref<1x32x42xbf16, #tpu.memory_space<vmem>>, vector<1x32x24xbf16>
    %23 = vector.shape_cast %22 : vector<1x32x24xbf16> to vector<32x24xbf16>
    %cst_24 = arith.constant dense<0.000000e+00> : vector<32x24xf32>
    %24 = tpu.matmul %21, %23, %cst_24 {dimension_numbers = #tpu.dot_dimension_numbers<[1], [0], [0], [1], [0, 0, 1, 1], [], []>} : vector<32x32xbf16>, vector<32x24xbf16>, vector<32x24xf32> -> vector<32x24xf32>
    %25 = arith.addf %19, %24 : vector<32x24xf32>
    %c4 = arith.constant 4 : index
    %c0_25 = arith.constant 0 : index
    %c0_26 = arith.constant 0 : index
    %26 = vector.load %arg2[%c4, %c0_25, %c0_26] : memref<9x32x32xbf16, #tpu.memory_space<vmem>>, vector<1x32x32xbf16>
    %27 = vector.shape_cast %26 : vector<1x32x32xbf16> to vector<32x32xbf16>
    %c0_27 = arith.constant 0 : index
    %c0_28 = arith.constant 0 : index
    %c7 = arith.constant 7 : index
    %28 = vector.load %arg1[%c0_27, %c0_28, %c7] : memref<1x32x42xbf16, #tpu.memory_space<vmem>>, vector<1x32x24xbf16>
    %29 = vector.shape_cast %28 : vector<1x32x24xbf16> to vector<32x24xbf16>
    %cst_29 = arith.constant dense<0.000000e+00> : vector<32x24xf32>
    %30 = tpu.matmul %27, %29, %cst_29 {dimension_numbers = #tpu.dot_dimension_numbers<[1], [0], [0], [1], [0, 0, 1, 1], [], []>} : vector<32x32xbf16>, vector<32x24xbf16>, vector<32x24xf32> -> vector<32x24xf32>
    %31 = arith.addf %25, %30 : vector<32x24xf32>
    %c5 = arith.constant 5 : index
    %c0_30 = arith.constant 0 : index
    %c0_31 = arith.constant 0 : index
    %32 = vector.load %arg2[%c5, %c0_30, %c0_31] : memref<9x32x32xbf16, #tpu.memory_space<vmem>>, vector<1x32x32xbf16>
    %33 = vector.shape_cast %32 : vector<1x32x32xbf16> to vector<32x32xbf16>
    %c0_32 = arith.constant 0 : index
    %c0_33 = arith.constant 0 : index
    %c8 = arith.constant 8 : index
    %34 = vector.load %arg1[%c0_32, %c0_33, %c8] : memref<1x32x42xbf16, #tpu.memory_space<vmem>>, vector<1x32x24xbf16>
    %35 = vector.shape_cast %34 : vector<1x32x24xbf16> to vector<32x24xbf16>
    %cst_34 = arith.constant dense<0.000000e+00> : vector<32x24xf32>
    %36 = tpu.matmul %33, %35, %cst_34 {dimension_numbers = #tpu.dot_dimension_numbers<[1], [0], [0], [1], [0, 0, 1, 1], [], []>} : vector<32x32xbf16>, vector<32x24xbf16>, vector<32x24xf32> -> vector<32x24xf32>
    %37 = arith.addf %31, %36 : vector<32x24xf32>
    %c6_35 = arith.constant 6 : index
    %c0_36 = arith.constant 0 : index
    %c0_37 = arith.constant 0 : index
    %38 = vector.load %arg2[%c6_35, %c0_36, %c0_37] : memref<9x32x32xbf16, #tpu.memory_space<vmem>>, vector<1x32x32xbf16>
    %39 = vector.shape_cast %38 : vector<1x32x32xbf16> to vector<32x32xbf16>
    %c0_38 = arith.constant 0 : index
    %c0_39 = arith.constant 0 : index
    %c12 = arith.constant 12 : index
    %40 = vector.load %arg1[%c0_38, %c0_39, %c12] : memref<1x32x42xbf16, #tpu.memory_space<vmem>>, vector<1x32x24xbf16>
    %41 = vector.shape_cast %40 : vector<1x32x24xbf16> to vector<32x24xbf16>
    %cst_40 = arith.constant dense<0.000000e+00> : vector<32x24xf32>
    %42 = tpu.matmul %39, %41, %cst_40 {dimension_numbers = #tpu.dot_dimension_numbers<[1], [0], [0], [1], [0, 0, 1, 1], [], []>} : vector<32x32xbf16>, vector<32x24xbf16>, vector<32x24xf32> -> vector<32x24xf32>
    %43 = arith.addf %37, %42 : vector<32x24xf32>
    %c7_41 = arith.constant 7 : index
    %c0_42 = arith.constant 0 : index
    %c0_43 = arith.constant 0 : index
    %44 = vector.load %arg2[%c7_41, %c0_42, %c0_43] : memref<9x32x32xbf16, #tpu.memory_space<vmem>>, vector<1x32x32xbf16>
    %45 = vector.shape_cast %44 : vector<1x32x32xbf16> to vector<32x32xbf16>
    %c0_44 = arith.constant 0 : index
    %c0_45 = arith.constant 0 : index
    %c13 = arith.constant 13 : index
    %46 = vector.load %arg1[%c0_44, %c0_45, %c13] : memref<1x32x42xbf16, #tpu.memory_space<vmem>>, vector<1x32x24xbf16>
    %47 = vector.shape_cast %46 : vector<1x32x24xbf16> to vector<32x24xbf16>
    %cst_46 = arith.constant dense<0.000000e+00> : vector<32x24xf32>
    %48 = tpu.matmul %45, %47, %cst_46 {dimension_numbers = #tpu.dot_dimension_numbers<[1], [0], [0], [1], [0, 0, 1, 1], [], []>} : vector<32x32xbf16>, vector<32x24xbf16>, vector<32x24xf32> -> vector<32x24xf32>
    %49 = arith.addf %43, %48 : vector<32x24xf32>
    %c8_47 = arith.constant 8 : index
    %c0_48 = arith.constant 0 : index
    %c0_49 = arith.constant 0 : index
    %50 = vector.load %arg2[%c8_47, %c0_48, %c0_49] : memref<9x32x32xbf16, #tpu.memory_space<vmem>>, vector<1x32x32xbf16>
    %51 = vector.shape_cast %50 : vector<1x32x32xbf16> to vector<32x32xbf16>
    %c0_50 = arith.constant 0 : index
    %c0_51 = arith.constant 0 : index
    %c14 = arith.constant 14 : index
    %52 = vector.load %arg1[%c0_50, %c0_51, %c14] : memref<1x32x42xbf16, #tpu.memory_space<vmem>>, vector<1x32x24xbf16>
    %53 = vector.shape_cast %52 : vector<1x32x24xbf16> to vector<32x24xbf16>
    %cst_52 = arith.constant dense<0.000000e+00> : vector<32x24xf32>
    %54 = tpu.matmul %51, %53, %cst_52 {dimension_numbers = #tpu.dot_dimension_numbers<[1], [0], [0], [1], [0, 0, 1, 1], [], []>} : vector<32x32xbf16>, vector<32x24xbf16>, vector<32x24xf32> -> vector<32x24xf32>
    %55 = arith.addf %49, %54 : vector<32x24xf32>
    %56 = vector.broadcast %0 : vector<1x24xf32> to vector<32x24xf32>
    %57 = arith.mulf %55, %56 : vector<32x24xf32>
    %cst_53 = arith.constant dense<0.000000e+00> : vector<32xf32>
    %58 = vector.multi_reduction <add>, %57, %cst_53 [1] : vector<32x24xf32> to vector<32xf32>
    %59 = vector.shape_cast %58 : vector<32xf32> to vector<32x1xf32>
    %cst_54 = arith.constant 6.250000e-02 : f32
    %60 = vector.broadcast %cst_54 : f32 to vector<32x1xf32>
    %61 = arith.mulf %59, %60 : vector<32x1xf32>
    %62 = vector.broadcast %61 : vector<32x1xf32> to vector<32x24xf32>
    %63 = arith.subf %55, %62 : vector<32x24xf32>
    %64 = vector.broadcast %0 : vector<1x24xf32> to vector<32x24xf32>
    %65 = arith.mulf %63, %64 : vector<32x24xf32>
    %66 = arith.mulf %65, %65 : vector<32x24xf32>
    %cst_55 = arith.constant dense<0.000000e+00> : vector<32xf32>
    %67 = vector.multi_reduction <add>, %66, %cst_55 [1] : vector<32x24xf32> to vector<32xf32>
    %68 = vector.shape_cast %67 : vector<32xf32> to vector<32x1xf32>
    %cst_56 = arith.constant 6.250000e-02 : f32
    %69 = vector.broadcast %cst_56 : f32 to vector<32x1xf32>
    %70 = arith.mulf %68, %69 : vector<32x1xf32>
    %cst_57 = arith.constant 9.99999974E-6 : f32
    %71 = vector.broadcast %cst_57 : f32 to vector<32x1xf32>
    %72 = arith.addf %70, %71 : vector<32x1xf32>
    %73 = math.rsqrt %72 : vector<32x1xf32>
    %74 = vector.broadcast %73 : vector<32x1xf32> to vector<32x24xf32>
    %75 = arith.mulf %65, %74 : vector<32x24xf32>
    %cst_58 = arith.constant 0.000000e+00 : f32
    %76 = vector.broadcast %cst_58 : f32 to vector<32x24xf32>
    %77 = arith.maximumf %75, %76 : vector<32x24xf32>
    %cst_59 = arith.constant 0.000000e+00 : bf16
    %78 = vector.broadcast %cst_59 : bf16 to vector<32x42xbf16>
    %c0_60 = arith.constant 0 : index
    %c0_61 = arith.constant 0 : index
    %79 = vector.load %arg7[%c0_60, %c0_61] : memref<32x42xbf16, #tpu.memory_space<vmem>>, vector<32x42xbf16>
    tpu.vector_store %arg7[%c0_60, %c0_61], %78 {strides = array<i32>} : memref<32x42xbf16, #tpu.memory_space<vmem>>, vector<32x42xbf16>,
    %80 = arith.truncf %77 : vector<32x24xf32> to vector<32x24xbf16>
    %c0_62 = arith.constant 0 : index
    %c7_63 = arith.constant 7 : index
    %81 = vector.load %arg7[%c0_62, %c7_63] : memref<32x42xbf16, #tpu.memory_space<vmem>>, vector<32x24xbf16>
    tpu.vector_store %arg7[%c0_62, %c7_63], %80 {strides = array<i32>} : memref<32x42xbf16, #tpu.memory_space<vmem>>, vector<32x24xbf16>,
    %c0_64 = arith.constant 0 : index
    %c0_65 = arith.constant 0 : index
    %82 = vector.load %arg4[%c0_64, %c0_65] : memref<32x1xf32, #tpu.memory_space<vmem>>, vector<32x1xf32>
    %c0_66 = arith.constant 0 : index
    %c0_67 = arith.constant 0 : index
    %c7_68 = arith.constant 7 : index
    %83 = vector.load %arg1[%c0_66, %c0_67, %c7_68] : memref<1x32x42xbf16, #tpu.memory_space<vmem>>, vector<1x32x24xbf16>
    %84 = vector.shape_cast %83 : vector<1x32x24xbf16> to vector<32x24xbf16>
    %85 = arith.extf %84 : vector<32x24xbf16> to vector<32x24xf32>
    %86 = vector.broadcast %82 : vector<32x1xf32> to vector<32x24xf32>
    %87 = arith.addf %86, %85 : vector<32x24xf32>
    %c0_69 = arith.constant 0 : index
    %c0_70 = arith.constant 0 : index
    %c0_71 = arith.constant 0 : index
    %88 = vector.load %arg3[%c0_69, %c0_70, %c0_71] : memref<9x32x32xbf16, #tpu.memory_space<vmem>>, vector<1x32x32xbf16>
    %89 = vector.shape_cast %88 : vector<1x32x32xbf16> to vector<32x32xbf16>
    %c0_72 = arith.constant 0 : index
    %c0_73 = arith.constant 0 : index
    %90 = vector.load %arg7[%c0_72, %c0_73] : memref<32x42xbf16, #tpu.memory_space<vmem>>, vector<32x24xbf16>
    %cst_74 = arith.constant dense<0.000000e+00> : vector<32x24xf32>
    %91 = tpu.matmul %89, %90, %cst_74 {dimension_numbers = #tpu.dot_dimension_numbers<[1], [0], [0], [1], [0, 0, 1, 1], [], []>} : vector<32x32xbf16>, vector<32x24xbf16>, vector<32x24xf32> -> vector<32x24xf32>
    %92 = arith.addf %87, %91 : vector<32x24xf32>
    %c1_75 = arith.constant 1 : index
    %c0_76 = arith.constant 0 : index
    %c0_77 = arith.constant 0 : index
    %93 = vector.load %arg3[%c1_75, %c0_76, %c0_77] : memref<9x32x32xbf16, #tpu.memory_space<vmem>>, vector<1x32x32xbf16>
    %94 = vector.shape_cast %93 : vector<1x32x32xbf16> to vector<32x32xbf16>
    %c0_78 = arith.constant 0 : index
    %c1_79 = arith.constant 1 : index
    %95 = vector.load %arg7[%c0_78, %c1_79] : memref<32x42xbf16, #tpu.memory_space<vmem>>, vector<32x24xbf16>
    %cst_80 = arith.constant dense<0.000000e+00> : vector<32x24xf32>
    %96 = tpu.matmul %94, %95, %cst_80 {dimension_numbers = #tpu.dot_dimension_numbers<[1], [0], [0], [1], [0, 0, 1, 1], [], []>} : vector<32x32xbf16>, vector<32x24xbf16>, vector<32x24xf32> -> vector<32x24xf32>
    %97 = arith.addf %92, %96 : vector<32x24xf32>
    %c2_81 = arith.constant 2 : index
    %c0_82 = arith.constant 0 : index
    %c0_83 = arith.constant 0 : index
    %98 = vector.load %arg3[%c2_81, %c0_82, %c0_83] : memref<9x32x32xbf16, #tpu.memory_space<vmem>>, vector<1x32x32xbf16>
    %99 = vector.shape_cast %98 : vector<1x32x32xbf16> to vector<32x32xbf16>
    %c0_84 = arith.constant 0 : index
    %c2_85 = arith.constant 2 : index
    %100 = vector.load %arg7[%c0_84, %c2_85] : memref<32x42xbf16, #tpu.memory_space<vmem>>, vector<32x24xbf16>
    %cst_86 = arith.constant dense<0.000000e+00> : vector<32x24xf32>
    %101 = tpu.matmul %99, %100, %cst_86 {dimension_numbers = #tpu.dot_dimension_numbers<[1], [0], [0], [1], [0, 0, 1, 1], [], []>} : vector<32x32xbf16>, vector<32x24xbf16>, vector<32x24xf32> -> vector<32x24xf32>
    %102 = arith.addf %97, %101 : vector<32x24xf32>
    %c3_87 = arith.constant 3 : index
    %c0_88 = arith.constant 0 : index
    %c0_89 = arith.constant 0 : index
    %103 = vector.load %arg3[%c3_87, %c0_88, %c0_89] : memref<9x32x32xbf16, #tpu.memory_space<vmem>>, vector<1x32x32xbf16>
    %104 = vector.shape_cast %103 : vector<1x32x32xbf16> to vector<32x32xbf16>
    %c0_90 = arith.constant 0 : index
    %c6_91 = arith.constant 6 : index
    %105 = vector.load %arg7[%c0_90, %c6_91] : memref<32x42xbf16, #tpu.memory_space<vmem>>, vector<32x24xbf16>
    %cst_92 = arith.constant dense<0.000000e+00> : vector<32x24xf32>
    %106 = tpu.matmul %104, %105, %cst_92 {dimension_numbers = #tpu.dot_dimension_numbers<[1], [0], [0], [1], [0, 0, 1, 1], [], []>} : vector<32x32xbf16>, vector<32x24xbf16>, vector<32x24xf32> -> vector<32x24xf32>
    %107 = arith.addf %102, %106 : vector<32x24xf32>
    %c4_93 = arith.constant 4 : index
    %c0_94 = arith.constant 0 : index
    %c0_95 = arith.constant 0 : index
    %108 = vector.load %arg3[%c4_93, %c0_94, %c0_95] : memref<9x32x32xbf16, #tpu.memory_space<vmem>>, vector<1x32x32xbf16>
    %109 = vector.shape_cast %108 : vector<1x32x32xbf16> to vector<32x32xbf16>
    %c0_96 = arith.constant 0 : index
    %c7_97 = arith.constant 7 : index
    %110 = vector.load %arg7[%c0_96, %c7_97] : memref<32x42xbf16, #tpu.memory_space<vmem>>, vector<32x24xbf16>
    %cst_98 = arith.constant dense<0.000000e+00> : vector<32x24xf32>
    %111 = tpu.matmul %109, %110, %cst_98 {dimension_numbers = #tpu.dot_dimension_numbers<[1], [0], [0], [1], [0, 0, 1, 1], [], []>} : vector<32x32xbf16>, vector<32x24xbf16>, vector<32x24xf32> -> vector<32x24xf32>
    %112 = arith.addf %107, %111 : vector<32x24xf32>
    %c5_99 = arith.constant 5 : index
    %c0_100 = arith.constant 0 : index
    %c0_101 = arith.constant 0 : index
    %113 = vector.load %arg3[%c5_99, %c0_100, %c0_101] : memref<9x32x32xbf16, #tpu.memory_space<vmem>>, vector<1x32x32xbf16>
    %114 = vector.shape_cast %113 : vector<1x32x32xbf16> to vector<32x32xbf16>
    %c0_102 = arith.constant 0 : index
    %c8_103 = arith.constant 8 : index
    %115 = vector.load %arg7[%c0_102, %c8_103] : memref<32x42xbf16, #tpu.memory_space<vmem>>, vector<32x24xbf16>
    %cst_104 = arith.constant dense<0.000000e+00> : vector<32x24xf32>
    %116 = tpu.matmul %114, %115, %cst_104 {dimension_numbers = #tpu.dot_dimension_numbers<[1], [0], [0], [1], [0, 0, 1, 1], [], []>} : vector<32x32xbf16>, vector<32x24xbf16>, vector<32x24xf32> -> vector<32x24xf32>
    %117 = arith.addf %112, %116 : vector<32x24xf32>
    %c6_105 = arith.constant 6 : index
    %c0_106 = arith.constant 0 : index
    %c0_107 = arith.constant 0 : index
    %118 = vector.load %arg3[%c6_105, %c0_106, %c0_107] : memref<9x32x32xbf16, #tpu.memory_space<vmem>>, vector<1x32x32xbf16>
    %119 = vector.shape_cast %118 : vector<1x32x32xbf16> to vector<32x32xbf16>
    %c0_108 = arith.constant 0 : index
    %c12_109 = arith.constant 12 : index
    %120 = vector.load %arg7[%c0_108, %c12_109] : memref<32x42xbf16, #tpu.memory_space<vmem>>, vector<32x24xbf16>
    %cst_110 = arith.constant dense<0.000000e+00> : vector<32x24xf32>
    %121 = tpu.matmul %119, %120, %cst_110 {dimension_numbers = #tpu.dot_dimension_numbers<[1], [0], [0], [1], [0, 0, 1, 1], [], []>} : vector<32x32xbf16>, vector<32x24xbf16>, vector<32x24xf32> -> vector<32x24xf32>
    %122 = arith.addf %117, %121 : vector<32x24xf32>
    %c7_111 = arith.constant 7 : index
    %c0_112 = arith.constant 0 : index
    %c0_113 = arith.constant 0 : index
    %123 = vector.load %arg3[%c7_111, %c0_112, %c0_113] : memref<9x32x32xbf16, #tpu.memory_space<vmem>>, vector<1x32x32xbf16>
    %124 = vector.shape_cast %123 : vector<1x32x32xbf16> to vector<32x32xbf16>
    %c0_114 = arith.constant 0 : index
    %c13_115 = arith.constant 13 : index
    %125 = vector.load %arg7[%c0_114, %c13_115] : memref<32x42xbf16, #tpu.memory_space<vmem>>, vector<32x24xbf16>
    %cst_116 = arith.constant dense<0.000000e+00> : vector<32x24xf32>
    %126 = tpu.matmul %124, %125, %cst_116 {dimension_numbers = #tpu.dot_dimension_numbers<[1], [0], [0], [1], [0, 0, 1, 1], [], []>} : vector<32x32xbf16>, vector<32x24xbf16>, vector<32x24xf32> -> vector<32x24xf32>
    %127 = arith.addf %122, %126 : vector<32x24xf32>
    %c8_117 = arith.constant 8 : index
    %c0_118 = arith.constant 0 : index
    %c0_119 = arith.constant 0 : index
    %128 = vector.load %arg3[%c8_117, %c0_118, %c0_119] : memref<9x32x32xbf16, #tpu.memory_space<vmem>>, vector<1x32x32xbf16>
    %129 = vector.shape_cast %128 : vector<1x32x32xbf16> to vector<32x32xbf16>
    %c0_120 = arith.constant 0 : index
    %c14_121 = arith.constant 14 : index
    %130 = vector.load %arg7[%c0_120, %c14_121] : memref<32x42xbf16, #tpu.memory_space<vmem>>, vector<32x24xbf16>
    %cst_122 = arith.constant dense<0.000000e+00> : vector<32x24xf32>
    %131 = tpu.matmul %129, %130, %cst_122 {dimension_numbers = #tpu.dot_dimension_numbers<[1], [0], [0], [1], [0, 0, 1, 1], [], []>} : vector<32x32xbf16>, vector<32x24xbf16>, vector<32x24xf32> -> vector<32x24xf32>
    %132 = arith.addf %127, %131 : vector<32x24xf32>
    %cst_123 = arith.constant 0.000000e+00 : f32
    %133 = vector.broadcast %cst_123 : f32 to vector<32x42xf32>
    %c0_124 = arith.constant 0 : index
    %c0_125 = arith.constant 0 : index
    %c0_126 = arith.constant 0 : index
    %134 = vector.load %arg6[%c0_124, %c0_125, %c0_126] : memref<1x32x42xf32, #tpu.memory_space<vmem>>, vector<1x32x42xf32>
    %135 = vector.shape_cast %134 : vector<1x32x42xf32> to vector<32x42xf32>
    %136 = vector.shape_cast %133 : vector<32x42xf32> to vector<1x32x42xf32>
    tpu.vector_store %arg6[%c0_124, %c0_125, %c0_126], %136 {strides = array<i32>} : memref<1x32x42xf32, #tpu.memory_space<vmem>>, vector<1x32x42xf32>,
    %137 = vector.broadcast %0 : vector<1x24xf32> to vector<32x24xf32>
    %138 = arith.mulf %132, %137 : vector<32x24xf32>
    %c0_127 = arith.constant 0 : index
    %c0_128 = arith.constant 0 : index
    %c7_129 = arith.constant 7 : index
    %139 = vector.load %arg6[%c0_127, %c0_128, %c7_129] : memref<1x32x42xf32, #tpu.memory_space<vmem>>, vector<1x32x24xf32>
    %140 = vector.shape_cast %139 : vector<1x32x24xf32> to vector<32x24xf32>
    %141 = vector.shape_cast %138 : vector<32x24xf32> to vector<1x32x24xf32>
    tpu.vector_store %arg6[%c0_127, %c0_128, %c7_129], %141 {strides = array<i32>} : memref<1x32x42xf32, #tpu.memory_space<vmem>>, vector<1x32x24xf32>,
    return
  }
  func.func @transform_0(%arg0: i32) -> (i32, i32, i32) {
    %c0_i32 = arith.constant 0 : i32
    %c0_i32_0 = arith.constant 0 : i32
    %c0_i32_1 = arith.constant 0 : i32
    return %arg0, %c0_i32, %c0_i32_0 : i32, i32, i32
  }
  func.func @transform_1(%arg0: i32) -> (i32, i32, i32) {
    %c0_i32 = arith.constant 0 : i32
    %c0_i32_0 = arith.constant 0 : i32
    %c0_i32_1 = arith.constant 0 : i32
    %c0_i32_2 = arith.constant 0 : i32
    return %c0_i32, %c0_i32_0, %c0_i32_1 : i32, i32, i32
  }
  func.func @transform_2(%arg0: i32) -> (i32, i32, i32) {
    %c0_i32 = arith.constant 0 : i32
    %c0_i32_0 = arith.constant 0 : i32
    %c0_i32_1 = arith.constant 0 : i32
    %c0_i32_2 = arith.constant 0 : i32
    return %c0_i32, %c0_i32_0, %c0_i32_1 : i32, i32, i32
  }
  func.func @transform_3(%arg0: i32) -> (i32, i32) {
    %c0_i32 = arith.constant 0 : i32
    %c0_i32_0 = arith.constant 0 : i32
    %c0_i32_1 = arith.constant 0 : i32
    return %c0_i32, %c0_i32_0 : i32, i32
  }
  func.func @transform_4(%arg0: i32) -> (i32, i32) {
    %c0_i32 = arith.constant 0 : i32
    %c0_i32_0 = arith.constant 0 : i32
    %c0_i32_1 = arith.constant 0 : i32
    return %c0_i32, %c0_i32_0 : i32, i32
  }
  func.func @transform_5(%arg0: i32) -> (i32, i32, i32) {
    %c0_i32 = arith.constant 0 : i32
    %c0_i32_0 = arith.constant 0 : i32
    %c0_i32_1 = arith.constant 0 : i32
    return %arg0, %c0_i32, %c0_i32_0 : i32, i32, i32
  }
}

</mosaic_0001>

<llo_original>
// kernel: _lambda_.7
$region0: #{_lambda_.7}
  #allocation0 [shape = 'u32[]', space=smem, size = 0x4, offset = 0x4, fixed_abs, tag = 'smem constant byte address 0x4 - core index']
  #allocation1 [shape = 'u32[144,128]{1,0:T(1,128)}', space=vmem, size = 0x12000, scoped, tag = 'internal scratch']
  %s0 = inlined_call_operand.vmem [shape: bf16[2,147,256], index: 0, kind: input, shape index: {}]
  %s1 = inlined_call_operand.vmem [shape: bf16[8,147], index: 1, kind: input, shape index: {}]
  %s2 = inlined_call_operand.vmem [shape: bf16[2,8,256], index: 2, kind: output, shape index: {}]
  %s3 = sld [smem:[#allocation0]]
  $region41: #{_lambda_.7} parent=0
    _
  %s5 = ssub.s32 1, %s3
  %s6 = scalar_select 0, %s5, %s3
  loop: start=0, step=1, limit=4
  $region2: #{_lambda_.7} parent=0 // loop_pre_header
    _
  $region3: #{_lambda_.7} parent=0 // loop_header
    %s8 = sphi 0, %s12
    %p9 = scmp.ge.s32.totalorder %s8, 4
    %s18 = sphi 0, %s20
    %s21 = sphi 0, %s18
    %s22 = sphi 0, %s21
    %s38 = sphi 0, %s22
    %s42 = sphi 0, %s42
    %s44 = sphi 0, %s42
    %s45 = sphi 0, %s44
    %s59 = sphi 0, %s45
    %s65 = sphi 0, %s67
    %s68 = sphi 0, %s65
    %s69 = sphi 0, %s68
    %s85 = sphi 0, %s69
  $region4: #{_lambda_.7} parent=0 // loop_header_branch
    %11 = sbr.rel (%p9) target = $region8
  $region5: #{_lambda_.7} parent=0 // loop_body
    %s13 = ssub.s32 %s8, 1
    %s14 = ssub.s32 %s8, 2
    %s15 = sadd.s32 %s8, 1
    %s16 = ssub.s32 %s8, %s15
    %p17 = scmp.eq.s32.totalorder %s16, 0
    %s19 = sadd.s32 %s18, 1
    %s20 = scalar_select %p17, %s18, %s19
    %p23 = pneg %p17
    %p24 = scmp.eq.s32.totalorder %s8, 1
    %p25 = por %p23, %p24
    %p26 = scmp.ne.s32.totalorder %s18, %s21
    %p27 = scmp.eq.s32.totalorder %s8, 0
    %p28 = por %p26, %p27
    %p29 = scmp.ne.s32.totalorder %s18, %s21
    %p30 = scmp.eq.s32.totalorder %s13, 1
    %p31 = por %p29, %p30
    %p32 = scmp.ne.s32.totalorder %s21, %s22
    %p33 = scmp.eq.s32.totalorder %s13, 0
    %p34 = por %p32, %p33
    %p35 = scmp.ne.s32.totalorder %s21, %s22
    %p36 = scmp.eq.s32.totalorder %s14, 1
    %p37 = por %p35, %p36
    %p39 = scmp.ne.s32.totalorder %s22, %s38
    %p40 = scmp.eq.s32.totalorder %s14, 0
    %p41 = por %p39, %p40
    %s43 = sadd.s32 %s42, 1
    %p46 = scmp.eq.s32.totalorder %s8, 1
    %p47 = scmp.ne.s32.totalorder %s42, %s44
    %p48 = scmp.eq.s32.totalorder %s8, 0
    %p49 = por %p47, %p48
    %p50 = scmp.ne.s32.totalorder %s42, %s44
    %p51 = scmp.eq.s32.totalorder %s13, 1
    %p52 = por %p50, %p51
    %p53 = scmp.ne.s32.totalorder %s44, %s45
    %p54 = scmp.eq.s32.totalorder %s13, 0
    %p55 = por %p53, %p54
    %p56 = scmp.ne.s32.totalorder %s44, %s45
    %p57 = scmp.eq.s32.totalorder %s14, 1
    %p58 = por %p56, %p57
    %p60 = scmp.ne.s32.totalorder %s45, %s59
    %p61 = scmp.eq.s32.totalorder %s14, 0
    %p62 = por %p60, %p61
    %s63 = ssub.s32 %s8, %s15
    %p64 = scmp.eq.s32.totalorder %s63, 0
    %s66 = sadd.s32 %s65, 1
    %s67 = scalar_select %p64, %s65, %s66
    %p70 = pneg %p64
    %p71 = scmp.eq.s32.totalorder %s8, 1
    %p72 = por %p70, %p71
    %p73 = scmp.ne.s32.totalorder %s65, %s68
    %p74 = scmp.eq.s32.totalorder %s8, 0
    %p75 = por %p73, %p74
    %p76 = scmp.ne.s32.totalorder %s65, %s68
    %p77 = scmp.eq.s32.totalorder %s13, 1
    %p78 = por %p76, %p77
    %p79 = scmp.ne.s32.totalorder %s68, %s69
    %p80 = scmp.eq.s32.totalorder %s13, 0
    %p81 = por %p79, %p80
    %p82 = scmp.ne.s32.totalorder %s68, %s69
    %p83 = scmp.eq.s32.totalorder %s14, 1
    %p84 = por %p82, %p83
    %p86 = scmp.ne.s32.totalorder %s69, %s85
    %p87 = scmp.eq.s32.totalorder %s14, 0
    %p88 = por %p86, %p87
    %p89 = scmp.le.s32.totalorder 1, %s8
    %p90 = scmp.lt.s32.totalorder %s8, 3
    %p91 = pnand %p89, %p90
    %p92 = pneg %p91
    // Predicated region
    $region9: #{_lambda_.7} parent=5 // pred_check
      _
    $region10: #{_lambda_.7} parent=5 // pred_check_branch
      %94 = sbr.rel (%p91) target = $region12
    $region11: #{_lambda_.7} parent=5 // pred_region
      %s95 = ssub.s32 %s8, 1
      // Predicated region
      $region13: #{_lambda_.7} parent=11 // pred_check
        %p96 = pneg %p55
      $region14: #{_lambda_.7} parent=11 // pred_check_branch
        %98 = sbr.rel (%p96) target = $region16
      $region15: #{_lambda_.7} parent=11 // pred_region
        _
      $region16: #{_lambda_.7} parent=11 // pred_fallthru
        _
    $region12: #{_lambda_.7} parent=5 // pred_fallthru
      _
    %p99 = scmp.lt.s32.totalorder %s8, 2
    // Predicated region
    $region17: #{_lambda_.7} parent=5 // pred_check
      %p100 = pneg %p99
    $region18: #{_lambda_.7} parent=5 // pred_check_branch
      %102 = sbr.rel (%p100) target = $region20
    $region19: #{_lambda_.7} parent=5 // pred_region
      // Predicated region
      $region21: #{_lambda_.7} parent=19 // pred_check
        %p103 = pneg %p28
      $region22: #{_lambda_.7} parent=19 // pred_check_branch
        %105 = sbr.rel (%p103) target = $region24
      $region23: #{_lambda_.7} parent=19 // pred_region
        %p106 = scmp.lt.s32.totalorder %s8, 1
        %s107 = scalar_select %p106, %s8, 1
        %s108 = smul.addr %s107, 38
        %s109 = smul.addr %s108, 4
        %s110 = scalar_lea.vmem %s0, %s109
      $region24: #{_lambda_.7} parent=19 // pred_fallthru
        _
    $region20: #{_lambda_.7} parent=5 // pred_fallthru
      _
    %p111 = scmp.le.s32.totalorder 1, %s8
    %p112 = scmp.lt.s32.totalorder %s8, 3
    %p113 = pnand %p111, %p112
    %p114 = pneg %p113
    // Predicated region
    $region25: #{_lambda_.7} parent=5 // pred_check
      _
    $region26: #{_lambda_.7} parent=5 // pred_check_branch
      %116 = sbr.rel (%p113) target = $region28
    $region27: #{_lambda_.7} parent=5 // pred_region
      %s117 = ssub.s32 %s8, 1
      %p118 = scmp.lt.s32.totalorder %s13, 1
      %s119 = scalar_select %p118, %s13, 1
      %s120 = smul.addr %s119, 38
      %s121 = smul.addr %s120, 4
      %s122 = scalar_lea.vmem %s0, %s121
      %p123 = pneg %p34
      %p124 = pneg %p31
      %p125 = pneg %p55
      %p126 = pneg %p52
      %p127 = pneg %p81
      %p128 = pneg %p78
      %p129 = scmp.lt.s32.totalorder %s13, 1
      %s130 = scalar_select %p129, %s13, 1
      %s131 = smul.addr %s130, 2
      %s132 = smul.addr %s131, 4
      %s133 = scalar_lea.vmem %s2, %s132
      %p134 = scmp.lt.s32.totalorder %s13, 1
      %s135 = scalar_select %p134, %s13, 1
      %s136 = smul.addr %s135, 38
      %s137 = smul.addr %s136, 4
      %s138 = scalar_lea.vmem %s0, %s137
      %p139 = scmp.lt.s32.totalorder %s13, 1
      %s140 = scalar_select %p139, %s13, 1
      %s141 = smul.addr %s140, 2
      %s142 = smul.addr %s141, 4
      %s143 = scalar_lea.vmem %s2, %s142
      %v145 = vld [vmem:[%s1] sm:$0xff]
      %v146 = vld [vmem:[%s138] sm:$0xff]
      %v147 = vld [vmem:[%s138 + $0x8] sm:$0xff]
      %v148 = vld [vmem:[%s138 + $0x10] sm:$0xff]
      %v149 = vld [vmem:[%s138 + $0x18] sm:$0xff]
      %v150 = vld [vmem:[%s138 + $0x20] sm:$0xff]
      %v151 = vld [vmem:[%s138 + $0x28] sm:$0xff]
      %v152 = vld [vmem:[%s138 + $0x30] sm:$0xff]
      %v153 = vld [vmem:[%s138 + $0x38] sm:$0xff]
      %v154 = vld [vmem:[%s138 + $0x40] sm:$0xff]
      %v155 = vld [vmem:[%s138 + $0x48] sm:$0xff]
      %v156 = vld [vmem:[%s138 + $0x50] sm:$0xff]
      %v157 = vld [vmem:[%s138 + $0x58] sm:$0xff]
      %v158 = vld [vmem:[%s138 + $0x60] sm:$0xff]
      %v159 = vld [vmem:[%s138 + $0x68] sm:$0xff]
      %v160 = vld [vmem:[%s138 + $0x70] sm:$0xff]
      %v161 = vld [vmem:[%s138 + $0x78] sm:$0xff]
      %v162 = vld [vmem:[%s138 + $0x80] sm:$0xff]
      %v163 = vld [vmem:[%s138 + $0x88] sm:$0xff]
      %v164 = vld [vmem:[%s138 + $0x90] sm:$0x33]
      %v166 = vunpack.c.l.b16 %v145
      %v167 = vunpack.c.h.b16 %v145
      %v168 = vpack.c.b16 %v166, %v166
      %v169 = vpack.c.b16 %v167, %v167
      %v190 = vunpack.c.l.b16 %v146
      %v191 = vunpack.c.h.b16 %v146
      %v192 = vunpack.c.l.b16 %v147
      %v193 = vunpack.c.h.b16 %v147
      %v194 = vunpack.c.l.b16 %v148
      %v195 = vunpack.c.h.b16 %v148
      %v196 = vunpack.c.l.b16 %v149
      %v197 = vunpack.c.h.b16 %v149
      %v198 = vunpack.c.l.b16 %v150
      %v199 = vunpack.c.h.b16 %v150
      %v200 = vunpack.c.l.b16 %v151
      %v201 = vunpack.c.h.b16 %v151
      %v202 = vunpack.c.l.b16 %v152
      %v203 = vunpack.c.h.b16 %v152
      %v204 = vunpack.c.l.b16 %v153
      %v205 = vunpack.c.h.b16 %v153
      %v206 = vunpack.c.l.b16 %v154
      %v207 = vunpack.c.h.b16 %v154
      %v208 = vunpack.c.l.b16 %v155
      %v209 = vunpack.c.h.b16 %v155
      %v210 = vunpack.c.l.b16 %v156
      %v211 = vunpack.c.h.b16 %v156
      %v212 = vunpack.c.l.b16 %v157
      %v213 = vunpack.c.h.b16 %v157
      %v214 = vunpack.c.l.b16 %v158
      %v215 = vunpack.c.h.b16 %v158
      %v216 = vunpack.c.l.b16 %v159
      %v217 = vunpack.c.h.b16 %v159
      %v218 = vunpack.c.l.b16 %v160
      %v219 = vunpack.c.h.b16 %v160
      %v220 = vunpack.c.l.b16 %v161
      %v221 = vunpack.c.h.b16 %v161
      %v222 = vunpack.c.l.b16 %v162
      %v223 = vunpack.c.h.b16 %v162
      %v224 = vunpack.c.l.b16 %v163
      %v225 = vunpack.c.h.b16 %v163
      %v226 = vunpack.c.l.b16 %v164
      %v227 = vunpack.c.h.b16 %v164
      %v228 = vpack.c.b16 %v192, %v190
      %v229 = vpack.c.b16 %v193, %v191
      %v230 = vpack.c.b16 %v196, %v194
      %v231 = vpack.c.b16 %v197, %v195
      %v232 = vpack.c.b16 %v200, %v198
      %v233 = vpack.c.b16 %v201, %v199
      %v234 = vpack.c.b16 %v204, %v202
      %v235 = vpack.c.b16 %v205, %v203
      %v236 = vpack.c.b16 %v208, %v206
      %v237 = vpack.c.b16 %v209, %v207
      %v238 = vpack.c.b16 %v212, %v210
      %v239 = vpack.c.b16 %v213, %v211
      %v240 = vpack.c.b16 %v216, %v214
      %v241 = vpack.c.b16 %v217, %v215
      %v242 = vpack.c.b16 %v220, %v218
      %v243 = vpack.c.b16 %v221, %v219
      %v244 = vpack.c.b16 %v224, %v222
      %v245 = vpack.c.b16 %v225, %v223
      %v246 = vpack.c.b16 %v226, %v226
      %v247 = vpack.c.b16 %v227, %v227
      %vm266 = vcmask 154624
      %v268 = vsel %vm266, %v169, 0
      %vm270 = vcmask 1040384
      %vm271 = vcmask 1041408
      %v272 = vsel %vm270, 4294967295, 65535
      %v273 = vsel %vm271, %v272, 0
      %v275 = vand.u32 %v246, %v273
      %v278 = vand.u32 %v247, %v273
      %280 = vmatprep.subr.bf16.mxu0 %v243
      %281 = vmatpush1.bf16.msra.mxu0 %v242
      %282 = vmatprep.subr.bf16.mxu0 %v241
      %283 = vmatpush1.bf16.msra.mxu0 %v240
      %284 = vmatprep.subr.bf16.mxu0 %v239
      %285 = vmatpush1.bf16.msra.mxu0 %v238
      %286 = vmatprep.subr.bf16.mxu0 %v237
      %287 = vmatpush1.bf16.msra.mxu0 %v236
      %288 = vmatprep.subr.bf16.mxu0 %v235
      %289 = vmatpush1.bf16.msra.mxu0 %v234
      %290 = vmatprep.subr.bf16.mxu0 %v233
      %291 = vmatpush1.bf16.msra.mxu0 %v232
      %292 = vmatprep.subr.bf16.mxu0 %v231
      %293 = vmatpush1.bf16.msra.mxu0 %v230
      %294 = vmatprep.subr.bf16.mxu0 %v229
      %295 = vmatpush1.bf16.msra.mxu0 %v228
      %296 = vmatprep.subr.bf16.mxu0 0
      %297 = vmatpush2.bf16.msra.mxu0 0
      %298 = vmatprep.subr.bf16.mxu0 0
      %299 = vmatpush2.bf16.msra.mxu0 0
      %300 = vmatprep.subr.bf16.mxu0 0
      %301 = vmatpush2.bf16.msra.mxu0 0
      %302 = vmatprep.subr.bf16.mxu0 0
      %303 = vmatpush2.bf16.msra.mxu0 0
      %304 = vmatprep.subr.bf16.mxu0 0
      %305 = vmatpush2.bf16.msra.mxu0 0
      %306 = vmatprep.subr.bf16.mxu0 0
      %307 = vmatpush2.bf16.msra.mxu0 0
      %308 = vmatprep.subr.bf16.mxu0 %v278
      %309 = vmatpush2.bf16.msra.mxu0 %v275
      %310 = vmatprep.subr.bf16.mxu0 %v245
      %311 = vmatpush2.bf16.msra.mxu0 %v244
      %312 = vmatprep.mubr.bf16.mxu0 %v268
      %313 = vmatmul.mubr.bf16.gmra.mxu0 %v168
      %v314 = vpop.f32.mrf.mxu0
      %v315 = vadd.f32 0.0, %v314
      %v316 = vpop.f32.mrf.mxu0
      %v317 = vadd.f32 0.0, %v316
      %v318 = vpop.f32.mrf.mxu0
      %v319 = vpop.f32.mrf.mxu0
      %320 = vdwg.mxu0
      %v321 = vadd.f32 %v315, %v317
      %322 = vadd.xlane.f32.xlu0 %v321
      %v323 = vpop.xlane.xlu0 %322
      %v324 = vmul.f32 %v323, 0.00390625
      %v325 = vsub.f32 %v315, %v324
      %v326 = vsub.f32 %v317, %v324
      %v327 = vmul.f32 %v325, %v325
      %v328 = vmul.f32 %v326, %v326
      %v329 = vadd.f32 %v327, %v328
      %330 = vadd.xlane.f32.xlu0 %v329
      %v331 = vpop.xlane.xlu0 %330
      %v332 = vmul.f32 %v331, 0.00390625
      %v333 = vadd.f32 %v332, 1e-05
      %v334 = vrsqrt.pop %v333
      %v335 = vmul.f32 %v325, %v334
      %v336 = vmul.f32 %v326, %v334
      %v337 = vmax.f32 %v335, 0.0
      %v338 = vmax.f32 %v336, 0.0
      %v339 = vpack.c.bf16 %v337, %v337
      %v340 = vpack.c.bf16 %v338, %v338
      %v343 = vunpack.c.l.b16 %v339
      %v344 = vunpack.c.l.b16 %v340
      %v345 = vpack.c.b16 %v344, %v343
      %347 = vst [vmem:[%s143] sm:$0xff] %v345
      %p348 = scmp.lt.s32.totalorder %s13, 1
      %s349 = scalar_select %p348, %s13, 1
      %s350 = smul.addr %s349, 2
      %s351 = smul.addr %s350, 4
      %s352 = scalar_lea.vmem %s2, %s351
      // Predicated region
      $region29: #{_lambda_.7} parent=27 // pred_check
        %p353 = pneg %p78
      $region30: #{_lambda_.7} parent=27 // pred_check_branch
        %355 = sbr.rel (%p353) target = $region32
      $region31: #{_lambda_.7} parent=27 // pred_region
        _
      $region32: #{_lambda_.7} parent=27 // pred_fallthru
        _
    $region28: #{_lambda_.7} parent=5 // pred_fallthru
      _
    %p356 = scmp.le.s32.totalorder 2, %s8
    // Predicated region
    $region33: #{_lambda_.7} parent=5 // pred_check
      %p357 = pneg %p356
    $region34: #{_lambda_.7} parent=5 // pred_check_branch
      %359 = sbr.rel (%p357) target = $region36
    $region35: #{_lambda_.7} parent=5 // pred_region
      %s360 = ssub.s32 %s8, 2
      // Predicated region
      $region37: #{_lambda_.7} parent=35 // pred_check
        %p361 = pneg %p84
      $region38: #{_lambda_.7} parent=35 // pred_check_branch
        %363 = sbr.rel (%p361) target = $region40
      $region39: #{_lambda_.7} parent=35 // pred_region
        %p364 = scmp.lt.s32.totalorder %s14, 1
        %s365 = scalar_select %p364, %s14, 1
        %s366 = smul.addr %s365, 2
        %s367 = smul.addr %s366, 4
        %s368 = scalar_lea.vmem %s2, %s367
      $region40: #{_lambda_.7} parent=35 // pred_fallthru
        _
    $region36: #{_lambda_.7} parent=5 // pred_fallthru
      _
  $region6: #{_lambda_.7} parent=0 // loop_footer
    %s12 = sadd.s32 1, %s8
  $region7: #{_lambda_.7} parent=0 // loop_footer_branch
    %7 = sbr.rel target = $region3
  $region8: #{_lambda_.7} parent=0 // loop_exit
    _

// kernel: _lambda_.8
$region0: #{_lambda_.8}
  #allocation0 [shape = 'u32[]', space=smem, size = 0x4, offset = 0x4, fixed_abs, tag = 'smem constant byte address 0x4 - core index']
  #allocation1 [shape = 'u32[144,128]{1,0:T(1,128)}', space=vmem, size = 0x12000, scoped, tag = 'internal scratch']
  %s0 = inlined_call_operand.vmem [shape: bf16[2,128,64], index: 0, kind: input, shape index: {}]
  %s1 = inlined_call_operand.vmem [shape: bf16[16,128], index: 1, kind: input, shape index: {}]
  %s2 = inlined_call_operand.vmem [shape: bf16[2,16,64], index: 2, kind: output, shape index: {}]
  %s3 = sld [smem:[#allocation0]]
  $region41: #{_lambda_.8} parent=0
    _
  %s5 = ssub.s32 1, %s3
  %s6 = scalar_select 0, %s5, %s3
  loop: start=0, step=1, limit=4
  $region2: #{_lambda_.8} parent=0 // loop_pre_header
    _
  $region3: #{_lambda_.8} parent=0 // loop_header
    %s8 = sphi 0, %s12
    %p9 = scmp.ge.s32.totalorder %s8, 4
    %s18 = sphi 0, %s20
    %s21 = sphi 0, %s18
    %s22 = sphi 0, %s21
    %s38 = sphi 0, %s22
    %s42 = sphi 0, %s42
    %s44 = sphi 0, %s42
    %s45 = sphi 0, %s44
    %s59 = sphi 0, %s45
    %s65 = sphi 0, %s67
    %s68 = sphi 0, %s65
    %s69 = sphi 0, %s68
    %s85 = sphi 0, %s69
  $region4: #{_lambda_.8} parent=0 // loop_header_branch
    %11 = sbr.rel (%p9) target = $region8
  $region5: #{_lambda_.8} parent=0 // loop_body
    %s13 = ssub.s32 %s8, 1
    %s14 = ssub.s32 %s8, 2
    %s15 = sadd.s32 %s8, 1
    %s16 = ssub.s32 %s8, %s15
    %p17 = scmp.eq.s32.totalorder %s16, 0
    %s19 = sadd.s32 %s18, 1
    %s20 = scalar_select %p17, %s18, %s19
    %p23 = pneg %p17
    %p24 = scmp.eq.s32.totalorder %s8, 1
    %p25 = por %p23, %p24
    %p26 = scmp.ne.s32.totalorder %s18, %s21
    %p27 = scmp.eq.s32.totalorder %s8, 0
    %p28 = por %p26, %p27
    %p29 = scmp.ne.s32.totalorder %s18, %s21
    %p30 = scmp.eq.s32.totalorder %s13, 1
    %p31 = por %p29, %p30
    %p32 = scmp.ne.s32.totalorder %s21, %s22
    %p33 = scmp.eq.s32.totalorder %s13, 0
    %p34 = por %p32, %p33
    %p35 = scmp.ne.s32.totalorder %s21, %s22
    %p36 = scmp.eq.s32.totalorder %s14, 1
    %p37 = por %p35, %p36
    %p39 = scmp.ne.s32.totalorder %s22, %s38
    %p40 = scmp.eq.s32.totalorder %s14, 0
    %p41 = por %p39, %p40
    %s43 = sadd.s32 %s42, 1
    %p46 = scmp.eq.s32.totalorder %s8, 1
    %p47 = scmp.ne.s32.totalorder %s42, %s44
    %p48 = scmp.eq.s32.totalorder %s8, 0
    %p49 = por %p47, %p48
    %p50 = scmp.ne.s32.totalorder %s42, %s44
    %p51 = scmp.eq.s32.totalorder %s13, 1
    %p52 = por %p50, %p51
    %p53 = scmp.ne.s32.totalorder %s44, %s45
    %p54 = scmp.eq.s32.totalorder %s13, 0
    %p55 = por %p53, %p54
    %p56 = scmp.ne.s32.totalorder %s44, %s45
    %p57 = scmp.eq.s32.totalorder %s14, 1
    %p58 = por %p56, %p57
    %p60 = scmp.ne.s32.totalorder %s45, %s59
    %p61 = scmp.eq.s32.totalorder %s14, 0
    %p62 = por %p60, %p61
    %s63 = ssub.s32 %s8, %s15
    %p64 = scmp.eq.s32.totalorder %s63, 0
    %s66 = sadd.s32 %s65, 1
    %s67 = scalar_select %p64, %s65, %s66
    %p70 = pneg %p64
    %p71 = scmp.eq.s32.totalorder %s8, 1
    %p72 = por %p70, %p71
    %p73 = scmp.ne.s32.totalorder %s65, %s68
    %p74 = scmp.eq.s32.totalorder %s8, 0
    %p75 = por %p73, %p74
    %p76 = scmp.ne.s32.totalorder %s65, %s68
    %p77 = scmp.eq.s32.totalorder %s13, 1
    %p78 = por %p76, %p77
    %p79 = scmp.ne.s32.totalorder %s68, %s69
    %p80 = scmp.eq.s32.totalorder %s13, 0
    %p81 = por %p79, %p80
    %p82 = scmp.ne.s32.totalorder %s68, %s69
    %p83 = scmp.eq.s32.totalorder %s14, 1
    %p84 = por %p82, %p83
    %p86 = scmp.ne.s32.totalorder %s69, %s85
    %p87 = scmp.eq.s32.totalorder %s14, 0
    %p88 = por %p86, %p87
    %p89 = scmp.le.s32.totalorder 1, %s8
    %p90 = scmp.lt.s32.totalorder %s8, 3
    %p91 = pnand %p89, %p90
    %p92 = pneg %p91
    // Predicated region
    $region9: #{_lambda_.8} parent=5 // pred_check
      _
    $region10: #{_lambda_.8} parent=5 // pred_check_branch
      %94 = sbr.rel (%p91) target = $region12
    $region11: #{_lambda_.8} parent=5 // pred_region
      %s95 = ssub.s32 %s8, 1
      // Predicated region
      $region13: #{_lambda_.8} parent=11 // pred_check
        %p96 = pneg %p55
      $region14: #{_lambda_.8} parent=11 // pred_check_branch
        %98 = sbr.rel (%p96) target = $region16
      $region15: #{_lambda_.8} parent=11 // pred_region
        _
      $region16: #{_lambda_.8} parent=11 // pred_fallthru
        _
    $region12: #{_lambda_.8} parent=5 // pred_fallthru
      _
    %p99 = scmp.lt.s32.totalorder %s8, 2
    // Predicated region
    $region17: #{_lambda_.8} parent=5 // pred_check
      %p100 = pneg %p99
    $region18: #{_lambda_.8} parent=5 // pred_check_branch
      %102 = sbr.rel (%p100) target = $region20
    $region19: #{_lambda_.8} parent=5 // pred_region
      // Predicated region
      $region21: #{_lambda_.8} parent=19 // pred_check
        %p103 = pneg %p28
      $region22: #{_lambda_.8} parent=19 // pred_check_branch
        %105 = sbr.rel (%p103) target = $region24
      $region23: #{_lambda_.8} parent=19 // pred_region
        %p106 = scmp.lt.s32.totalorder %s8, 1
        %s107 = scalar_select %p106, %s8, 1
        %s108 = smul.addr %s107, 16
        %s109 = smul.addr %s108, 4
        %s110 = scalar_lea.vmem %s0, %s109
      $region24: #{_lambda_.8} parent=19 // pred_fallthru
        _
    $region20: #{_lambda_.8} parent=5 // pred_fallthru
      _
    %p111 = scmp.le.s32.totalorder 1, %s8
    %p112 = scmp.lt.s32.totalorder %s8, 3
    %p113 = pnand %p111, %p112
    %p114 = pneg %p113
    // Predicated region
    $region25: #{_lambda_.8} parent=5 // pred_check
      _
    $region26: #{_lambda_.8} parent=5 // pred_check_branch
      %116 = sbr.rel (%p113) target = $region28
    $region27: #{_lambda_.8} parent=5 // pred_region
      %s117 = ssub.s32 %s8, 1
      %p118 = scmp.lt.s32.totalorder %s13, 1
      %s119 = scalar_select %p118, %s13, 1
      %s120 = smul.addr %s119, 16
      %s121 = smul.addr %s120, 4
      %s122 = scalar_lea.vmem %s0, %s121
      %p123 = pneg %p34
      %p124 = pneg %p31
      %p125 = pneg %p55
      %p126 = pneg %p52
      %p127 = pneg %p81
      %p128 = pneg %p78
      %p129 = scmp.lt.s32.totalorder %s13, 1
      %s130 = scalar_select %p129, %s13, 1
      %s131 = smul.addr %s130, 2
      %s132 = smul.addr %s131, 4
      %s133 = scalar_lea.vmem %s2, %s132
      %p134 = scmp.lt.s32.totalorder %s13, 1
      %s135 = scalar_select %p134, %s13, 1
      %s136 = smul.addr %s135, 16
      %s137 = smul.addr %s136, 4
      %s138 = scalar_lea.vmem %s0, %s137
      %p139 = scmp.lt.s32.totalorder %s13, 1
      %s140 = scalar_select %p139, %s13, 1
      %s141 = smul.addr %s140, 2
      %s142 = smul.addr %s141, 4
      %s143 = scalar_lea.vmem %s2, %s142
      %v145 = vld [vmem:[%s1] sm:$0xf]
      %v146 = vld [vmem:[%s1 + $0x4] sm:$0xf]
      %v147 = vld [vmem:[%s138] sm:$0xf]
      %v148 = vld [vmem:[%s138 + $0x4] sm:$0xf]
      %v149 = vld [vmem:[%s138 + $0x8] sm:$0xf]
      %v150 = vld [vmem:[%s138 + $0xc] sm:$0xf]
      %v151 = vld [vmem:[%s138 + $0x10] sm:$0xf]
      %v152 = vld [vmem:[%s138 + $0x14] sm:$0xf]
      %v153 = vld [vmem:[%s138 + $0x18] sm:$0xf]
      %v154 = vld [vmem:[%s138 + $0x1c] sm:$0xf]
      %v155 = vld [vmem:[%s138 + $0x20] sm:$0xf]
      %v156 = vld [vmem:[%s138 + $0x24] sm:$0xf]
      %v157 = vld [vmem:[%s138 + $0x28] sm:$0xf]
      %v158 = vld [vmem:[%s138 + $0x2c] sm:$0xf]
      %v159 = vld [vmem:[%s138 + $0x30] sm:$0xf]
      %v160 = vld [vmem:[%s138 + $0x34] sm:$0xf]
      %v161 = vld [vmem:[%s138 + $0x38] sm:$0xf]
      %v162 = vld [vmem:[%s138 + $0x3c] sm:$0xf]
      %v165 = vunpack.c.l.b16 %v145
      %v166 = vunpack.c.l.b16 %v146
      %v167 = vpack.c.b16 %v166, %v165
      %v185 = vunpack.c.l.b16 %v147
      %v186 = vunpack.c.l.b16 %v148
      %v187 = vunpack.c.l.b16 %v149
      %v188 = vunpack.c.l.b16 %v150
      %v189 = vunpack.c.l.b16 %v151
      %v190 = vunpack.c.l.b16 %v152
      %v191 = vunpack.c.l.b16 %v153
      %v192 = vunpack.c.l.b16 %v154
      %v193 = vunpack.c.l.b16 %v155
      %v194 = vunpack.c.l.b16 %v156
      %v195 = vunpack.c.l.b16 %v157
      %v196 = vunpack.c.l.b16 %v158
      %v197 = vunpack.c.l.b16 %v159
      %v198 = vunpack.c.l.b16 %v160
      %v199 = vunpack.c.l.b16 %v161
      %v200 = vunpack.c.l.b16 %v162
      %v201 = vpack.c.b16 %v186, %v185
      %v202 = vpack.c.b16 %v188, %v187
      %v203 = vpack.c.b16 %v190, %v189
      %v204 = vpack.c.b16 %v192, %v191
      %v205 = vpack.c.b16 %v194, %v193
      %v206 = vpack.c.b16 %v196, %v195
      %v207 = vpack.c.b16 %v198, %v197
      %v208 = vpack.c.b16 %v200, %v199
      %217 = vmatprep.subr.bf16.mxu0 0
      %218 = vmatpush1.bf16.msra.mxu0 %v208
      %219 = vmatprep.subr.bf16.mxu0 0
      %220 = vmatpush1.bf16.msra.mxu0 %v207
      %221 = vmatprep.subr.bf16.mxu0 0
      %222 = vmatpush1.bf16.msra.mxu0 %v206
      %223 = vmatprep.subr.bf16.mxu0 0
      %224 = vmatpush1.bf16.msra.mxu0 %v205
      %225 = vmatprep.subr.bf16.mxu0 0
      %226 = vmatpush1.bf16.msra.mxu0 %v204
      %227 = vmatprep.subr.bf16.mxu0 0
      %228 = vmatpush1.bf16.msra.mxu0 %v203
      %229 = vmatprep.subr.bf16.mxu0 0
      %230 = vmatpush1.bf16.msra.mxu0 %v202
      %231 = vmatprep.subr.bf16.mxu0 0
      %232 = vmatpush1.bf16.msra.mxu0 %v201
      %233 = vmatprep.subr.bf16.mxu0 0
      %234 = vmatpush2.bf16.msra.mxu0 0
      %235 = vmatprep.subr.bf16.mxu0 0
      %236 = vmatpush2.bf16.msra.mxu0 0
      %237 = vmatprep.subr.bf16.mxu0 0
      %238 = vmatpush2.bf16.msra.mxu0 0
      %239 = vmatprep.subr.bf16.mxu0 0
      %240 = vmatpush2.bf16.msra.mxu0 0
      %241 = vmatprep.subr.bf16.mxu0 0
      %242 = vmatpush2.bf16.msra.mxu0 0
      %243 = vmatprep.subr.bf16.mxu0 0
      %244 = vmatpush2.bf16.msra.mxu0 0
      %245 = vmatprep.subr.bf16.mxu0 0
      %246 = vmatpush2.bf16.msra.mxu0 0
      %247 = vmatprep.subr.bf16.mxu0 0
      %248 = vmatpush2.bf16.msra.mxu0 0
      %249 = vmatprep.mubr.bf16.mxu0 0
      %250 = vmatmul.mubr.bf16.gmra.mxu0 %v167
      %v251 = vpop.f32.mrf.mxu0
      %v252 = vadd.f32 0.0, %v251
      %v253 = vpop.f32.mrf.mxu0
      %v254 = vpop.f32.mrf.mxu0
      %v255 = vadd.f32 0.0, %v254
      %v256 = vpop.f32.mrf.mxu0
      %257 = vdwg.mxu0
      %vm258 = vcmask 523264
      %v259 = vsel %vm258, %v252, 0.0
      %260 = vadd.xlane.f32.xlu0 %v259
      %v261 = vpop.xlane.xlu0 %260
      %v262 = vsel %vm258, %v255, 0.0
      %263 = vadd.xlane.f32.xlu0 %v262
      %v264 = vpop.xlane.xlu0 %263
      %v265 = vmul.f32 %v261, 0.015625
      %v266 = vmul.f32 %v264, 0.015625
      %v267 = vsub.f32 %v252, %v265
      %v268 = vsub.f32 %v255, %v266
      %v269 = vmul.f32 %v267, %v267
      %v270 = vmul.f32 %v268, %v268
      %v271 = vsel %vm258, %v269, 0.0
      %272 = vadd.xlane.f32.xlu0 %v271
      %v273 = vpop.xlane.xlu0 %272
      %v274 = vsel %vm258, %v270, 0.0
      %275 = vadd.xlane.f32.xlu0 %v274
      %v276 = vpop.xlane.xlu0 %275
      %v277 = vmul.f32 %v273, 0.015625
      %v278 = vmul.f32 %v276, 0.015625
      %v279 = vadd.f32 %v277, 1e-05
      %v280 = vadd.f32 %v278, 1e-05
      %v281 = vrsqrt.pop %v279
      %v282 = vrsqrt.pop %v280
      %v283 = vmul.f32 %v267, %v281
      %v284 = vmul.f32 %v268, %v282
      %v285 = vmax.f32 %v283, 0.0
      %v286 = vmax.f32 %v284, 0.0
      %v287 = vpack.c.bf16 %v286, %v285
      %v289 = vunpack.c.l.b16 %v287
      %v290 = vunpack.c.h.b16 %v287
      %v291 = vpack.c.b16 %v289, %v289
      %v292 = vpack.c.b16 %v290, %v290
      %vm295 = vcmask 519168
      %296 = vst.msk [vmem:[%s143] sm:$0xf] %vm295, %v291
      %297 = vst.msk [vmem:[%s143 + $0x4] sm:$0xf] %vm295, %v292
      %p298 = scmp.lt.s32.totalorder %s13, 1
      %s299 = scalar_select %p298, %s13, 1
      %s300 = smul.addr %s299, 2
      %s301 = smul.addr %s300, 4
      %s302 = scalar_lea.vmem %s2, %s301
      // Predicated region
      $region29: #{_lambda_.8} parent=27 // pred_check
        %p303 = pneg %p78
      $region30: #{_lambda_.8} parent=27 // pred_check_branch
        %305 = sbr.rel (%p303) target = $region32
      $region31: #{_lambda_.8} parent=27 // pred_region
        _
      $region32: #{_lambda_.8} parent=27 // pred_fallthru
        _
    $region28: #{_lambda_.8} parent=5 // pred_fallthru
      _
    %p306 = scmp.le.s32.totalorder 2, %s8
    // Predicated region
    $region33: #{_lambda_.8} parent=5 // pred_check
      %p307 = pneg %p306
    $region34: #{_lambda_.8} parent=5 // pred_check_branch
      %309 = sbr.rel (%p307) target = $region36
    $region35: #{_lambda_.8} parent=5 // pred_region
      %s310 = ssub.s32 %s8, 2
      // Predicated region
      $region37: #{_lambda_.8} parent=35 // pred_check
        %p311 = pneg %p84
      $region38: #{_lambda_.8} parent=35 // pred_check_branch
        %313 = sbr.rel (%p311) target = $region40
      $region39: #{_lambda_.8} parent=35 // pred_region
        %p314 = scmp.lt.s32.totalorder %s14, 1
        %s315 = scalar_select %p314, %s14, 1
        %s316 = smul.addr %s315, 2
        %s317 = smul.addr %s316, 4
        %s318 = scalar_lea.vmem %s2, %s317
      $region40: #{_lambda_.8} parent=35 // pred_fallthru
        _
    $region36: #{_lambda_.8} parent=5 // pred_fallthru
      _
  $region6: #{_lambda_.8} parent=0 // loop_footer
    %s12 = sadd.s32 1, %s8
  $region7: #{_lambda_.8} parent=0 // loop_footer_branch
    %7 = sbr.rel target = $region3
  $region8: #{_lambda_.8} parent=0 // loop_exit
    _

// kernel: _lambda_.9
$region0: #{_lambda_.9}
  #allocation0 [shape = 'u32[]', space=smem, size = 0x4, offset = 0x4, fixed_abs, tag = 'smem constant byte address 0x4 - core index']
  #allocation1 [shape = 'u32[144,128]{1,0:T(1,128)}', space=vmem, size = 0x12000, scoped, tag = 'internal scratch']
  %s0 = inlined_call_operand.vmem [shape: bf16[2,256,16], index: 0, kind: input, shape index: {}]
  %s1 = inlined_call_operand.vmem [shape: bf16[32,256], index: 1, kind: input, shape index: {}]
  %s2 = inlined_call_operand.vmem [shape: bf16[2,32,16], index: 2, kind: output, shape index: {}]
  %s3 = sld [smem:[#allocation0]]
  $region41: #{_lambda_.9} parent=0
    _
  %s5 = ssub.s32 1, %s3
  %s6 = scalar_select 0, %s5, %s3
  loop: start=0, step=1, limit=4
  $region2: #{_lambda_.9} parent=0 // loop_pre_header
    _
  $region3: #{_lambda_.9} parent=0 // loop_header
    %s8 = sphi 0, %s12
    %p9 = scmp.ge.s32.totalorder %s8, 4
    %s18 = sphi 0, %s20
    %s21 = sphi 0, %s18
    %s22 = sphi 0, %s21
    %s38 = sphi 0, %s22
    %s42 = sphi 0, %s42
    %s44 = sphi 0, %s42
    %s45 = sphi 0, %s44
    %s59 = sphi 0, %s45
    %s65 = sphi 0, %s67
    %s68 = sphi 0, %s65
    %s69 = sphi 0, %s68
    %s85 = sphi 0, %s69
  $region4: #{_lambda_.9} parent=0 // loop_header_branch
    %11 = sbr.rel (%p9) target = $region8
  $region5: #{_lambda_.9} parent=0 // loop_body
    %s13 = ssub.s32 %s8, 1
    %s14 = ssub.s32 %s8, 2
    %s15 = sadd.s32 %s8, 1
    %s16 = ssub.s32 %s8, %s15
    %p17 = scmp.eq.s32.totalorder %s16, 0
    %s19 = sadd.s32 %s18, 1
    %s20 = scalar_select %p17, %s18, %s19
    %p23 = pneg %p17
    %p24 = scmp.eq.s32.totalorder %s8, 1
    %p25 = por %p23, %p24
    %p26 = scmp.ne.s32.totalorder %s18, %s21
    %p27 = scmp.eq.s32.totalorder %s8, 0
    %p28 = por %p26, %p27
    %p29 = scmp.ne.s32.totalorder %s18, %s21
    %p30 = scmp.eq.s32.totalorder %s13, 1
    %p31 = por %p29, %p30
    %p32 = scmp.ne.s32.totalorder %s21, %s22
    %p33 = scmp.eq.s32.totalorder %s13, 0
    %p34 = por %p32, %p33
    %p35 = scmp.ne.s32.totalorder %s21, %s22
    %p36 = scmp.eq.s32.totalorder %s14, 1
    %p37 = por %p35, %p36
    %p39 = scmp.ne.s32.totalorder %s22, %s38
    %p40 = scmp.eq.s32.totalorder %s14, 0
    %p41 = por %p39, %p40
    %s43 = sadd.s32 %s42, 1
    %p46 = scmp.eq.s32.totalorder %s8, 1
    %p47 = scmp.ne.s32.totalorder %s42, %s44
    %p48 = scmp.eq.s32.totalorder %s8, 0
    %p49 = por %p47, %p48
    %p50 = scmp.ne.s32.totalorder %s42, %s44
    %p51 = scmp.eq.s32.totalorder %s13, 1
    %p52 = por %p50, %p51
    %p53 = scmp.ne.s32.totalorder %s44, %s45
    %p54 = scmp.eq.s32.totalorder %s13, 0
    %p55 = por %p53, %p54
    %p56 = scmp.ne.s32.totalorder %s44, %s45
    %p57 = scmp.eq.s32.totalorder %s14, 1
    %p58 = por %p56, %p57
    %p60 = scmp.ne.s32.totalorder %s45, %s59
    %p61 = scmp.eq.s32.totalorder %s14, 0
    %p62 = por %p60, %p61
    %s63 = ssub.s32 %s8, %s15
    %p64 = scmp.eq.s32.totalorder %s63, 0
    %s66 = sadd.s32 %s65, 1
    %s67 = scalar_select %p64, %s65, %s66
    %p70 = pneg %p64
    %p71 = scmp.eq.s32.totalorder %s8, 1
    %p72 = por %p70, %p71
    %p73 = scmp.ne.s32.totalorder %s65, %s68
    %p74 = scmp.eq.s32.totalorder %s8, 0
    %p75 = por %p73, %p74
    %p76 = scmp.ne.s32.totalorder %s65, %s68
    %p77 = scmp.eq.s32.totalorder %s13, 1
    %p78 = por %p76, %p77
    %p79 = scmp.ne.s32.totalorder %s68, %s69
    %p80 = scmp.eq.s32.totalorder %s13, 0
    %p81 = por %p79, %p80
    %p82 = scmp.ne.s32.totalorder %s68, %s69
    %p83 = scmp.eq.s32.totalorder %s14, 1
    %p84 = por %p82, %p83
    %p86 = scmp.ne.s32.totalorder %s69, %s85
    %p87 = scmp.eq.s32.totalorder %s14, 0
    %p88 = por %p86, %p87
    %p89 = scmp.le.s32.totalorder 1, %s8
    %p90 = scmp.lt.s32.totalorder %s8, 3
    %p91 = pnand %p89, %p90
    %p92 = pneg %p91
    // Predicated region
    $region9: #{_lambda_.9} parent=5 // pred_check
      _
    $region10: #{_lambda_.9} parent=5 // pred_check_branch
      %94 = sbr.rel (%p91) target = $region12
    $region11: #{_lambda_.9} parent=5 // pred_region
      %s95 = ssub.s32 %s8, 1
      // Predicated region
      $region13: #{_lambda_.9} parent=11 // pred_check
        %p96 = pneg %p55
      $region14: #{_lambda_.9} parent=11 // pred_check_branch
        %98 = sbr.rel (%p96) target = $region16
      $region15: #{_lambda_.9} parent=11 // pred_region
        _
      $region16: #{_lambda_.9} parent=11 // pred_fallthru
        _
    $region12: #{_lambda_.9} parent=5 // pred_fallthru
      _
    %p99 = scmp.lt.s32.totalorder %s8, 2
    // Predicated region
    $region17: #{_lambda_.9} parent=5 // pred_check
      %p100 = pneg %p99
    $region18: #{_lambda_.9} parent=5 // pred_check_branch
      %102 = sbr.rel (%p100) target = $region20
    $region19: #{_lambda_.9} parent=5 // pred_region
      // Predicated region
      $region21: #{_lambda_.9} parent=19 // pred_check
        %p103 = pneg %p28
      $region22: #{_lambda_.9} parent=19 // pred_check_branch
        %105 = sbr.rel (%p103) target = $region24
      $region23: #{_lambda_.9} parent=19 // pred_region
        %p106 = scmp.lt.s32.totalorder %s8, 1
        %s107 = scalar_select %p106, %s8, 1
        %s108 = smul.addr %s107, 32
        %s109 = smul.addr %s108, 4
        %s110 = scalar_lea.vmem %s0, %s109
      $region24: #{_lambda_.9} parent=19 // pred_fallthru
        _
    $region20: #{_lambda_.9} parent=5 // pred_fallthru
      _
    %p111 = scmp.le.s32.totalorder 1, %s8
    %p112 = scmp.lt.s32.totalorder %s8, 3
    %p113 = pnand %p111, %p112
    %p114 = pneg %p113
    // Predicated region
    $region25: #{_lambda_.9} parent=5 // pred_check
      _
    $region26: #{_lambda_.9} parent=5 // pred_check_branch
      %116 = sbr.rel (%p113) target = $region28
    $region27: #{_lambda_.9} parent=5 // pred_region
      %s117 = ssub.s32 %s8, 1
      %p118 = scmp.lt.s32.totalorder %s13, 1
      %s119 = scalar_select %p118, %s13, 1
      %s120 = smul.addr %s119, 32
      %s121 = smul.addr %s120, 4
      %s122 = scalar_lea.vmem %s0, %s121
      %p123 = pneg %p34
      %p124 = pneg %p31
      %p125 = pneg %p55
      %p126 = pneg %p52
      %p127 = pneg %p81
      %p128 = pneg %p78
      %p129 = scmp.lt.s32.totalorder %s13, 1
      %s130 = scalar_select %p129, %s13, 1
      %s131 = smul.addr %s130, 4
      %s132 = smul.addr %s131, 4
      %s133 = scalar_lea.vmem %s2, %s132
      %p134 = scmp.lt.s32.totalorder %s13, 1
      %s135 = scalar_select %p134, %s13, 1
      %s136 = smul.addr %s135, 32
      %s137 = smul.addr %s136, 4
      %s138 = scalar_lea.vmem %s0, %s137
      %p139 = scmp.lt.s32.totalorder %s13, 1
      %s140 = scalar_select %p139, %s13, 1
      %s141 = smul.addr %s140, 4
      %s142 = smul.addr %s141, 4
      %s143 = scalar_lea.vmem %s2, %s142
      %v145 = vld [vmem:[%s1] sm:$0xff]
      %v146 = vld [vmem:[%s1 + $0x8] sm:$0xff]
      %v147 = vld [vmem:[%s1 + $0x10] sm:$0xff]
      %v148 = vld [vmem:[%s1 + $0x18] sm:$0xff]
      %v149 = vld [vmem:[%s138] sm:$0xf]
      %v150 = vld [vmem:[%s138 + $0x4] sm:$0xf]
      %v151 = vld [vmem:[%s138 + $0x8] sm:$0xf]
      %v152 = vld [vmem:[%s138 + $0xc] sm:$0xf]
      %v153 = vld [vmem:[%s138 + $0x10] sm:$0xf]
      %v154 = vld [vmem:[%s138 + $0x14] sm:$0xf]
      %v155 = vld [vmem:[%s138 + $0x18] sm:$0xf]
      %v156 = vld [vmem:[%s138 + $0x1c] sm:$0xf]
      %v157 = vld [vmem:[%s138 + $0x20] sm:$0xf]
      %v158 = vld [vmem:[%s138 + $0x24] sm:$0xf]
      %v159 = vld [vmem:[%s138 + $0x28] sm:$0xf]
      %v160 = vld [vmem:[%s138 + $0x2c] sm:$0xf]
      %v161 = vld [vmem:[%s138 + $0x30] sm:$0xf]
      %v162 = vld [vmem:[%s138 + $0x34] sm:$0xf]
      %v163 = vld [vmem:[%s138 + $0x38] sm:$0xf]
      %v164 = vld [vmem:[%s138 + $0x3c] sm:$0xf]
      %v165 = vld [vmem:[%s138 + $0x40] sm:$0xf]
      %v166 = vld [vmem:[%s138 + $0x44] sm:$0xf]
      %v167 = vld [vmem:[%s138 + $0x48] sm:$0xf]
      %v168 = vld [vmem:[%s138 + $0x4c] sm:$0xf]
      %v169 = vld [vmem:[%s138 + $0x50] sm:$0xf]
      %v170 = vld [vmem:[%s138 + $0x54] sm:$0xf]
      %v171 = vld [vmem:[%s138 + $0x58] sm:$0xf]
      %v172 = vld [vmem:[%s138 + $0x5c] sm:$0xf]
      %v173 = vld [vmem:[%s138 + $0x60] sm:$0xf]
      %v174 = vld [vmem:[%s138 + $0x64] sm:$0xf]
      %v175 = vld [vmem:[%s138 + $0x68] sm:$0xf]
      %v176 = vld [vmem:[%s138 + $0x6c] sm:$0xf]
      %v177 = vld [vmem:[%s138 + $0x70] sm:$0xf]
      %v178 = vld [vmem:[%s138 + $0x74] sm:$0xf]
      %v179 = vld [vmem:[%s138 + $0x78] sm:$0xf]
      %v180 = vld [vmem:[%s138 + $0x7c] sm:$0xf]
      %v185 = vunpack.c.l.b16 %v145
      %v186 = vunpack.c.h.b16 %v145
      %v187 = vunpack.c.l.b16 %v146
      %v188 = vunpack.c.h.b16 %v146
      %v189 = vunpack.c.l.b16 %v147
      %v190 = vunpack.c.h.b16 %v147
      %v191 = vunpack.c.l.b16 %v148
      %v192 = vunpack.c.h.b16 %v148
      %v193 = vpack.c.b16 %v187, %v185
      %v194 = vpack.c.b16 %v188, %v186
      %v195 = vpack.c.b16 %v191, %v189
      %v196 = vpack.c.b16 %v192, %v190
      %v233 = vunpack.c.l.b16 %v149
      %v234 = vunpack.c.l.b16 %v150
      %v235 = vunpack.c.l.b16 %v151
      %v236 = vunpack.c.l.b16 %v152
      %v237 = vunpack.c.l.b16 %v153
      %v238 = vunpack.c.l.b16 %v154
      %v239 = vunpack.c.l.b16 %v155
      %v240 = vunpack.c.l.b16 %v156
      %v241 = vunpack.c.l.b16 %v157
      %v242 = vunpack.c.l.b16 %v158
      %v243 = vunpack.c.l.b16 %v159
      %v244 = vunpack.c.l.b16 %v160
      %v245 = vunpack.c.l.b16 %v161
      %v246 = vunpack.c.l.b16 %v162
      %v247 = vunpack.c.l.b16 %v163
      %v248 = vunpack.c.l.b16 %v164
      %v249 = vunpack.c.l.b16 %v165
      %v250 = vunpack.c.l.b16 %v166
      %v251 = vunpack.c.l.b16 %v167
      %v252 = vunpack.c.l.b16 %v168
      %v253 = vunpack.c.l.b16 %v169
      %v254 = vunpack.c.l.b16 %v170
      %v255 = vunpack.c.l.b16 %v171
      %v256 = vunpack.c.l.b16 %v172
      %v257 = vunpack.c.l.b16 %v173
      %v258 = vunpack.c.l.b16 %v174
      %v259 = vunpack.c.l.b16 %v175
      %v260 = vunpack.c.l.b16 %v176
      %v261 = vunpack.c.l.b16 %v177
      %v262 = vunpack.c.l.b16 %v178
      %v263 = vunpack.c.l.b16 %v179
      %v264 = vunpack.c.l.b16 %v180
      %v265 = vpack.c.b16 %v234, %v233
      %v266 = vpack.c.b16 %v236, %v235
      %v267 = vpack.c.b16 %v238, %v237
      %v268 = vpack.c.b16 %v240, %v239
      %v269 = vpack.c.b16 %v242, %v241
      %v270 = vpack.c.b16 %v244, %v243
      %v271 = vpack.c.b16 %v246, %v245
      %v272 = vpack.c.b16 %v248, %v247
      %v273 = vpack.c.b16 %v250, %v249
      %v274 = vpack.c.b16 %v252, %v251
      %v275 = vpack.c.b16 %v254, %v253
      %v276 = vpack.c.b16 %v256, %v255
      %v277 = vpack.c.b16 %v258, %v257
      %v278 = vpack.c.b16 %v260, %v259
      %v279 = vpack.c.b16 %v262, %v261
      %v280 = vpack.c.b16 %v264, %v263
      %297 = vmatprep.subr.bf16.mxu0 0
      %298 = vmatpush1.bf16.msra.mxu0 %v272
      %299 = vmatprep.subr.bf16.mxu0 0
      %300 = vmatpush1.bf16.msra.mxu0 %v271
      %301 = vmatprep.subr.bf16.mxu0 0
      %302 = vmatpush1.bf16.msra.mxu0 %v270
      %303 = vmatprep.subr.bf16.mxu0 0
      %304 = vmatpush1.bf16.msra.mxu0 %v269
      %305 = vmatprep.subr.bf16.mxu0 0
      %306 = vmatpush1.bf16.msra.mxu0 %v268
      %307 = vmatprep.subr.bf16.mxu0 0
      %308 = vmatpush1.bf16.msra.mxu0 %v267
      %309 = vmatprep.subr.bf16.mxu0 0
      %310 = vmatpush1.bf16.msra.mxu0 %v266
      %311 = vmatprep.subr.bf16.mxu0 0
      %312 = vmatpush1.bf16.msra.mxu0 %v265
      %313 = vmatprep.subr.bf16.mxu0 0
      %314 = vmatpush2.bf16.msra.mxu0 %v280
      %315 = vmatprep.subr.bf16.mxu0 0
      %316 = vmatpush2.bf16.msra.mxu0 %v279
      %317 = vmatprep.subr.bf16.mxu0 0
      %318 = vmatpush2.bf16.msra.mxu0 %v278
      %319 = vmatprep.subr.bf16.mxu0 0
      %320 = vmatpush2.bf16.msra.mxu0 %v277
      %321 = vmatprep.subr.bf16.mxu0 0
      %322 = vmatpush2.bf16.msra.mxu0 %v276
      %323 = vmatprep.subr.bf16.mxu0 0
      %324 = vmatpush2.bf16.msra.mxu0 %v275
      %325 = vmatprep.subr.bf16.mxu0 0
      %326 = vmatpush2.bf16.msra.mxu0 %v274
      %327 = vmatprep.subr.bf16.mxu0 0
      %328 = vmatpush2.bf16.msra.mxu0 %v273
      %329 = vmatprep.mubr.bf16.mxu0 %v194
      %330 = vmatmul.mubr.bf16.gmra.mxu0 %v193
      %v331 = vpop.f32.mrf.mxu0
      %v332 = vadd.f32 0.0, %v331
      %v333 = vpop.f32.mrf.mxu0
      %v334 = vpop.f32.mrf.mxu0
      %v335 = vadd.f32 0.0, %v334
      %v336 = vpop.f32.mrf.mxu0
      %337 = vmatprep.mubr.bf16.mxu0 %v196
      %338 = vmatmul.mubr.bf16.gmra.mxu0 %v195
      %v339 = vpop.f32.mrf.mxu0
      %v340 = vadd.f32 0.0, %v339
      %v341 = vpop.f32.mrf.mxu0
      %v342 = vpop.f32.mrf.mxu0
      %v343 = vadd.f32 0.0, %v342
      %v344 = vpop.f32.mrf.mxu0
      %345 = vdwg.mxu0
      %vm346 = vcmask 130048
      %v347 = vsel %vm346, %v332, 0.0
      %348 = vadd.xlane.f32.xlu0 %v347
      %v349 = vpop.xlane.xlu0 %348
      %v350 = vsel %vm346, %v335, 0.0
      %351 = vadd.xlane.f32.xlu0 %v350
      %v352 = vpop.xlane.xlu0 %351
      %v353 = vsel %vm346, %v340, 0.0
      %354 = vadd.xlane.f32.xlu0 %v353
      %v355 = vpop.xlane.xlu0 %354
      %v356 = vsel %vm346, %v343, 0.0
      %357 = vadd.xlane.f32.xlu0 %v356
      %v358 = vpop.xlane.xlu0 %357
      %v359 = vmul.f32 %v349, 0.0625
      %v360 = vmul.f32 %v352, 0.0625
      %v361 = vmul.f32 %v355, 0.0625
      %v362 = vmul.f32 %v358, 0.0625
      %v363 = vsub.f32 %v332, %v359
      %v364 = vsub.f32 %v335, %v360
      %v365 = vsub.f32 %v340, %v361
      %v366 = vsub.f32 %v343, %v362
      %v367 = vmul.f32 %v363, %v363
      %v368 = vmul.f32 %v364, %v364
      %v369 = vmul.f32 %v365, %v365
      %v370 = vmul.f32 %v366, %v366
      %v371 = vsel %vm346, %v367, 0.0
      %372 = vadd.xlane.f32.xlu0 %v371
      %v373 = vpop.xlane.xlu0 %372
      %v374 = vsel %vm346, %v368, 0.0
      %375 = vadd.xlane.f32.xlu0 %v374
      %v376 = vpop.xlane.xlu0 %375
      %v377 = vsel %vm346, %v369, 0.0
      %378 = vadd.xlane.f32.xlu0 %v377
      %v379 = vpop.xlane.xlu0 %378
      %v380 = vsel %vm346, %v370, 0.0
      %381 = vadd.xlane.f32.xlu0 %v380
      %v382 = vpop.xlane.xlu0 %381
      %v383 = vmul.f32 %v373, 0.0625
      %v384 = vmul.f32 %v376, 0.0625
      %v385 = vmul.f32 %v379, 0.0625
      %v386 = vmul.f32 %v382, 0.0625
      %v387 = vadd.f32 %v383, 1e-05
      %v388 = vadd.f32 %v384, 1e-05
      %v389 = vadd.f32 %v385, 1e-05
      %v390 = vadd.f32 %v386, 1e-05
      %v391 = vrsqrt.pop %v387
      %v392 = vrsqrt.pop %v388
      %v393 = vrsqrt.pop %v389
      %v394 = vrsqrt.pop %v390
      %v395 = vmul.f32 %v363, %v391
      %v396 = vmul.f32 %v364, %v392
      %v397 = vmul.f32 %v365, %v393
      %v398 = vmul.f32 %v366, %v394
      %v399 = vmax.f32 %v395, 0.0
      %v400 = vmax.f32 %v396, 0.0
      %v401 = vmax.f32 %v397, 0.0
      %v402 = vmax.f32 %v398, 0.0
      %v403 = vpack.c.bf16 %v400, %v399
      %v404 = vpack.c.bf16 %v402, %v401
      %v407 = vunpack.c.l.b16 %v403
      %v408 = vunpack.c.h.b16 %v403
      %v409 = vunpack.c.l.b16 %v404
      %v410 = vunpack.c.h.b16 %v404
      %v411 = vpack.c.b16 %v407, %v407
      %v412 = vpack.c.b16 %v408, %v408
      %v413 = vpack.c.b16 %v409, %v409
      %v414 = vpack.c.b16 %v410, %v410
      %vm419 = vcmask 125952
      %420 = vst.msk [vmem:[%s143] sm:$0xf] %vm419, %v411
      %421 = vst.msk [vmem:[%s143 + $0x4] sm:$0xf] %vm419, %v412
      %422 = vst.msk [vmem:[%s143 + $0x8] sm:$0xf] %vm419, %v413
      %423 = vst.msk [vmem:[%s143 + $0xc] sm:$0xf] %vm419, %v414
      %p424 = scmp.lt.s32.totalorder %s13, 1
      %s425 = scalar_select %p424, %s13, 1
      %s426 = smul.addr %s425, 4
      %s427 = smul.addr %s426, 4
      %s428 = scalar_lea.vmem %s2, %s427
      // Predicated region
      $region29: #{_lambda_.9} parent=27 // pred_check
        %p429 = pneg %p78
      $region30: #{_lambda_.9} parent=27 // pred_check_branch
        %431 = sbr.rel (%p429) target = $region32
      $region31: #{_lambda_.9} parent=27 // pred_region
        _
      $region32: #{_lambda_.9} parent=27 // pred_fallthru
        _
    $region28: #{_lambda_.9} parent=5 // pred_fallthru
      _
    %p432 = scmp.le.s32.totalorder 2, %s8
    // Predicated region
    $region33: #{_lambda_.9} parent=5 // pred_check
      %p433 = pneg %p432
    $region34: #{_lambda_.9} parent=5 // pred_check_branch
      %435 = sbr.rel (%p433) target = $region36
    $region35: #{_lambda_.9} parent=5 // pred_region
      %s436 = ssub.s32 %s8, 2
      // Predicated region
      $region37: #{_lambda_.9} parent=35 // pred_check
        %p437 = pneg %p84
      $region38: #{_lambda_.9} parent=35 // pred_check_branch
        %439 = sbr.rel (%p437) target = $region40
      $region39: #{_lambda_.9} parent=35 // pred_region
        %p440 = scmp.lt.s32.totalorder %s14, 1
        %s441 = scalar_select %p440, %s14, 1
        %s442 = smul.addr %s441, 4
        %s443 = smul.addr %s442, 4
        %s444 = scalar_lea.vmem %s2, %s443
      $region40: #{_lambda_.9} parent=35 // pred_fallthru
        _
    $region36: #{_lambda_.9} parent=5 // pred_fallthru
      _
  $region6: #{_lambda_.9} parent=0 // loop_footer
    %s12 = sadd.s32 1, %s8
  $region7: #{_lambda_.9} parent=0 // loop_footer_branch
    %7 = sbr.rel target = $region3
  $region8: #{_lambda_.9} parent=0 // loop_exit
    _

// kernel: _lambda_.10
$region0: #{_lambda_.10}
  #allocation0 [shape = 'u32[]', space=smem, size = 0x4, offset = 0x4, fixed_abs, tag = 'smem constant byte address 0x4 - core index']
  #allocation1 [shape = 'u32[144,128]{1,0:T(1,128)}', space=vmem, size = 0x12000, scoped, tag = 'internal scratch']
  #allocation2 [shape = 'bf16[32,42]{1,0:T(8,128)(2,1)}', space=vmem, size = 0x2000, scoped, tag = 'scratch operand']
  %s0 = inlined_call_operand.vmem [shape: bf16[2,32,42], index: 0, kind: input, shape index: {}]
  %s1 = inlined_call_operand.vmem [shape: bf16[9,32,32], index: 1, kind: input, shape index: {}]
  %s2 = inlined_call_operand.vmem [shape: bf16[9,32,32], index: 2, kind: input, shape index: {}]
  %s3 = inlined_call_operand.vmem [shape: f32[32,1], index: 3, kind: input, shape index: {}]
  %s4 = inlined_call_operand.vmem [shape: f32[1,24], index: 4, kind: input, shape index: {}]
  %s5 = inlined_call_operand.vmem [shape: bf16[2,32,42], index: 5, kind: output, shape index: {}]
  %s6 = sld [smem:[#allocation0]]
  $region53: #{_lambda_.10} parent=0
    _
  %s8 = ssub.s32 1, %s6
  %s9 = scalar_select 0, %s8, %s6
  loop: start=0, step=1, limit=4
  $region2: #{_lambda_.10} parent=0 // loop_pre_header
    _
  $region3: #{_lambda_.10} parent=0 // loop_header
    %s11 = sphi 0, %s15
    %p12 = scmp.ge.s32.totalorder %s11, 4
    %s21 = sphi 0, %s23
    %s24 = sphi 0, %s21
    %s25 = sphi 0, %s24
    %s41 = sphi 0, %s25
    %s45 = sphi 0, %s45
    %s47 = sphi 0, %s45
    %s48 = sphi 0, %s47
    %s62 = sphi 0, %s48
    %s66 = sphi 0, %s66
    %s68 = sphi 0, %s66
    %s69 = sphi 0, %s68
    %s83 = sphi 0, %s69
    %s87 = sphi 0, %s87
    %s89 = sphi 0, %s87
    %s90 = sphi 0, %s89
    %s104 = sphi 0, %s90
    %s108 = sphi 0, %s108
    %s110 = sphi 0, %s108
    %s111 = sphi 0, %s110
    %s125 = sphi 0, %s111
    %s131 = sphi 0, %s133
    %s134 = sphi 0, %s131
    %s135 = sphi 0, %s134
    %s151 = sphi 0, %s135
  $region4: #{_lambda_.10} parent=0 // loop_header_branch
    %14 = sbr.rel (%p12) target = $region8
  $region5: #{_lambda_.10} parent=0 // loop_body
    %s16 = ssub.s32 %s11, 1
    %s17 = ssub.s32 %s11, 2
    %s18 = sadd.s32 %s11, 1
    %s19 = ssub.s32 %s11, %s18
    %p20 = scmp.eq.s32.totalorder %s19, 0
    %s22 = sadd.s32 %s21, 1
    %s23 = scalar_select %p20, %s21, %s22
    %p26 = pneg %p20
    %p27 = scmp.eq.s32.totalorder %s11, 1
    %p28 = por %p26, %p27
    %p29 = scmp.ne.s32.totalorder %s21, %s24
    %p30 = scmp.eq.s32.totalorder %s11, 0
    %p31 = por %p29, %p30
    %p32 = scmp.ne.s32.totalorder %s21, %s24
    %p33 = scmp.eq.s32.totalorder %s16, 1
    %p34 = por %p32, %p33
    %p35 = scmp.ne.s32.totalorder %s24, %s25
    %p36 = scmp.eq.s32.totalorder %s16, 0
    %p37 = por %p35, %p36
    %p38 = scmp.ne.s32.totalorder %s24, %s25
    %p39 = scmp.eq.s32.totalorder %s17, 1
    %p40 = por %p38, %p39
    %p42 = scmp.ne.s32.totalorder %s25, %s41
    %p43 = scmp.eq.s32.totalorder %s17, 0
    %p44 = por %p42, %p43
    %s46 = sadd.s32 %s45, 1
    %p49 = scmp.eq.s32.totalorder %s11, 1
    %p50 = scmp.ne.s32.totalorder %s45, %s47
    %p51 = scmp.eq.s32.totalorder %s11, 0
    %p52 = por %p50, %p51
    %p53 = scmp.ne.s32.totalorder %s45, %s47
    %p54 = scmp.eq.s32.totalorder %s16, 1
    %p55 = por %p53, %p54
    %p56 = scmp.ne.s32.totalorder %s47, %s48
    %p57 = scmp.eq.s32.totalorder %s16, 0
    %p58 = por %p56, %p57
    %p59 = scmp.ne.s32.totalorder %s47, %s48
    %p60 = scmp.eq.s32.totalorder %s17, 1
    %p61 = por %p59, %p60
    %p63 = scmp.ne.s32.totalorder %s48, %s62
    %p64 = scmp.eq.s32.totalorder %s17, 0
    %p65 = por %p63, %p64
    %s67 = sadd.s32 %s66, 1
    %p70 = scmp.eq.s32.totalorder %s11, 1
    %p71 = scmp.ne.s32.totalorder %s66, %s68
    %p72 = scmp.eq.s32.totalorder %s11, 0
    %p73 = por %p71, %p72
    %p74 = scmp.ne.s32.totalorder %s66, %s68
    %p75 = scmp.eq.s32.totalorder %s16, 1
    %p76 = por %p74, %p75
    %p77 = scmp.ne.s32.totalorder %s68, %s69
    %p78 = scmp.eq.s32.totalorder %s16, 0
    %p79 = por %p77, %p78
    %p80 = scmp.ne.s32.totalorder %s68, %s69
    %p81 = scmp.eq.s32.totalorder %s17, 1
    %p82 = por %p80, %p81
    %p84 = scmp.ne.s32.totalorder %s69, %s83
    %p85 = scmp.eq.s32.totalorder %s17, 0
    %p86 = por %p84, %p85
    %s88 = sadd.s32 %s87, 1
    %p91 = scmp.eq.s32.totalorder %s11, 1
    %p92 = scmp.ne.s32.totalorder %s87, %s89
    %p93 = scmp.eq.s32.totalorder %s11, 0
    %p94 = por %p92, %p93
    %p95 = scmp.ne.s32.totalorder %s87, %s89
    %p96 = scmp.eq.s32.totalorder %s16, 1
    %p97 = por %p95, %p96
    %p98 = scmp.ne.s32.totalorder %s89, %s90
    %p99 = scmp.eq.s32.totalorder %s16, 0
    %p100 = por %p98, %p99
    %p101 = scmp.ne.s32.totalorder %s89, %s90
    %p102 = scmp.eq.s32.totalorder %s17, 1
    %p103 = por %p101, %p102
    %p105 = scmp.ne.s32.totalorder %s90, %s104
    %p106 = scmp.eq.s32.totalorder %s17, 0
    %p107 = por %p105, %p106
    %s109 = sadd.s32 %s108, 1
    %p112 = scmp.eq.s32.totalorder %s11, 1
    %p113 = scmp.ne.s32.totalorder %s108, %s110
    %p114 = scmp.eq.s32.totalorder %s11, 0
    %p115 = por %p113, %p114
    %p116 = scmp.ne.s32.totalorder %s108, %s110
    %p117 = scmp.eq.s32.totalorder %s16, 1
    %p118 = por %p116, %p117
    %p119 = scmp.ne.s32.totalorder %s110, %s111
    %p120 = scmp.eq.s32.totalorder %s16, 0
    %p121 = por %p119, %p120
    %p122 = scmp.ne.s32.totalorder %s110, %s111
    %p123 = scmp.eq.s32.totalorder %s17, 1
    %p124 = por %p122, %p123
    %p126 = scmp.ne.s32.totalorder %s111, %s125
    %p127 = scmp.eq.s32.totalorder %s17, 0
    %p128 = por %p126, %p127
    %s129 = ssub.s32 %s11, %s18
    %p130 = scmp.eq.s32.totalorder %s129, 0
    %s132 = sadd.s32 %s131, 1
    %s133 = scalar_select %p130, %s131, %s132
    %p136 = pneg %p130
    %p137 = scmp.eq.s32.totalorder %s11, 1
    %p138 = por %p136, %p137
    %p139 = scmp.ne.s32.totalorder %s131, %s134
    %p140 = scmp.eq.s32.totalorder %s11, 0
    %p141 = por %p139, %p140
    %p142 = scmp.ne.s32.totalorder %s131, %s134
    %p143 = scmp.eq.s32.totalorder %s16, 1
    %p144 = por %p142, %p143
    %p145 = scmp.ne.s32.totalorder %s134, %s135
    %p146 = scmp.eq.s32.totalorder %s16, 0
    %p147 = por %p145, %p146
    %p148 = scmp.ne.s32.totalorder %s134, %s135
    %p149 = scmp.eq.s32.totalorder %s17, 1
    %p150 = por %p148, %p149
    %p152 = scmp.ne.s32.totalorder %s135, %s151
    %p153 = scmp.eq.s32.totalorder %s17, 0
    %p154 = por %p152, %p153
    %p155 = scmp.le.s32.totalorder 1, %s11
    %p156 = scmp.lt.s32.totalorder %s11, 3
    %p157 = pnand %p155, %p156
    %p158 = pneg %p157
    // Predicated region
    $region9: #{_lambda_.10} parent=5 // pred_check
      _
    $region10: #{_lambda_.10} parent=5 // pred_check_branch
      %160 = sbr.rel (%p157) target = $region12
    $region11: #{_lambda_.10} parent=5 // pred_region
      %s161 = ssub.s32 %s11, 1
      // Predicated region
      $region13: #{_lambda_.10} parent=11 // pred_check
        %p162 = pneg %p58
      $region14: #{_lambda_.10} parent=11 // pred_check_branch
        %164 = sbr.rel (%p162) target = $region16
      $region15: #{_lambda_.10} parent=11 // pred_region
        _
      $region16: #{_lambda_.10} parent=11 // pred_fallthru
        _
      // Predicated region
      $region17: #{_lambda_.10} parent=11 // pred_check
        %p165 = pneg %p79
      $region18: #{_lambda_.10} parent=11 // pred_check_branch
        %167 = sbr.rel (%p165) target = $region20
      $region19: #{_lambda_.10} parent=11 // pred_region
        _
      $region20: #{_lambda_.10} parent=11 // pred_fallthru
        _
      // Predicated region
      $region21: #{_lambda_.10} parent=11 // pred_check
        %p168 = pneg %p100
      $region22: #{_lambda_.10} parent=11 // pred_check_branch
        %170 = sbr.rel (%p168) target = $region24
      $region23: #{_lambda_.10} parent=11 // pred_region
        _
      $region24: #{_lambda_.10} parent=11 // pred_fallthru
        _
      // Predicated region
      $region25: #{_lambda_.10} parent=11 // pred_check
        %p171 = pneg %p121
      $region26: #{_lambda_.10} parent=11 // pred_check_branch
        %173 = sbr.rel (%p171) target = $region28
      $region27: #{_lambda_.10} parent=11 // pred_region
        _
      $region28: #{_lambda_.10} parent=11 // pred_fallthru
        _
    $region12: #{_lambda_.10} parent=5 // pred_fallthru
      _
    %p174 = scmp.lt.s32.totalorder %s11, 2
    // Predicated region
    $region29: #{_lambda_.10} parent=5 // pred_check
      %p175 = pneg %p174
    $region30: #{_lambda_.10} parent=5 // pred_check_branch
      %177 = sbr.rel (%p175) target = $region32
    $region31: #{_lambda_.10} parent=5 // pred_region
      // Predicated region
      $region33: #{_lambda_.10} parent=31 // pred_check
        %p178 = pneg %p31
      $region34: #{_lambda_.10} parent=31 // pred_check_branch
        %180 = sbr.rel (%p178) target = $region36
      $region35: #{_lambda_.10} parent=31 // pred_region
        %p181 = scmp.lt.s32.totalorder %s11, 1
        %s182 = scalar_select %p181, %s11, 1
        %s183 = smul.addr %s182, 4
        %s184 = smul.addr %s183, 4
        %s185 = scalar_lea.vmem %s0, %s184
      $region36: #{_lambda_.10} parent=31 // pred_fallthru
        _
    $region32: #{_lambda_.10} parent=5 // pred_fallthru
      _
    %p186 = scmp.le.s32.totalorder 1, %s11
    %p187 = scmp.lt.s32.totalorder %s11, 3
    %p188 = pnand %p186, %p187
    %p189 = pneg %p188
    // Predicated region
    $region37: #{_lambda_.10} parent=5 // pred_check
      _
    $region38: #{_lambda_.10} parent=5 // pred_check_branch
      %191 = sbr.rel (%p188) target = $region40
    $region39: #{_lambda_.10} parent=5 // pred_region
      %s192 = ssub.s32 %s11, 1
      %p193 = scmp.lt.s32.totalorder %s16, 1
      %s194 = scalar_select %p193, %s16, 1
      %s195 = smul.addr %s194, 4
      %s196 = smul.addr %s195, 4
      %s197 = scalar_lea.vmem %s0, %s196
      %p198 = pneg %p37
      %p199 = pneg %p34
      %p200 = pneg %p58
      %p201 = pneg %p55
      %p202 = pneg %p79
      %p203 = pneg %p76
      %p204 = pneg %p100
      %p205 = pneg %p97
      %p206 = pneg %p121
      %p207 = pneg %p118
      %p208 = pneg %p147
      %p209 = pneg %p144
      %p210 = scmp.lt.s32.totalorder %s16, 1
      %s211 = scalar_select %p210, %s16, 1
      %s212 = smul.addr %s211, 4
      %s213 = smul.addr %s212, 4
      %s214 = scalar_lea.vmem %s5, %s213
      %p215 = scmp.lt.s32.totalorder %s16, 1
      %s216 = scalar_select %p215, %s16, 1
      %s217 = smul.addr %s216, 4
      %s218 = smul.addr %s217, 4
      %s219 = scalar_lea.vmem %s0, %s218
      %p220 = scmp.lt.s32.totalorder %s16, 1
      %s221 = scalar_select %p220, %s16, 1
      %s222 = smul.addr %s221, 4
      %s223 = smul.addr %s222, 4
      %s224 = scalar_lea.vmem %s5, %s223
      %v226 = vld [vmem:[%s4] sm:$0x1]
      %v227 = vld [vmem:[%s1] sm:$0xf]
      %v228 = vld [vmem:[%s1 + $0x4] sm:$0xf]
      %v229 = vld [vmem:[%s1 + $0x8] sm:$0xf]
      %v230 = vld [vmem:[%s1 + $0xc] sm:$0xf]
      %v231 = vld [vmem:[%s219] sm:$0xf]
      %v232 = vld [vmem:[%s219 + $0x4] sm:$0xf]
      %v233 = vld [vmem:[%s219 + $0x8] sm:$0xf]
      %v234 = vld [vmem:[%s219 + $0xc] sm:$0xf]
      %s235 = scalar_lea.vmem %s1, 16
      %v236 = vld [vmem:[%s235] sm:$0xf]
      %v237 = vld [vmem:[%s235 + $0x4] sm:$0xf]
      %v238 = vld [vmem:[%s235 + $0x8] sm:$0xf]
      %v239 = vld [vmem:[%s235 + $0xc] sm:$0xf]
      %v244 = vunpack.c.l.b16 %v236
      %v245 = vunpack.c.l.b16 %v237
      %v246 = vunpack.c.l.b16 %v238
      %v247 = vunpack.c.l.b16 %v239
      %v248 = vpack.c.b16 %v245, %v244
      %v249 = vpack.c.b16 %v247, %v246
      %v254 = vunpack.c.l.b16 %v231
      %v255 = vunpack.c.l.b16 %v232
      %v256 = vunpack.c.l.b16 %v233
      %v257 = vunpack.c.l.b16 %v234
      %v258 = vpack.c.b16 %v255, %v254
      %v259 = vpack.c.b16 %v257, %v256
      %260 = vrot.lane.b32.xlu0 %v258, 127
      %v261 = vpop.permute.xlu0 %260
      %262 = vrot.lane.b32.xlu0 %v259, 127
      %v263 = vpop.permute.xlu0 %262
      %vm266 = vcmask 261120
      %v268 = vsel %vm266, %v248, 0
      %v271 = vsel %vm266, %v249, 0
      %273 = vmatprep.subr.bf16.mxu0 0
      %274 = vmatpush1.bf16.msra.mxu0 0
      %275 = vmatprep.subr.bf16.mxu0 0
      %276 = vmatpush1.bf16.msra.mxu0 0
      %277 = vmatprep.subr.bf16.mxu0 0
      %278 = vmatpush1.bf16.msra.mxu0 0
      %279 = vmatprep.subr.bf16.mxu0 0
      %280 = vmatpush1.bf16.msra.mxu0 0
      %281 = vmatprep.subr.bf16.mxu0 0
      %282 = vmatpush1.bf16.msra.mxu0 0
      %283 = vmatprep.subr.bf16.mxu0 0
      %284 = vmatpush1.bf16.msra.mxu0 0
      %285 = vmatprep.subr.bf16.mxu0 0
      %286 = vmatpush1.bf16.msra.mxu0 %v263
      %287 = vmatprep.subr.bf16.mxu0 0
      %288 = vmatpush1.bf16.msra.mxu0 %v261
      %289 = vmatprep.subr.bf16.mxu0 0
      %290 = vmatpush2.bf16.msra.mxu0 0
      %291 = vmatprep.subr.bf16.mxu0 0
      %292 = vmatpush2.bf16.msra.mxu0 0
      %293 = vmatprep.subr.bf16.mxu0 0
      %294 = vmatpush2.bf16.msra.mxu0 0
      %295 = vmatprep.subr.bf16.mxu0 0
      %296 = vmatpush2.bf16.msra.mxu0 0
      %297 = vmatprep.subr.bf16.mxu0 0
      %298 = vmatpush2.bf16.msra.mxu0 0
      %299 = vmatprep.subr.bf16.mxu0 0
      %300 = vmatpush2.bf16.msra.mxu0 0
      %301 = vmatprep.subr.bf16.mxu0 0
      %302 = vmatpush2.bf16.msra.mxu0 0
      %303 = vmatprep.subr.bf16.mxu0 0
      %304 = vmatpush2.bf16.msra.mxu0 0
      %305 = vmatprep.mubr.bf16.mxu0 0
      %306 = vmatmul.mubr.bf16.gmra.mxu0 %v268
      %v307 = vpop.f32.mrf.mxu0
      %v308 = vadd.f32 0.0, %v307
      %v309 = vpop.f32.mrf.mxu0
      %v310 = vpop.f32.mrf.mxu0
      %v311 = vadd.f32 0.0, %v310
      %v312 = vpop.f32.mrf.mxu0
      %313 = vmatprep.mubr.bf16.mxu0 0
      %314 = vmatmul.mubr.bf16.gmra.mxu0 %v271
      %v315 = vpop.f32.mrf.mxu0
      %v316 = vadd.f32 0.0, %v315
      %v317 = vpop.f32.mrf.mxu0
      %v318 = vpop.f32.mrf.mxu0
      %v319 = vadd.f32 0.0, %v318
      %v320 = vpop.f32.mrf.mxu0
      %321 = vdwg.mxu0
      %v326 = vunpack.c.l.b16 %v227
      %v327 = vunpack.c.l.b16 %v228
      %v328 = vunpack.c.l.b16 %v229
      %v329 = vunpack.c.l.b16 %v230
      %v330 = vpack.c.b16 %v327, %v326
      %v331 = vpack.c.b16 %v329, %v328
      %v335 = vsel %vm266, %v330, 0
      %v338 = vsel %vm266, %v331, 0
      %340 = vmatprep.subr.bf16.mxu0 0
      %341 = vmatpush1.bf16.msra.mxu0 0
      %342 = vmatprep.subr.bf16.mxu0 0
      %343 = vmatpush1.bf16.msra.mxu0 0
      %344 = vmatprep.subr.bf16.mxu0 0
      %345 = vmatpush1.bf16.msra.mxu0 0
      %346 = vmatprep.subr.bf16.mxu0 0
      %347 = vmatpush1.bf16.msra.mxu0 0
      %348 = vmatprep.subr.bf16.mxu0 0
      %349 = vmatpush1.bf16.msra.mxu0 0
      %350 = vmatprep.subr.bf16.mxu0 0
      %351 = vmatpush1.bf16.msra.mxu0 0
      %352 = vmatprep.subr.bf16.mxu0 0
      %353 = vmatpush1.bf16.msra.mxu0 %v259
      %354 = vmatprep.subr.bf16.mxu0 0
      %355 = vmatpush1.bf16.msra.mxu0 %v258
      %356 = vmatprep.subr.bf16.mxu0 0
      %357 = vmatpush2.bf16.msra.mxu0 0
      %358 = vmatprep.subr.bf16.mxu0 0
      %359 = vmatpush2.bf16.msra.mxu0 0
      %360 = vmatprep.subr.bf16.mxu0 0
      %361 = vmatpush2.bf16.msra.mxu0 0
      %362 = vmatprep.subr.bf16.mxu0 0
      %363 = vmatpush2.bf16.msra.mxu0 0
      %364 = vmatprep.subr.bf16.mxu0 0
      %365 = vmatpush2.bf16.msra.mxu0 0
      %366 = vmatprep.subr.bf16.mxu0 0
      %367 = vmatpush2.bf16.msra.mxu0 0
      %368 = vmatprep.subr.bf16.mxu0 0
      %369 = vmatpush2.bf16.msra.mxu0 0
      %370 = vmatprep.subr.bf16.mxu0 0
      %371 = vmatpush2.bf16.msra.mxu0 0
      %372 = vmatprep.mubr.bf16.mxu0 0
      %373 = vmatmul.mubr.bf16.gmra.mxu0 %v335
      %v374 = vpop.f32.mrf.mxu0
      %v375 = vadd.f32 %v308, %v374
      %v376 = vpop.f32.mrf.mxu0
      %v377 = vpop.f32.mrf.mxu0
      %v378 = vadd.f32 %v311, %v377
      %v379 = vpop.f32.mrf.mxu0
      %380 = vmatprep.mubr.bf16.mxu0 0
      %381 = vmatmul.mubr.bf16.gmra.mxu0 %v338
      %v382 = vpop.f32.mrf.mxu0
      %v383 = vadd.f32 %v316, %v382
      %v384 = vpop.f32.mrf.mxu0
      %v385 = vpop.f32.mrf.mxu0
      %v386 = vadd.f32 %v319, %v385
      %v387 = vpop.f32.mrf.mxu0
      %388 = vdwg.mxu0
      %s389 = scalar_lea.vmem %s1, 32
      %v390 = vld [vmem:[%s389] sm:$0xf]
      %v391 = vld [vmem:[%s389 + $0x4] sm:$0xf]
      %v392 = vld [vmem:[%s389 + $0x8] sm:$0xf]
      %v393 = vld [vmem:[%s389 + $0xc] sm:$0xf]
      %v398 = vunpack.c.l.b16 %v390
      %v399 = vunpack.c.l.b16 %v391
      %v400 = vunpack.c.l.b16 %v392
      %v401 = vunpack.c.l.b16 %v393
      %v402 = vpack.c.b16 %v399, %v398
      %v403 = vpack.c.b16 %v401, %v400
      %404 = vrot.lane.b32.xlu0 %v258, 126
      %v405 = vpop.permute.xlu0 %404
      %406 = vrot.lane.b32.xlu0 %v259, 126
      %v407 = vpop.permute.xlu0 %406
      %v411 = vsel %vm266, %v402, 0
      %v414 = vsel %vm266, %v403, 0
      %416 = vmatprep.subr.bf16.mxu0 0
      %417 = vmatpush1.bf16.msra.mxu0 0
      %418 = vmatprep.subr.bf16.mxu0 0
      %419 = vmatpush1.bf16.msra.mxu0 0
      %420 = vmatprep.subr.bf16.mxu0 0
      %421 = vmatpush1.bf16.msra.mxu0 0
      %422 = vmatprep.subr.bf16.mxu0 0
      %423 = vmatpush1.bf16.msra.mxu0 0
      %424 = vmatprep.subr.bf16.mxu0 0
      %425 = vmatpush1.bf16.msra.mxu0 0
      %426 = vmatprep.subr.bf16.mxu0 0
      %427 = vmatpush1.bf16.msra.mxu0 0
      %428 = vmatprep.subr.bf16.mxu0 0
      %429 = vmatpush1.bf16.msra.mxu0 %v407
      %430 = vmatprep.subr.bf16.mxu0 0
      %431 = vmatpush1.bf16.msra.mxu0 %v405
      %432 = vmatprep.subr.bf16.mxu0 0
      %433 = vmatpush2.bf16.msra.mxu0 0
      %434 = vmatprep.subr.bf16.mxu0 0
      %435 = vmatpush2.bf16.msra.mxu0 0
      %436 = vmatprep.subr.bf16.mxu0 0
      %437 = vmatpush2.bf16.msra.mxu0 0
      %438 = vmatprep.subr.bf16.mxu0 0
      %439 = vmatpush2.bf16.msra.mxu0 0
      %440 = vmatprep.subr.bf16.mxu0 0
      %441 = vmatpush2.bf16.msra.mxu0 0
      %442 = vmatprep.subr.bf16.mxu0 0
      %443 = vmatpush2.bf16.msra.mxu0 0
      %444 = vmatprep.subr.bf16.mxu0 0
      %445 = vmatpush2.bf16.msra.mxu0 0
      %446 = vmatprep.subr.bf16.mxu0 0
      %447 = vmatpush2.bf16.msra.mxu0 0
      %448 = vmatprep.mubr.bf16.mxu0 0
      %449 = vmatmul.mubr.bf16.gmra.mxu0 %v411
      %v450 = vpop.f32.mrf.mxu0
      %v451 = vadd.f32 0.0, %v450
      %v452 = vpop.f32.mrf.mxu0
      %v453 = vpop.f32.mrf.mxu0
      %v454 = vadd.f32 0.0, %v453
      %v455 = vpop.f32.mrf.mxu0
      %456 = vmatprep.mubr.bf16.mxu0 0
      %457 = vmatmul.mubr.bf16.gmra.mxu0 %v414
      %v458 = vpop.f32.mrf.mxu0
      %v459 = vadd.f32 0.0, %v458
      %v460 = vpop.f32.mrf.mxu0
      %v461 = vpop.f32.mrf.mxu0
      %v462 = vadd.f32 0.0, %v461
      %v463 = vpop.f32.mrf.mxu0
      %464 = vdwg.mxu0
      %v465 = vadd.f32 %v375, %v451
      %v466 = vadd.f32 %v378, %v454
      %v467 = vadd.f32 %v383, %v459
      %v468 = vadd.f32 %v386, %v462
      %s469 = scalar_lea.vmem %s1, 48
      %v470 = vld [vmem:[%s469] sm:$0xf]
      %v471 = vld [vmem:[%s469 + $0x4] sm:$0xf]
      %v472 = vld [vmem:[%s469 + $0x8] sm:$0xf]
      %v473 = vld [vmem:[%s469 + $0xc] sm:$0xf]
      %v478 = vunpack.c.l.b16 %v470
      %v479 = vunpack.c.l.b16 %v471
      %v480 = vunpack.c.l.b16 %v472
      %v481 = vunpack.c.l.b16 %v473
      %v482 = vpack.c.b16 %v479, %v478
      %v483 = vpack.c.b16 %v481, %v480
      %484 = vrot.lane.b32.xlu0 %v258, 122
      %v485 = vpop.permute.xlu0 %484
      %486 = vrot.lane.b32.xlu0 %v259, 122
      %v487 = vpop.permute.xlu0 %486
      %v491 = vsel %vm266, %v482, 0
      %v494 = vsel %vm266, %v483, 0
      %496 = vmatprep.subr.bf16.mxu0 0
      %497 = vmatpush1.bf16.msra.mxu0 0
      %498 = vmatprep.subr.bf16.mxu0 0
      %499 = vmatpush1.bf16.msra.mxu0 0
      %500 = vmatprep.subr.bf16.mxu0 0
      %501 = vmatpush1.bf16.msra.mxu0 0
      %502 = vmatprep.subr.bf16.mxu0 0
      %503 = vmatpush1.bf16.msra.mxu0 0
      %504 = vmatprep.subr.bf16.mxu0 0
      %505 = vmatpush1.bf16.msra.mxu0 0
      %506 = vmatprep.subr.bf16.mxu0 0
      %507 = vmatpush1.bf16.msra.mxu0 0
      %508 = vmatprep.subr.bf16.mxu0 0
      %509 = vmatpush1.bf16.msra.mxu0 %v487
      %510 = vmatprep.subr.bf16.mxu0 0
      %511 = vmatpush1.bf16.msra.mxu0 %v485
      %512 = vmatprep.subr.bf16.mxu0 0
      %513 = vmatpush2.bf16.msra.mxu0 0
      %514 = vmatprep.subr.bf16.mxu0 0
      %515 = vmatpush2.bf16.msra.mxu0 0
      %516 = vmatprep.subr.bf16.mxu0 0
      %517 = vmatpush2.bf16.msra.mxu0 0
      %518 = vmatprep.subr.bf16.mxu0 0
      %519 = vmatpush2.bf16.msra.mxu0 0
      %520 = vmatprep.subr.bf16.mxu0 0
      %521 = vmatpush2.bf16.msra.mxu0 0
      %522 = vmatprep.subr.bf16.mxu0 0
      %523 = vmatpush2.bf16.msra.mxu0 0
      %524 = vmatprep.subr.bf16.mxu0 0
      %525 = vmatpush2.bf16.msra.mxu0 0
      %526 = vmatprep.subr.bf16.mxu0 0
      %527 = vmatpush2.bf16.msra.mxu0 0
      %528 = vmatprep.mubr.bf16.mxu0 0
      %529 = vmatmul.mubr.bf16.gmra.mxu0 %v491
      %v530 = vpop.f32.mrf.mxu0
      %v531 = vadd.f32 0.0, %v530
      %v532 = vpop.f32.mrf.mxu0
      %v533 = vpop.f32.mrf.mxu0
      %v534 = vadd.f32 0.0, %v533
      %v535 = vpop.f32.mrf.mxu0
      %536 = vmatprep.mubr.bf16.mxu0 0
      %537 = vmatmul.mubr.bf16.gmra.mxu0 %v494
      %v538 = vpop.f32.mrf.mxu0
      %v539 = vadd.f32 0.0, %v538
      %v540 = vpop.f32.mrf.mxu0
      %v541 = vpop.f32.mrf.mxu0
      %v542 = vadd.f32 0.0, %v541
      %v543 = vpop.f32.mrf.mxu0
      %544 = vdwg.mxu0
      %v545 = vadd.f32 %v465, %v531
      %v546 = vadd.f32 %v466, %v534
      %v547 = vadd.f32 %v467, %v539
      %v548 = vadd.f32 %v468, %v542
      %s549 = scalar_lea.vmem %s1, 64
      %v550 = vld [vmem:[%s549] sm:$0xf]
      %v551 = vld [vmem:[%s549 + $0x4] sm:$0xf]
      %v552 = vld [vmem:[%s549 + $0x8] sm:$0xf]
      %v553 = vld [vmem:[%s549 + $0xc] sm:$0xf]
      %v558 = vunpack.c.l.b16 %v550
      %v559 = vunpack.c.l.b16 %v551
      %v560 = vunpack.c.l.b16 %v552
      %v561 = vunpack.c.l.b16 %v553
      %v562 = vpack.c.b16 %v559, %v558
      %v563 = vpack.c.b16 %v561, %v560
      %564 = vrot.lane.b32.xlu0 %v258, 121
      %v565 = vpop.permute.xlu0 %564
      %566 = vrot.lane.b32.xlu0 %v259, 121
      %v567 = vpop.permute.xlu0 %566
      %v571 = vsel %vm266, %v562, 0
      %v574 = vsel %vm266, %v563, 0
      %576 = vmatprep.subr.bf16.mxu0 0
      %577 = vmatpush1.bf16.msra.mxu0 0
      %578 = vmatprep.subr.bf16.mxu0 0
      %579 = vmatpush1.bf16.msra.mxu0 0
      %580 = vmatprep.subr.bf16.mxu0 0
      %581 = vmatpush1.bf16.msra.mxu0 0
      %582 = vmatprep.subr.bf16.mxu0 0
      %583 = vmatpush1.bf16.msra.mxu0 0
      %584 = vmatprep.subr.bf16.mxu0 0
      %585 = vmatpush1.bf16.msra.mxu0 0
      %586 = vmatprep.subr.bf16.mxu0 0
      %587 = vmatpush1.bf16.msra.mxu0 0
      %588 = vmatprep.subr.bf16.mxu0 0
      %589 = vmatpush1.bf16.msra.mxu0 %v567
      %590 = vmatprep.subr.bf16.mxu0 0
      %591 = vmatpush1.bf16.msra.mxu0 %v565
      %592 = vmatprep.subr.bf16.mxu0 0
      %593 = vmatpush2.bf16.msra.mxu0 0
      %594 = vmatprep.subr.bf16.mxu0 0
      %595 = vmatpush2.bf16.msra.mxu0 0
      %596 = vmatprep.subr.bf16.mxu0 0
      %597 = vmatpush2.bf16.msra.mxu0 0
      %598 = vmatprep.subr.bf16.mxu0 0
      %599 = vmatpush2.bf16.msra.mxu0 0
      %600 = vmatprep.subr.bf16.mxu0 0
      %601 = vmatpush2.bf16.msra.mxu0 0
      %602 = vmatprep.subr.bf16.mxu0 0
      %603 = vmatpush2.bf16.msra.mxu0 0
      %604 = vmatprep.subr.bf16.mxu0 0
      %605 = vmatpush2.bf16.msra.mxu0 0
      %606 = vmatprep.subr.bf16.mxu0 0
      %607 = vmatpush2.bf16.msra.mxu0 0
      %608 = vmatprep.mubr.bf16.mxu0 0
      %609 = vmatmul.mubr.bf16.gmra.mxu0 %v571
      %v610 = vpop.f32.mrf.mxu0
      %v611 = vadd.f32 0.0, %v610
      %v612 = vpop.f32.mrf.mxu0
      %v613 = vpop.f32.mrf.mxu0
      %v614 = vadd.f32 0.0, %v613
      %v615 = vpop.f32.mrf.mxu0
      %616 = vmatprep.mubr.bf16.mxu0 0
      %617 = vmatmul.mubr.bf16.gmra.mxu0 %v574
      %v618 = vpop.f32.mrf.mxu0
      %v619 = vadd.f32 0.0, %v618
      %v620 = vpop.f32.mrf.mxu0
      %v621 = vpop.f32.mrf.mxu0
      %v622 = vadd.f32 0.0, %v621
      %v623 = vpop.f32.mrf.mxu0
      %624 = vdwg.mxu0
      %v625 = vadd.f32 %v545, %v611
      %v626 = vadd.f32 %v546, %v614
      %v627 = vadd.f32 %v547, %v619
      %v628 = vadd.f32 %v548, %v622
      %s629 = scalar_lea.vmem %s1, 80
      %v630 = vld [vmem:[%s629] sm:$0xf]
      %v631 = vld [vmem:[%s629 + $0x4] sm:$0xf]
      %v632 = vld [vmem:[%s629 + $0x8] sm:$0xf]
      %v633 = vld [vmem:[%s629 + $0xc] sm:$0xf]
      %v638 = vunpack.c.l.b16 %v630
      %v639 = vunpack.c.l.b16 %v631
      %v640 = vunpack.c.l.b16 %v632
      %v641 = vunpack.c.l.b16 %v633
      %v642 = vpack.c.b16 %v639, %v638
      %v643 = vpack.c.b16 %v641, %v640
      %644 = vrot.lane.b32.xlu0 %v258, 120
      %v645 = vpop.permute.xlu0 %644
      %646 = vrot.lane.b32.xlu0 %v259, 120
      %v647 = vpop.permute.xlu0 %646
      %v651 = vsel %vm266, %v642, 0
      %v654 = vsel %vm266, %v643, 0
      %656 = vmatprep.subr.bf16.mxu0 0
      %657 = vmatpush1.bf16.msra.mxu0 0
      %658 = vmatprep.subr.bf16.mxu0 0
      %659 = vmatpush1.bf16.msra.mxu0 0
      %660 = vmatprep.subr.bf16.mxu0 0
      %661 = vmatpush1.bf16.msra.mxu0 0
      %662 = vmatprep.subr.bf16.mxu0 0
      %663 = vmatpush1.bf16.msra.mxu0 0
      %664 = vmatprep.subr.bf16.mxu0 0
      %665 = vmatpush1.bf16.msra.mxu0 0
      %666 = vmatprep.subr.bf16.mxu0 0
      %667 = vmatpush1.bf16.msra.mxu0 0
      %668 = vmatprep.subr.bf16.mxu0 0
      %669 = vmatpush1.bf16.msra.mxu0 %v647
      %670 = vmatprep.subr.bf16.mxu0 0
      %671 = vmatpush1.bf16.msra.mxu0 %v645
      %672 = vmatprep.subr.bf16.mxu0 0
      %673 = vmatpush2.bf16.msra.mxu0 0
      %674 = vmatprep.subr.bf16.mxu0 0
      %675 = vmatpush2.bf16.msra.mxu0 0
      %676 = vmatprep.subr.bf16.mxu0 0
      %677 = vmatpush2.bf16.msra.mxu0 0
      %678 = vmatprep.subr.bf16.mxu0 0
      %679 = vmatpush2.bf16.msra.mxu0 0
      %680 = vmatprep.subr.bf16.mxu0 0
      %681 = vmatpush2.bf16.msra.mxu0 0
      %682 = vmatprep.subr.bf16.mxu0 0
      %683 = vmatpush2.bf16.msra.mxu0 0
      %684 = vmatprep.subr.bf16.mxu0 0
      %685 = vmatpush2.bf16.msra.mxu0 0
      %686 = vmatprep.subr.bf16.mxu0 0
      %687 = vmatpush2.bf16.msra.mxu0 0
      %688 = vmatprep.mubr.bf16.mxu0 0
      %689 = vmatmul.mubr.bf16.gmra.mxu0 %v651
      %v690 = vpop.f32.mrf.mxu0
      %v691 = vadd.f32 0.0, %v690
      %v692 = vpop.f32.mrf.mxu0
      %v693 = vpop.f32.mrf.mxu0
      %v694 = vadd.f32 0.0, %v693
      %v695 = vpop.f32.mrf.mxu0
      %696 = vmatprep.mubr.bf16.mxu0 0
      %697 = vmatmul.mubr.bf16.gmra.mxu0 %v654
      %v698 = vpop.f32.mrf.mxu0
      %v699 = vadd.f32 0.0, %v698
      %v700 = vpop.f32.mrf.mxu0
      %v701 = vpop.f32.mrf.mxu0
      %v702 = vadd.f32 0.0, %v701
      %v703 = vpop.f32.mrf.mxu0
      %704 = vdwg.mxu0
      %v705 = vadd.f32 %v625, %v691
      %v706 = vadd.f32 %v626, %v694
      %v707 = vadd.f32 %v627, %v699
      %v708 = vadd.f32 %v628, %v702
      %s709 = scalar_lea.vmem %s1, 96
      %v710 = vld [vmem:[%s709] sm:$0xf]
      %v711 = vld [vmem:[%s709 + $0x4] sm:$0xf]
      %v712 = vld [vmem:[%s709 + $0x8] sm:$0xf]
      %v713 = vld [vmem:[%s709 + $0xc] sm:$0xf]
      %v718 = vunpack.c.l.b16 %v710
      %v719 = vunpack.c.l.b16 %v711
      %v720 = vunpack.c.l.b16 %v712
      %v721 = vunpack.c.l.b16 %v713
      %v722 = vpack.c.b16 %v719, %v718
      %v723 = vpack.c.b16 %v721, %v720
      %724 = vrot.lane.b32.xlu0 %v258, 116
      %v725 = vpop.permute.xlu0 %724
      %726 = vrot.lane.b32.xlu0 %v259, 116
      %v727 = vpop.permute.xlu0 %726
      %v731 = vsel %vm266, %v722, 0
      %v734 = vsel %vm266, %v723, 0
      %736 = vmatprep.subr.bf16.mxu0 0
      %737 = vmatpush1.bf16.msra.mxu0 0
      %738 = vmatprep.subr.bf16.mxu0 0
      %739 = vmatpush1.bf16.msra.mxu0 0
      %740 = vmatprep.subr.bf16.mxu0 0
      %741 = vmatpush1.bf16.msra.mxu0 0
      %742 = vmatprep.subr.bf16.mxu0 0
      %743 = vmatpush1.bf16.msra.mxu0 0
      %744 = vmatprep.subr.bf16.mxu0 0
      %745 = vmatpush1.bf16.msra.mxu0 0
      %746 = vmatprep.subr.bf16.mxu0 0
      %747 = vmatpush1.bf16.msra.mxu0 0
      %748 = vmatprep.subr.bf16.mxu0 0
      %749 = vmatpush1.bf16.msra.mxu0 %v727
      %750 = vmatprep.subr.bf16.mxu0 0
      %751 = vmatpush1.bf16.msra.mxu0 %v725
      %752 = vmatprep.subr.bf16.mxu0 0
      %753 = vmatpush2.bf16.msra.mxu0 0
      %754 = vmatprep.subr.bf16.mxu0 0
      %755 = vmatpush2.bf16.msra.mxu0 0
      %756 = vmatprep.subr.bf16.mxu0 0
      %757 = vmatpush2.bf16.msra.mxu0 0
      %758 = vmatprep.subr.bf16.mxu0 0
      %759 = vmatpush2.bf16.msra.mxu0 0
      %760 = vmatprep.subr.bf16.mxu0 0
      %761 = vmatpush2.bf16.msra.mxu0 0
      %762 = vmatprep.subr.bf16.mxu0 0
      %763 = vmatpush2.bf16.msra.mxu0 0
      %764 = vmatprep.subr.bf16.mxu0 0
      %765 = vmatpush2.bf16.msra.mxu0 0
      %766 = vmatprep.subr.bf16.mxu0 0
      %767 = vmatpush2.bf16.msra.mxu0 0
      %768 = vmatprep.mubr.bf16.mxu0 0
      %769 = vmatmul.mubr.bf16.gmra.mxu0 %v731
      %v770 = vpop.f32.mrf.mxu0
      %v771 = vadd.f32 0.0, %v770
      %v772 = vpop.f32.mrf.mxu0
      %v773 = vpop.f32.mrf.mxu0
      %v774 = vadd.f32 0.0, %v773
      %v775 = vpop.f32.mrf.mxu0
      %776 = vmatprep.mubr.bf16.mxu0 0
      %777 = vmatmul.mubr.bf16.gmra.mxu0 %v734
      %v778 = vpop.f32.mrf.mxu0
      %v779 = vadd.f32 0.0, %v778
      %v780 = vpop.f32.mrf.mxu0
      %v781 = vpop.f32.mrf.mxu0
      %v782 = vadd.f32 0.0, %v781
      %v783 = vpop.f32.mrf.mxu0
      %784 = vdwg.mxu0
      %v785 = vadd.f32 %v705, %v771
      %v786 = vadd.f32 %v706, %v774
      %v787 = vadd.f32 %v707, %v779
      %v788 = vadd.f32 %v708, %v782
      %s789 = scalar_lea.vmem %s1, 112
      %v790 = vld [vmem:[%s789] sm:$0xf]
      %v791 = vld [vmem:[%s789 + $0x4] sm:$0xf]
      %v792 = vld [vmem:[%s789 + $0x8] sm:$0xf]
      %v793 = vld [vmem:[%s789 + $0xc] sm:$0xf]
      %v798 = vunpack.c.l.b16 %v790
      %v799 = vunpack.c.l.b16 %v791
      %v800 = vunpack.c.l.b16 %v792
      %v801 = vunpack.c.l.b16 %v793
      %v802 = vpack.c.b16 %v799, %v798
      %v803 = vpack.c.b16 %v801, %v800
      %804 = vrot.lane.b32.xlu0 %v258, 115
      %v805 = vpop.permute.xlu0 %804
      %806 = vrot.lane.b32.xlu0 %v259, 115
      %v807 = vpop.permute.xlu0 %806
      %v811 = vsel %vm266, %v802, 0
      %v814 = vsel %vm266, %v803, 0
      %816 = vmatprep.subr.bf16.mxu0 0
      %817 = vmatpush1.bf16.msra.mxu0 0
      %818 = vmatprep.subr.bf16.mxu0 0
      %819 = vmatpush1.bf16.msra.mxu0 0
      %820 = vmatprep.subr.bf16.mxu0 0
      %821 = vmatpush1.bf16.msra.mxu0 0
      %822 = vmatprep.subr.bf16.mxu0 0
      %823 = vmatpush1.bf16.msra.mxu0 0
      %824 = vmatprep.subr.bf16.mxu0 0
      %825 = vmatpush1.bf16.msra.mxu0 0
      %826 = vmatprep.subr.bf16.mxu0 0
      %827 = vmatpush1.bf16.msra.mxu0 0
      %828 = vmatprep.subr.bf16.mxu0 0
      %829 = vmatpush1.bf16.msra.mxu0 %v807
      %830 = vmatprep.subr.bf16.mxu0 0
      %831 = vmatpush1.bf16.msra.mxu0 %v805
      %832 = vmatprep.subr.bf16.mxu0 0
      %833 = vmatpush2.bf16.msra.mxu0 0
      %834 = vmatprep.subr.bf16.mxu0 0
      %835 = vmatpush2.bf16.msra.mxu0 0
      %836 = vmatprep.subr.bf16.mxu0 0
      %837 = vmatpush2.bf16.msra.mxu0 0
      %838 = vmatprep.subr.bf16.mxu0 0
      %839 = vmatpush2.bf16.msra.mxu0 0
      %840 = vmatprep.subr.bf16.mxu0 0
      %841 = vmatpush2.bf16.msra.mxu0 0
      %842 = vmatprep.subr.bf16.mxu0 0
      %843 = vmatpush2.bf16.msra.mxu0 0
      %844 = vmatprep.subr.bf16.mxu0 0
      %845 = vmatpush2.bf16.msra.mxu0 0
      %846 = vmatprep.subr.bf16.mxu0 0
      %847 = vmatpush2.bf16.msra.mxu0 0
      %848 = vmatprep.mubr.bf16.mxu0 0
      %849 = vmatmul.mubr.bf16.gmra.mxu0 %v811
      %v850 = vpop.f32.mrf.mxu0
      %v851 = vadd.f32 0.0, %v850
      %v852 = vpop.f32.mrf.mxu0
      %v853 = vpop.f32.mrf.mxu0
      %v854 = vadd.f32 0.0, %v853
      %v855 = vpop.f32.mrf.mxu0
      %856 = vmatprep.mubr.bf16.mxu0 0
      %857 = vmatmul.mubr.bf16.gmra.mxu0 %v814
      %v858 = vpop.f32.mrf.mxu0
      %v859 = vadd.f32 0.0, %v858
      %v860 = vpop.f32.mrf.mxu0
      %v861 = vpop.f32.mrf.mxu0
      %v862 = vadd.f32 0.0, %v861
      %v863 = vpop.f32.mrf.mxu0
      %864 = vdwg.mxu0
      %v865 = vadd.f32 %v785, %v851
      %v866 = vadd.f32 %v786, %v854
      %v867 = vadd.f32 %v787, %v859
      %v868 = vadd.f32 %v788, %v862
      %s869 = scalar_lea.vmem %s1, 128
      %v870 = vld [vmem:[%s869] sm:$0xf]
      %v871 = vld [vmem:[%s869 + $0x4] sm:$0xf]
      %v872 = vld [vmem:[%s869 + $0x8] sm:$0xf]
      %v873 = vld [vmem:[%s869 + $0xc] sm:$0xf]
      %v878 = vunpack.c.l.b16 %v870
      %v879 = vunpack.c.l.b16 %v871
      %v880 = vunpack.c.l.b16 %v872
      %v881 = vunpack.c.l.b16 %v873
      %v882 = vpack.c.b16 %v879, %v878
      %v883 = vpack.c.b16 %v881, %v880
      %884 = vrot.lane.b32.xlu0 %v258, 114
      %v885 = vpop.permute.xlu0 %884
      %886 = vrot.lane.b32.xlu0 %v259, 114
      %v887 = vpop.permute.xlu0 %886
      %v891 = vsel %vm266, %v882, 0
      %v894 = vsel %vm266, %v883, 0
      %896 = vmatprep.subr.bf16.mxu0 0
      %897 = vmatpush1.bf16.msra.mxu0 0
      %898 = vmatprep.subr.bf16.mxu0 0
      %899 = vmatpush1.bf16.msra.mxu0 0
      %900 = vmatprep.subr.bf16.mxu0 0
      %901 = vmatpush1.bf16.msra.mxu0 0
      %902 = vmatprep.subr.bf16.mxu0 0
      %903 = vmatpush1.bf16.msra.mxu0 0
      %904 = vmatprep.subr.bf16.mxu0 0
      %905 = vmatpush1.bf16.msra.mxu0 0
      %906 = vmatprep.subr.bf16.mxu0 0
      %907 = vmatpush1.bf16.msra.mxu0 0
      %908 = vmatprep.subr.bf16.mxu0 0
      %909 = vmatpush1.bf16.msra.mxu0 %v887
      %910 = vmatprep.subr.bf16.mxu0 0
      %911 = vmatpush1.bf16.msra.mxu0 %v885
      %912 = vmatprep.subr.bf16.mxu0 0
      %913 = vmatpush2.bf16.msra.mxu0 0
      %914 = vmatprep.subr.bf16.mxu0 0
      %915 = vmatpush2.bf16.msra.mxu0 0
      %916 = vmatprep.subr.bf16.mxu0 0
      %917 = vmatpush2.bf16.msra.mxu0 0
      %918 = vmatprep.subr.bf16.mxu0 0
      %919 = vmatpush2.bf16.msra.mxu0 0
      %920 = vmatprep.subr.bf16.mxu0 0
      %921 = vmatpush2.bf16.msra.mxu0 0
      %922 = vmatprep.subr.bf16.mxu0 0
      %923 = vmatpush2.bf16.msra.mxu0 0
      %924 = vmatprep.subr.bf16.mxu0 0
      %925 = vmatpush2.bf16.msra.mxu0 0
      %926 = vmatprep.subr.bf16.mxu0 0
      %927 = vmatpush2.bf16.msra.mxu0 0
      %928 = vmatprep.mubr.bf16.mxu0 0
      %929 = vmatmul.mubr.bf16.gmra.mxu0 %v891
      %v930 = vpop.f32.mrf.mxu0
      %v931 = vadd.f32 0.0, %v930
      %v932 = vpop.f32.mrf.mxu0
      %v933 = vpop.f32.mrf.mxu0
      %v934 = vadd.f32 0.0, %v933
      %v935 = vpop.f32.mrf.mxu0
      %936 = vmatprep.mubr.bf16.mxu0 0
      %937 = vmatmul.mubr.bf16.gmra.mxu0 %v894
      %v938 = vpop.f32.mrf.mxu0
      %v939 = vadd.f32 0.0, %v938
      %v940 = vpop.f32.mrf.mxu0
      %v941 = vpop.f32.mrf.mxu0
      %v942 = vadd.f32 0.0, %v941
      %v943 = vpop.f32.mrf.mxu0
      %944 = vdwg.mxu0
      %v945 = vadd.f32 %v865, %v931
      %v946 = vadd.f32 %v866, %v934
      %v947 = vadd.f32 %v867, %v939
      %v948 = vadd.f32 %v868, %v942
      %v950 = vlaneseq
      %v951 = vshrl.u32 %v950, 7
      %v952 = vsub.s32 0, %v951
      %v953 = vrot.slane %v226, %v952
      %v955 = vmul.f32 %v945, %v953
      %v956 = vmul.f32 %v946, %v953
      %v957 = vmul.f32 %v947, %v953
      %v958 = vmul.f32 %v948, %v953
      %vm959 = vcmask 195584
      %v960 = vsel %vm959, %v955, 0.0
      %961 = vadd.xlane.f32.xlu0 %v960
      %v962 = vpop.xlane.xlu0 %961
      %v963 = vsel %vm959, %v956, 0.0
      %964 = vadd.xlane.f32.xlu0 %v963
      %v965 = vpop.xlane.xlu0 %964
      %v966 = vsel %vm959, %v957, 0.0
      %967 = vadd.xlane.f32.xlu0 %v966
      %v968 = vpop.xlane.xlu0 %967
      %v969 = vsel %vm959, %v958, 0.0
      %970 = vadd.xlane.f32.xlu0 %v969
      %v971 = vpop.xlane.xlu0 %970
      %v972 = vmul.f32 %v962, 0.0625
      %v973 = vmul.f32 %v965, 0.0625
      %v974 = vmul.f32 %v968, 0.0625
      %v975 = vmul.f32 %v971, 0.0625
      %v976 = vsub.f32 %v945, %v972
      %v977 = vsub.f32 %v946, %v973
      %v978 = vsub.f32 %v947, %v974
      %v979 = vsub.f32 %v948, %v975
      %v980 = vmul.f32 %v976, %v953
      %v981 = vmul.f32 %v977, %v953
      %v982 = vmul.f32 %v978, %v953
      %v983 = vmul.f32 %v979, %v953
      %v984 = vmul.f32 %v980, %v980
      %v985 = vmul.f32 %v981, %v981
      %v986 = vmul.f32 %v982, %v982
      %v987 = vmul.f32 %v983, %v983
      %v988 = vsel %vm959, %v984, 0.0
      %989 = vadd.xlane.f32.xlu0 %v988
      %v990 = vpop.xlane.xlu0 %989
      %v991 = vsel %vm959, %v985, 0.0
      %992 = vadd.xlane.f32.xlu0 %v991
      %v993 = vpop.xlane.xlu0 %992
      %v994 = vsel %vm959, %v986, 0.0
      %995 = vadd.xlane.f32.xlu0 %v994
      %v996 = vpop.xlane.xlu0 %995
      %v997 = vsel %vm959, %v987, 0.0
      %998 = vadd.xlane.f32.xlu0 %v997
      %v999 = vpop.xlane.xlu0 %998
      %v1000 = vmul.f32 %v990, 0.0625
      %v1001 = vmul.f32 %v993, 0.0625
      %v1002 = vmul.f32 %v996, 0.0625
      %v1003 = vmul.f32 %v999, 0.0625
      %v1004 = vadd.f32 %v1000, 1e-05
      %v1005 = vadd.f32 %v1001, 1e-05
      %v1006 = vadd.f32 %v1002, 1e-05
      %v1007 = vadd.f32 %v1003, 1e-05
      %v1008 = vrsqrt.pop %v1004
      %v1009 = vrsqrt.pop %v1005
      %v1010 = vrsqrt.pop %v1006
      %v1011 = vrsqrt.pop %v1007
      %v1012 = vmul.f32 %v980, %v1008
      %v1013 = vmul.f32 %v981, %v1009
      %v1014 = vmul.f32 %v982, %v1010
      %v1015 = vmul.f32 %v983, %v1011
      %v1016 = vmax.f32 %v1012, 0.0
      %v1017 = vmax.f32 %v1013, 0.0
      %v1018 = vmax.f32 %v1014, 0.0
      %v1019 = vmax.f32 %v1015, 0.0
      %vm1020 = vcmask 338944
      %1021 = vst.msk [vmem:[#allocation2] sm:$0xf] %vm1020, 0
      %1022 = vst.msk [vmem:[#allocation2 + $0x4] sm:$0xf] %vm1020, 0
      %1023 = vst.msk [vmem:[#allocation2 + $0x8] sm:$0xf] %vm1020, 0
      %1024 = vst.msk [vmem:[#allocation2 + $0xc] sm:$0xf] %vm1020, 0
      %v1025 = vpack.c.bf16 %v1017, %v1016
      %v1026 = vpack.c.bf16 %v1019, %v1018
      %v1029 = vunpack.c.l.b16 %v1025
      %v1030 = vunpack.c.h.b16 %v1025
      %v1031 = vunpack.c.l.b16 %v1026
      %v1032 = vunpack.c.h.b16 %v1026
      %v1033 = vpack.c.b16 %v1029, %v1029
      %v1034 = vpack.c.b16 %v1030, %v1030
      %v1035 = vpack.c.b16 %v1031, %v1031
      %v1036 = vpack.c.b16 %v1032, %v1032
      %1037 = vrot.lane.b32.xlu0 %v1033, 7
      %v1038 = vpop.permute.xlu0 %1037
      %1039 = vrot.lane.b32.xlu0 %v1034, 7
      %v1040 = vpop.permute.xlu0 %1039
      %1041 = vrot.lane.b32.xlu0 %v1035, 7
      %v1042 = vpop.permute.xlu0 %1041
      %1043 = vrot.lane.b32.xlu0 %v1036, 7
      %v1044 = vpop.permute.xlu0 %1043
      %vm1049 = vcmask 248888
      %1050 = vst.msk [vmem:[#allocation2] sm:$0xf] %vm1049, %v1038
      %1051 = vst.msk [vmem:[#allocation2 + $0x4] sm:$0xf] %vm1049, %v1040
      %1052 = vst.msk [vmem:[#allocation2 + $0x8] sm:$0xf] %vm1049, %v1042
      %1053 = vst.msk [vmem:[#allocation2 + $0xc] sm:$0xf] %vm1049, %v1044
      %v1054 = vld [vmem:[%s3] sm:$0xff]
      %v1055 = vld [vmem:[%s3 + $0x8] sm:$0xff]
      %v1056 = vld [vmem:[%s3 + $0x10] sm:$0xff]
      %v1057 = vld [vmem:[%s3 + $0x18] sm:$0xff]
      %v1058 = vld [vmem:[%s219] sm:$0xf]
      %v1059 = vld [vmem:[%s219 + $0x4] sm:$0xf]
      %v1060 = vld [vmem:[%s219 + $0x8] sm:$0xf]
      %v1061 = vld [vmem:[%s219 + $0xc] sm:$0xf]
      %v1062 = vunpack.c.l.bf16 %v1058
      %v1063 = vunpack.c.l.bf16 %v1059
      %v1064 = vunpack.c.l.bf16 %v1060
      %v1065 = vunpack.c.l.bf16 %v1061
      %1067 = vset.pattern.permute.xlu0 0
      %1068 = vperm.xlu0 %1067, %v1054
      %v1069 = vpop.permute.xlu0 %1068
      %1072 = vset.pattern.permute.xlu0 0
      %1073 = vperm.xlu0 %1072, %v1055
      %v1074 = vpop.permute.xlu0 %1073
      %1077 = vset.pattern.permute.xlu0 0
      %1078 = vperm.xlu0 %1077, %v1056
      %v1079 = vpop.permute.xlu0 %1078
      %1082 = vset.pattern.permute.xlu0 0
      %1083 = vperm.xlu0 %1082, %v1057
      %v1084 = vpop.permute.xlu0 %1083
      %v1086 = vadd.f32 %v1069, %v1062
      %v1087 = vadd.f32 %v1074, %v1063
      %v1088 = vadd.f32 %v1079, %v1064
      %v1089 = vadd.f32 %v1084, %v1065
      %v1090 = vld [vmem:[%s2] sm:$0xf]
      %v1091 = vld [vmem:[%s2 + $0x4] sm:$0xf]
      %v1092 = vld [vmem:[%s2 + $0x8] sm:$0xf]
      %v1093 = vld [vmem:[%s2 + $0xc] sm:$0xf]
      %v1094 = vld [vmem:[#allocation2] sm:$0xf]
      %v1095 = vld [vmem:[#allocation2 + $0x4] sm:$0xf]
      %v1096 = vld [vmem:[#allocation2 + $0x8] sm:$0xf]
      %v1097 = vld [vmem:[#allocation2 + $0xc] sm:$0xf]
      %v1102 = vunpack.c.l.b16 %v1090
      %v1103 = vunpack.c.l.b16 %v1091
      %v1104 = vunpack.c.l.b16 %v1092
      %v1105 = vunpack.c.l.b16 %v1093
      %v1106 = vpack.c.b16 %v1103, %v1102
      %v1107 = vpack.c.b16 %v1105, %v1104
      %v1112 = vunpack.c.l.b16 %v1094
      %v1113 = vunpack.c.l.b16 %v1095
      %v1114 = vunpack.c.l.b16 %v1096
      %v1115 = vunpack.c.l.b16 %v1097
      %v1116 = vpack.c.b16 %v1113, %v1112
      %v1117 = vpack.c.b16 %v1115, %v1114
      %v1121 = vsel %vm266, %v1106, 0
      %v1124 = vsel %vm266, %v1107, 0
      %1126 = vmatprep.subr.bf16.mxu0 0
      %1127 = vmatpush1.bf16.msra.mxu0 0
      %1128 = vmatprep.subr.bf16.mxu0 0
      %1129 = vmatpush1.bf16.msra.mxu0 0
      %1130 = vmatprep.subr.bf16.mxu0 0
      %1131 = vmatpush1.bf16.msra.mxu0 0
      %1132 = vmatprep.subr.bf16.mxu0 0
      %1133 = vmatpush1.bf16.msra.mxu0 0
      %1134 = vmatprep.subr.bf16.mxu0 0
      %1135 = vmatpush1.bf16.msra.mxu0 0
      %1136 = vmatprep.subr.bf16.mxu0 0
      %1137 = vmatpush1.bf16.msra.mxu0 0
      %1138 = vmatprep.subr.bf16.mxu0 0
      %1139 = vmatpush1.bf16.msra.mxu0 %v1117
      %1140 = vmatprep.subr.bf16.mxu0 0
      %1141 = vmatpush1.bf16.msra.mxu0 %v1116
      %1142 = vmatprep.subr.bf16.mxu0 0
      %1143 = vmatpush2.bf16.msra.mxu0 0
      %1144 = vmatprep.subr.bf16.mxu0 0
      %1145 = vmatpush2.bf16.msra.mxu0 0
      %1146 = vmatprep.subr.bf16.mxu0 0
      %1147 = vmatpush2.bf16.msra.mxu0 0
      %1148 = vmatprep.subr.bf16.mxu0 0
      %1149 = vmatpush2.bf16.msra.mxu0 0
      %1150 = vmatprep.subr.bf16.mxu0 0
      %1151 = vmatpush2.bf16.msra.mxu0 0
      %1152 = vmatprep.subr.bf16.mxu0 0
      %1153 = vmatpush2.bf16.msra.mxu0 0
      %1154 = vmatprep.subr.bf16.mxu0 0
      %1155 = vmatpush2.bf16.msra.mxu0 0
      %1156 = vmatprep.subr.bf16.mxu0 0
      %1157 = vmatpush2.bf16.msra.mxu0 0
      %1158 = vmatprep.mubr.bf16.mxu0 0
      %1159 = vmatmul.mubr.bf16.gmra.mxu0 %v1121
      %v1160 = vpop.f32.mrf.mxu0
      %v1161 = vadd.f32 0.0, %v1160
      %v1162 = vpop.f32.mrf.mxu0
      %v1163 = vpop.f32.mrf.mxu0
      %v1164 = vadd.f32 0.0, %v1163
      %v1165 = vpop.f32.mrf.mxu0
      %1166 = vmatprep.mubr.bf16.mxu0 0
      %1167 = vmatmul.mubr.bf16.gmra.mxu0 %v1124
      %v1168 = vpop.f32.mrf.mxu0
      %v1169 = vadd.f32 0.0, %v1168
      %v1170 = vpop.f32.mrf.mxu0
      %v1171 = vpop.f32.mrf.mxu0
      %v1172 = vadd.f32 0.0, %v1171
      %v1173 = vpop.f32.mrf.mxu0
      %1174 = vdwg.mxu0
      %1179 = vrot.lane.b32.xlu0 %v1161, 7
      %v1180 = vpop.permute.xlu0 %1179
      %1181 = vrot.lane.b32.xlu0 %v1164, 7
      %v1182 = vpop.permute.xlu0 %1181
      %1183 = vrot.lane.b32.xlu0 %v1169, 7
      %v1184 = vpop.permute.xlu0 %1183
      %1185 = vrot.lane.b32.xlu0 %v1172, 7
      %v1186 = vpop.permute.xlu0 %1185
      %v1191 = vadd.f32 %v1086, %v1180
      %v1192 = vadd.f32 %v1087, %v1182
      %v1193 = vadd.f32 %v1088, %v1184
      %v1194 = vadd.f32 %v1089, %v1186
      %s1195 = scalar_lea.vmem %s2, 16
      %v1196 = vld [vmem:[%s1195] sm:$0xf]
      %v1197 = vld [vmem:[%s1195 + $0x4] sm:$0xf]
      %v1198 = vld [vmem:[%s1195 + $0x8] sm:$0xf]
      %v1199 = vld [vmem:[%s1195 + $0xc] sm:$0xf]
      %v1204 = vunpack.c.l.b16 %v1196
      %v1205 = vunpack.c.l.b16 %v1197
      %v1206 = vunpack.c.l.b16 %v1198
      %v1207 = vunpack.c.l.b16 %v1199
      %v1208 = vpack.c.b16 %v1205, %v1204
      %v1209 = vpack.c.b16 %v1207, %v1206
      %1210 = vrot.lane.b32.xlu0 %v1116, 127
      %v1211 = vpop.permute.xlu0 %1210
      %1212 = vrot.lane.b32.xlu0 %v1117, 127
      %v1213 = vpop.permute.xlu0 %1212
      %v1217 = vsel %vm266, %v1208, 0
      %v1220 = vsel %vm266, %v1209, 0
      %1222 = vmatprep.subr.bf16.mxu0 0
      %1223 = vmatpush1.bf16.msra.mxu0 0
      %1224 = vmatprep.subr.bf16.mxu0 0
      %1225 = vmatpush1.bf16.msra.mxu0 0
      %1226 = vmatprep.subr.bf16.mxu0 0
      %1227 = vmatpush1.bf16.msra.mxu0 0
      %1228 = vmatprep.subr.bf16.mxu0 0
      %1229 = vmatpush1.bf16.msra.mxu0 0
      %1230 = vmatprep.subr.bf16.mxu0 0
      %1231 = vmatpush1.bf16.msra.mxu0 0
      %1232 = vmatprep.subr.bf16.mxu0 0
      %1233 = vmatpush1.bf16.msra.mxu0 0
      %1234 = vmatprep.subr.bf16.mxu0 0
      %1235 = vmatpush1.bf16.msra.mxu0 %v1213
      %1236 = vmatprep.subr.bf16.mxu0 0
      %1237 = vmatpush1.bf16.msra.mxu0 %v1211
      %1238 = vmatprep.subr.bf16.mxu0 0
      %1239 = vmatpush2.bf16.msra.mxu0 0
      %1240 = vmatprep.subr.bf16.mxu0 0
      %1241 = vmatpush2.bf16.msra.mxu0 0
      %1242 = vmatprep.subr.bf16.mxu0 0
      %1243 = vmatpush2.bf16.msra.mxu0 0
      %1244 = vmatprep.subr.bf16.mxu0 0
      %1245 = vmatpush2.bf16.msra.mxu0 0
      %1246 = vmatprep.subr.bf16.mxu0 0
      %1247 = vmatpush2.bf16.msra.mxu0 0
      %1248 = vmatprep.subr.bf16.mxu0 0
      %1249 = vmatpush2.bf16.msra.mxu0 0
      %1250 = vmatprep.subr.bf16.mxu0 0
      %1251 = vmatpush2.bf16.msra.mxu0 0
      %1252 = vmatprep.subr.bf16.mxu0 0
      %1253 = vmatpush2.bf16.msra.mxu0 0
      %1254 = vmatprep.mubr.bf16.mxu0 0
      %1255 = vmatmul.mubr.bf16.gmra.mxu0 %v1217
      %v1256 = vpop.f32.mrf.mxu0
      %v1257 = vadd.f32 0.0, %v1256
      %v1258 = vpop.f32.mrf.mxu0
      %v1259 = vpop.f32.mrf.mxu0
      %v1260 = vadd.f32 0.0, %v1259
      %v1261 = vpop.f32.mrf.mxu0
      %1262 = vmatprep.mubr.bf16.mxu0 0
      %1263 = vmatmul.mubr.bf16.gmra.mxu0 %v1220
      %v1264 = vpop.f32.mrf.mxu0
      %v1265 = vadd.f32 0.0, %v1264
      %v1266 = vpop.f32.mrf.mxu0
      %v1267 = vpop.f32.mrf.mxu0
      %v1268 = vadd.f32 0.0, %v1267
      %v1269 = vpop.f32.mrf.mxu0
      %1270 = vdwg.mxu0
      %1275 = vrot.lane.b32.xlu0 %v1257, 7
      %v1276 = vpop.permute.xlu0 %1275
      %1277 = vrot.lane.b32.xlu0 %v1260, 7
      %v1278 = vpop.permute.xlu0 %1277
      %1279 = vrot.lane.b32.xlu0 %v1265, 7
      %v1280 = vpop.permute.xlu0 %1279
      %1281 = vrot.lane.b32.xlu0 %v1268, 7
      %v1282 = vpop.permute.xlu0 %1281
      %v1287 = vadd.f32 %v1191, %v1276
      %v1288 = vadd.f32 %v1192, %v1278
      %v1289 = vadd.f32 %v1193, %v1280
      %v1290 = vadd.f32 %v1194, %v1282
      %s1291 = scalar_lea.vmem %s2, 32
      %v1292 = vld [vmem:[%s1291] sm:$0xf]
      %v1293 = vld [vmem:[%s1291 + $0x4] sm:$0xf]
      %v1294 = vld [vmem:[%s1291 + $0x8] sm:$0xf]
      %v1295 = vld [vmem:[%s1291 + $0xc] sm:$0xf]
      %v1300 = vunpack.c.l.b16 %v1292
      %v1301 = vunpack.c.l.b16 %v1293
      %v1302 = vunpack.c.l.b16 %v1294
      %v1303 = vunpack.c.l.b16 %v1295
      %v1304 = vpack.c.b16 %v1301, %v1300
      %v1305 = vpack.c.b16 %v1303, %v1302
      %1306 = vrot.lane.b32.xlu0 %v1116, 126
      %v1307 = vpop.permute.xlu0 %1306
      %1308 = vrot.lane.b32.xlu0 %v1117, 126
      %v1309 = vpop.permute.xlu0 %1308
      %v1313 = vsel %vm266, %v1304, 0
      %v1316 = vsel %vm266, %v1305, 0
      %1318 = vmatprep.subr.bf16.mxu0 0
      %1319 = vmatpush1.bf16.msra.mxu0 0
      %1320 = vmatprep.subr.bf16.mxu0 0
      %1321 = vmatpush1.bf16.msra.mxu0 0
      %1322 = vmatprep.subr.bf16.mxu0 0
      %1323 = vmatpush1.bf16.msra.mxu0 0
      %1324 = vmatprep.subr.bf16.mxu0 0
      %1325 = vmatpush1.bf16.msra.mxu0 0
      %1326 = vmatprep.subr.bf16.mxu0 0
      %1327 = vmatpush1.bf16.msra.mxu0 0
      %1328 = vmatprep.subr.bf16.mxu0 0
      %1329 = vmatpush1.bf16.msra.mxu0 0
      %1330 = vmatprep.subr.bf16.mxu0 0
      %1331 = vmatpush1.bf16.msra.mxu0 %v1309
      %1332 = vmatprep.subr.bf16.mxu0 0
      %1333 = vmatpush1.bf16.msra.mxu0 %v1307
      %1334 = vmatprep.subr.bf16.mxu0 0
      %1335 = vmatpush2.bf16.msra.mxu0 0
      %1336 = vmatprep.subr.bf16.mxu0 0
      %1337 = vmatpush2.bf16.msra.mxu0 0
      %1338 = vmatprep.subr.bf16.mxu0 0
      %1339 = vmatpush2.bf16.msra.mxu0 0
      %1340 = vmatprep.subr.bf16.mxu0 0
      %1341 = vmatpush2.bf16.msra.mxu0 0
      %1342 = vmatprep.subr.bf16.mxu0 0
      %1343 = vmatpush2.bf16.msra.mxu0 0
      %1344 = vmatprep.subr.bf16.mxu0 0
      %1345 = vmatpush2.bf16.msra.mxu0 0
      %1346 = vmatprep.subr.bf16.mxu0 0
      %1347 = vmatpush2.bf16.msra.mxu0 0
      %1348 = vmatprep.subr.bf16.mxu0 0
      %1349 = vmatpush2.bf16.msra.mxu0 0
      %1350 = vmatprep.mubr.bf16.mxu0 0
      %1351 = vmatmul.mubr.bf16.gmra.mxu0 %v1313
      %v1352 = vpop.f32.mrf.mxu0
      %v1353 = vadd.f32 0.0, %v1352
      %v1354 = vpop.f32.mrf.mxu0
      %v1355 = vpop.f32.mrf.mxu0
      %v1356 = vadd.f32 0.0, %v1355
      %v1357 = vpop.f32.mrf.mxu0
      %1358 = vmatprep.mubr.bf16.mxu0 0
      %1359 = vmatmul.mubr.bf16.gmra.mxu0 %v1316
      %v1360 = vpop.f32.mrf.mxu0
      %v1361 = vadd.f32 0.0, %v1360
      %v1362 = vpop.f32.mrf.mxu0
      %v1363 = vpop.f32.mrf.mxu0
      %v1364 = vadd.f32 0.0, %v1363
      %v1365 = vpop.f32.mrf.mxu0
      %1366 = vdwg.mxu0
      %1371 = vrot.lane.b32.xlu0 %v1353, 7
      %v1372 = vpop.permute.xlu0 %1371
      %1373 = vrot.lane.b32.xlu0 %v1356, 7
      %v1374 = vpop.permute.xlu0 %1373
      %1375 = vrot.lane.b32.xlu0 %v1361, 7
      %v1376 = vpop.permute.xlu0 %1375
      %1377 = vrot.lane.b32.xlu0 %v1364, 7
      %v1378 = vpop.permute.xlu0 %1377
      %v1383 = vadd.f32 %v1287, %v1372
      %v1384 = vadd.f32 %v1288, %v1374
      %v1385 = vadd.f32 %v1289, %v1376
      %v1386 = vadd.f32 %v1290, %v1378
      %s1387 = scalar_lea.vmem %s2, 48
      %v1388 = vld [vmem:[%s1387] sm:$0xf]
      %v1389 = vld [vmem:[%s1387 + $0x4] sm:$0xf]
      %v1390 = vld [vmem:[%s1387 + $0x8] sm:$0xf]
      %v1391 = vld [vmem:[%s1387 + $0xc] sm:$0xf]
      %v1396 = vunpack.c.l.b16 %v1388
      %v1397 = vunpack.c.l.b16 %v1389
      %v1398 = vunpack.c.l.b16 %v1390
      %v1399 = vunpack.c.l.b16 %v1391
      %v1400 = vpack.c.b16 %v1397, %v1396
      %v1401 = vpack.c.b16 %v1399, %v1398
      %1402 = vrot.lane.b32.xlu0 %v1116, 122
      %v1403 = vpop.permute.xlu0 %1402
      %1404 = vrot.lane.b32.xlu0 %v1117, 122
      %v1405 = vpop.permute.xlu0 %1404
      %v1409 = vsel %vm266, %v1400, 0
      %v1412 = vsel %vm266, %v1401, 0
      %1414 = vmatprep.subr.bf16.mxu0 0
      %1415 = vmatpush1.bf16.msra.mxu0 0
      %1416 = vmatprep.subr.bf16.mxu0 0
      %1417 = vmatpush1.bf16.msra.mxu0 0
      %1418 = vmatprep.subr.bf16.mxu0 0
      %1419 = vmatpush1.bf16.msra.mxu0 0
      %1420 = vmatprep.subr.bf16.mxu0 0
      %1421 = vmatpush1.bf16.msra.mxu0 0
      %1422 = vmatprep.subr.bf16.mxu0 0
      %1423 = vmatpush1.bf16.msra.mxu0 0
      %1424 = vmatprep.subr.bf16.mxu0 0
      %1425 = vmatpush1.bf16.msra.mxu0 0
      %1426 = vmatprep.subr.bf16.mxu0 0
      %1427 = vmatpush1.bf16.msra.mxu0 %v1405
      %1428 = vmatprep.subr.bf16.mxu0 0
      %1429 = vmatpush1.bf16.msra.mxu0 %v1403
      %1430 = vmatprep.subr.bf16.mxu0 0
      %1431 = vmatpush2.bf16.msra.mxu0 0
      %1432 = vmatprep.subr.bf16.mxu0 0
      %1433 = vmatpush2.bf16.msra.mxu0 0
      %1434 = vmatprep.subr.bf16.mxu0 0
      %1435 = vmatpush2.bf16.msra.mxu0 0
      %1436 = vmatprep.subr.bf16.mxu0 0
      %1437 = vmatpush2.bf16.msra.mxu0 0
      %1438 = vmatprep.subr.bf16.mxu0 0
      %1439 = vmatpush2.bf16.msra.mxu0 0
      %1440 = vmatprep.subr.bf16.mxu0 0
      %1441 = vmatpush2.bf16.msra.mxu0 0
      %1442 = vmatprep.subr.bf16.mxu0 0
      %1443 = vmatpush2.bf16.msra.mxu0 0
      %1444 = vmatprep.subr.bf16.mxu0 0
      %1445 = vmatpush2.bf16.msra.mxu0 0
      %1446 = vmatprep.mubr.bf16.mxu0 0
      %1447 = vmatmul.mubr.bf16.gmra.mxu0 %v1409
      %v1448 = vpop.f32.mrf.mxu0
      %v1449 = vadd.f32 0.0, %v1448
      %v1450 = vpop.f32.mrf.mxu0
      %v1451 = vpop.f32.mrf.mxu0
      %v1452 = vadd.f32 0.0, %v1451
      %v1453 = vpop.f32.mrf.mxu0
      %1454 = vmatprep.mubr.bf16.mxu0 0
      %1455 = vmatmul.mubr.bf16.gmra.mxu0 %v1412
      %v1456 = vpop.f32.mrf.mxu0
      %v1457 = vadd.f32 0.0, %v1456
      %v1458 = vpop.f32.mrf.mxu0
      %v1459 = vpop.f32.mrf.mxu0
      %v1460 = vadd.f32 0.0, %v1459
      %v1461 = vpop.f32.mrf.mxu0
      %1462 = vdwg.mxu0
      %1467 = vrot.lane.b32.xlu0 %v1449, 7
      %v1468 = vpop.permute.xlu0 %1467
      %1469 = vrot.lane.b32.xlu0 %v1452, 7
      %v1470 = vpop.permute.xlu0 %1469
      %1471 = vrot.lane.b32.xlu0 %v1457, 7
      %v1472 = vpop.permute.xlu0 %1471
      %1473 = vrot.lane.b32.xlu0 %v1460, 7
      %v1474 = vpop.permute.xlu0 %1473
      %v1479 = vadd.f32 %v1383, %v1468
      %v1480 = vadd.f32 %v1384, %v1470
      %v1481 = vadd.f32 %v1385, %v1472
      %v1482 = vadd.f32 %v1386, %v1474
      %s1483 = scalar_lea.vmem %s2, 64
      %v1484 = vld [vmem:[%s1483] sm:$0xf]
      %v1485 = vld [vmem:[%s1483 + $0x4] sm:$0xf]
      %v1486 = vld [vmem:[%s1483 + $0x8] sm:$0xf]
      %v1487 = vld [vmem:[%s1483 + $0xc] sm:$0xf]
      %v1492 = vunpack.c.l.b16 %v1484
      %v1493 = vunpack.c.l.b16 %v1485
      %v1494 = vunpack.c.l.b16 %v1486
      %v1495 = vunpack.c.l.b16 %v1487
      %v1496 = vpack.c.b16 %v1493, %v1492
      %v1497 = vpack.c.b16 %v1495, %v1494
      %1498 = vrot.lane.b32.xlu0 %v1116, 121
      %v1499 = vpop.permute.xlu0 %1498
      %1500 = vrot.lane.b32.xlu0 %v1117, 121
      %v1501 = vpop.permute.xlu0 %1500
      %v1505 = vsel %vm266, %v1496, 0
      %v1508 = vsel %vm266, %v1497, 0
      %1510 = vmatprep.subr.bf16.mxu0 0
      %1511 = vmatpush1.bf16.msra.mxu0 0
      %1512 = vmatprep.subr.bf16.mxu0 0
      %1513 = vmatpush1.bf16.msra.mxu0 0
      %1514 = vmatprep.subr.bf16.mxu0 0
      %1515 = vmatpush1.bf16.msra.mxu0 0
      %1516 = vmatprep.subr.bf16.mxu0 0
      %1517 = vmatpush1.bf16.msra.mxu0 0
      %1518 = vmatprep.subr.bf16.mxu0 0
      %1519 = vmatpush1.bf16.msra.mxu0 0
      %1520 = vmatprep.subr.bf16.mxu0 0
      %1521 = vmatpush1.bf16.msra.mxu0 0
      %1522 = vmatprep.subr.bf16.mxu0 0
      %1523 = vmatpush1.bf16.msra.mxu0 %v1501
      %1524 = vmatprep.subr.bf16.mxu0 0
      %1525 = vmatpush1.bf16.msra.mxu0 %v1499
      %1526 = vmatprep.subr.bf16.mxu0 0
      %1527 = vmatpush2.bf16.msra.mxu0 0
      %1528 = vmatprep.subr.bf16.mxu0 0
      %1529 = vmatpush2.bf16.msra.mxu0 0
      %1530 = vmatprep.subr.bf16.mxu0 0
      %1531 = vmatpush2.bf16.msra.mxu0 0
      %1532 = vmatprep.subr.bf16.mxu0 0
      %1533 = vmatpush2.bf16.msra.mxu0 0
      %1534 = vmatprep.subr.bf16.mxu0 0
      %1535 = vmatpush2.bf16.msra.mxu0 0
      %1536 = vmatprep.subr.bf16.mxu0 0
      %1537 = vmatpush2.bf16.msra.mxu0 0
      %1538 = vmatprep.subr.bf16.mxu0 0
      %1539 = vmatpush2.bf16.msra.mxu0 0
      %1540 = vmatprep.subr.bf16.mxu0 0
      %1541 = vmatpush2.bf16.msra.mxu0 0
      %1542 = vmatprep.mubr.bf16.mxu0 0
      %1543 = vmatmul.mubr.bf16.gmra.mxu0 %v1505
      %v1544 = vpop.f32.mrf.mxu0
      %v1545 = vadd.f32 0.0, %v1544
      %v1546 = vpop.f32.mrf.mxu0
      %v1547 = vpop.f32.mrf.mxu0
      %v1548 = vadd.f32 0.0, %v1547
      %v1549 = vpop.f32.mrf.mxu0
      %1550 = vmatprep.mubr.bf16.mxu0 0
      %1551 = vmatmul.mubr.bf16.gmra.mxu0 %v1508
      %v1552 = vpop.f32.mrf.mxu0
      %v1553 = vadd.f32 0.0, %v1552
      %v1554 = vpop.f32.mrf.mxu0
      %v1555 = vpop.f32.mrf.mxu0
      %v1556 = vadd.f32 0.0, %v1555
      %v1557 = vpop.f32.mrf.mxu0
      %1558 = vdwg.mxu0
      %1563 = vrot.lane.b32.xlu0 %v1545, 7
      %v1564 = vpop.permute.xlu0 %1563
      %1565 = vrot.lane.b32.xlu0 %v1548, 7
      %v1566 = vpop.permute.xlu0 %1565
      %1567 = vrot.lane.b32.xlu0 %v1553, 7
      %v1568 = vpop.permute.xlu0 %1567
      %1569 = vrot.lane.b32.xlu0 %v1556, 7
      %v1570 = vpop.permute.xlu0 %1569
      %v1575 = vadd.f32 %v1479, %v1564
      %v1576 = vadd.f32 %v1480, %v1566
      %v1577 = vadd.f32 %v1481, %v1568
      %v1578 = vadd.f32 %v1482, %v1570
      %s1579 = scalar_lea.vmem %s2, 80
      %v1580 = vld [vmem:[%s1579] sm:$0xf]
      %v1581 = vld [vmem:[%s1579 + $0x4] sm:$0xf]
      %v1582 = vld [vmem:[%s1579 + $0x8] sm:$0xf]
      %v1583 = vld [vmem:[%s1579 + $0xc] sm:$0xf]
      %v1588 = vunpack.c.l.b16 %v1580
      %v1589 = vunpack.c.l.b16 %v1581
      %v1590 = vunpack.c.l.b16 %v1582
      %v1591 = vunpack.c.l.b16 %v1583
      %v1592 = vpack.c.b16 %v1589, %v1588
      %v1593 = vpack.c.b16 %v1591, %v1590
      %1594 = vrot.lane.b32.xlu0 %v1116, 120
      %v1595 = vpop.permute.xlu0 %1594
      %1596 = vrot.lane.b32.xlu0 %v1117, 120
      %v1597 = vpop.permute.xlu0 %1596
      %v1601 = vsel %vm266, %v1592, 0
      %v1604 = vsel %vm266, %v1593, 0
      %1606 = vmatprep.subr.bf16.mxu0 0
      %1607 = vmatpush1.bf16.msra.mxu0 0
      %1608 = vmatprep.subr.bf16.mxu0 0
      %1609 = vmatpush1.bf16.msra.mxu0 0
      %1610 = vmatprep.subr.bf16.mxu0 0
      %1611 = vmatpush1.bf16.msra.mxu0 0
      %1612 = vmatprep.subr.bf16.mxu0 0
      %1613 = vmatpush1.bf16.msra.mxu0 0
      %1614 = vmatprep.subr.bf16.mxu0 0
      %1615 = vmatpush1.bf16.msra.mxu0 0
      %1616 = vmatprep.subr.bf16.mxu0 0
      %1617 = vmatpush1.bf16.msra.mxu0 0
      %1618 = vmatprep.subr.bf16.mxu0 0
      %1619 = vmatpush1.bf16.msra.mxu0 %v1597
      %1620 = vmatprep.subr.bf16.mxu0 0
      %1621 = vmatpush1.bf16.msra.mxu0 %v1595
      %1622 = vmatprep.subr.bf16.mxu0 0
      %1623 = vmatpush2.bf16.msra.mxu0 0
      %1624 = vmatprep.subr.bf16.mxu0 0
      %1625 = vmatpush2.bf16.msra.mxu0 0
      %1626 = vmatprep.subr.bf16.mxu0 0
      %1627 = vmatpush2.bf16.msra.mxu0 0
      %1628 = vmatprep.subr.bf16.mxu0 0
      %1629 = vmatpush2.bf16.msra.mxu0 0
      %1630 = vmatprep.subr.bf16.mxu0 0
      %1631 = vmatpush2.bf16.msra.mxu0 0
      %1632 = vmatprep.subr.bf16.mxu0 0
      %1633 = vmatpush2.bf16.msra.mxu0 0
      %1634 = vmatprep.subr.bf16.mxu0 0
      %1635 = vmatpush2.bf16.msra.mxu0 0
      %1636 = vmatprep.subr.bf16.mxu0 0
      %1637 = vmatpush2.bf16.msra.mxu0 0
      %1638 = vmatprep.mubr.bf16.mxu0 0
      %1639 = vmatmul.mubr.bf16.gmra.mxu0 %v1601
      %v1640 = vpop.f32.mrf.mxu0
      %v1641 = vadd.f32 0.0, %v1640
      %v1642 = vpop.f32.mrf.mxu0
      %v1643 = vpop.f32.mrf.mxu0
      %v1644 = vadd.f32 0.0, %v1643
      %v1645 = vpop.f32.mrf.mxu0
      %1646 = vmatprep.mubr.bf16.mxu0 0
      %1647 = vmatmul.mubr.bf16.gmra.mxu0 %v1604
      %v1648 = vpop.f32.mrf.mxu0
      %v1649 = vadd.f32 0.0, %v1648
      %v1650 = vpop.f32.mrf.mxu0
      %v1651 = vpop.f32.mrf.mxu0
      %v1652 = vadd.f32 0.0, %v1651
      %v1653 = vpop.f32.mrf.mxu0
      %1654 = vdwg.mxu0
      %1659 = vrot.lane.b32.xlu0 %v1641, 7
      %v1660 = vpop.permute.xlu0 %1659
      %1661 = vrot.lane.b32.xlu0 %v1644, 7
      %v1662 = vpop.permute.xlu0 %1661
      %1663 = vrot.lane.b32.xlu0 %v1649, 7
      %v1664 = vpop.permute.xlu0 %1663
      %1665 = vrot.lane.b32.xlu0 %v1652, 7
      %v1666 = vpop.permute.xlu0 %1665
      %v1671 = vadd.f32 %v1575, %v1660
      %v1672 = vadd.f32 %v1576, %v1662
      %v1673 = vadd.f32 %v1577, %v1664
      %v1674 = vadd.f32 %v1578, %v1666
      %s1675 = scalar_lea.vmem %s2, 96
      %v1676 = vld [vmem:[%s1675] sm:$0xf]
      %v1677 = vld [vmem:[%s1675 + $0x4] sm:$0xf]
      %v1678 = vld [vmem:[%s1675 + $0x8] sm:$0xf]
      %v1679 = vld [vmem:[%s1675 + $0xc] sm:$0xf]
      %v1684 = vunpack.c.l.b16 %v1676
      %v1685 = vunpack.c.l.b16 %v1677
      %v1686 = vunpack.c.l.b16 %v1678
      %v1687 = vunpack.c.l.b16 %v1679
      %v1688 = vpack.c.b16 %v1685, %v1684
      %v1689 = vpack.c.b16 %v1687, %v1686
      %1690 = vrot.lane.b32.xlu0 %v1116, 116
      %v1691 = vpop.permute.xlu0 %1690
      %1692 = vrot.lane.b32.xlu0 %v1117, 116
      %v1693 = vpop.permute.xlu0 %1692
      %v1697 = vsel %vm266, %v1688, 0
      %v1700 = vsel %vm266, %v1689, 0
      %1702 = vmatprep.subr.bf16.mxu0 0
      %1703 = vmatpush1.bf16.msra.mxu0 0
      %1704 = vmatprep.subr.bf16.mxu0 0
      %1705 = vmatpush1.bf16.msra.mxu0 0
      %1706 = vmatprep.subr.bf16.mxu0 0
      %1707 = vmatpush1.bf16.msra.mxu0 0
      %1708 = vmatprep.subr.bf16.mxu0 0
      %1709 = vmatpush1.bf16.msra.mxu0 0
      %1710 = vmatprep.subr.bf16.mxu0 0
      %1711 = vmatpush1.bf16.msra.mxu0 0
      %1712 = vmatprep.subr.bf16.mxu0 0
      %1713 = vmatpush1.bf16.msra.mxu0 0
      %1714 = vmatprep.subr.bf16.mxu0 0
      %1715 = vmatpush1.bf16.msra.mxu0 %v1693
      %1716 = vmatprep.subr.bf16.mxu0 0
      %1717 = vmatpush1.bf16.msra.mxu0 %v1691
      %1718 = vmatprep.subr.bf16.mxu0 0
      %1719 = vmatpush2.bf16.msra.mxu0 0
      %1720 = vmatprep.subr.bf16.mxu0 0
      %1721 = vmatpush2.bf16.msra.mxu0 0
      %1722 = vmatprep.subr.bf16.mxu0 0
      %1723 = vmatpush2.bf16.msra.mxu0 0
      %1724 = vmatprep.subr.bf16.mxu0 0
      %1725 = vmatpush2.bf16.msra.mxu0 0
      %1726 = vmatprep.subr.bf16.mxu0 0
      %1727 = vmatpush2.bf16.msra.mxu0 0
      %1728 = vmatprep.subr.bf16.mxu0 0
      %1729 = vmatpush2.bf16.msra.mxu0 0
      %1730 = vmatprep.subr.bf16.mxu0 0
      %1731 = vmatpush2.bf16.msra.mxu0 0
      %1732 = vmatprep.subr.bf16.mxu0 0
      %1733 = vmatpush2.bf16.msra.mxu0 0
      %1734 = vmatprep.mubr.bf16.mxu0 0
      %1735 = vmatmul.mubr.bf16.gmra.mxu0 %v1697
      %v1736 = vpop.f32.mrf.mxu0
      %v1737 = vadd.f32 0.0, %v1736
      %v1738 = vpop.f32.mrf.mxu0
      %v1739 = vpop.f32.mrf.mxu0
      %v1740 = vadd.f32 0.0, %v1739
      %v1741 = vpop.f32.mrf.mxu0
      %1742 = vmatprep.mubr.bf16.mxu0 0
      %1743 = vmatmul.mubr.bf16.gmra.mxu0 %v1700
      %v1744 = vpop.f32.mrf.mxu0
      %v1745 = vadd.f32 0.0, %v1744
      %v1746 = vpop.f32.mrf.mxu0
      %v1747 = vpop.f32.mrf.mxu0
      %v1748 = vadd.f32 0.0, %v1747
      %v1749 = vpop.f32.mrf.mxu0
      %1750 = vdwg.mxu0
      %1755 = vrot.lane.b32.xlu0 %v1737, 7
      %v1756 = vpop.permute.xlu0 %1755
      %1757 = vrot.lane.b32.xlu0 %v1740, 7
      %v1758 = vpop.permute.xlu0 %1757
      %1759 = vrot.lane.b32.xlu0 %v1745, 7
      %v1760 = vpop.permute.xlu0 %1759
      %1761 = vrot.lane.b32.xlu0 %v1748, 7
      %v1762 = vpop.permute.xlu0 %1761
      %v1767 = vadd.f32 %v1671, %v1756
      %v1768 = vadd.f32 %v1672, %v1758
      %v1769 = vadd.f32 %v1673, %v1760
      %v1770 = vadd.f32 %v1674, %v1762
      %s1771 = scalar_lea.vmem %s2, 112
      %v1772 = vld [vmem:[%s1771] sm:$0xf]
      %v1773 = vld [vmem:[%s1771 + $0x4] sm:$0xf]
      %v1774 = vld [vmem:[%s1771 + $0x8] sm:$0xf]
      %v1775 = vld [vmem:[%s1771 + $0xc] sm:$0xf]
      %v1780 = vunpack.c.l.b16 %v1772
      %v1781 = vunpack.c.l.b16 %v1773
      %v1782 = vunpack.c.l.b16 %v1774
      %v1783 = vunpack.c.l.b16 %v1775
      %v1784 = vpack.c.b16 %v1781, %v1780
      %v1785 = vpack.c.b16 %v1783, %v1782
      %1786 = vrot.lane.b32.xlu0 %v1116, 115
      %v1787 = vpop.permute.xlu0 %1786
      %1788 = vrot.lane.b32.xlu0 %v1117, 115
      %v1789 = vpop.permute.xlu0 %1788
      %v1793 = vsel %vm266, %v1784, 0
      %v1796 = vsel %vm266, %v1785, 0
      %1798 = vmatprep.subr.bf16.mxu0 0
      %1799 = vmatpush1.bf16.msra.mxu0 0
      %1800 = vmatprep.subr.bf16.mxu0 0
      %1801 = vmatpush1.bf16.msra.mxu0 0
      %1802 = vmatprep.subr.bf16.mxu0 0
      %1803 = vmatpush1.bf16.msra.mxu0 0
      %1804 = vmatprep.subr.bf16.mxu0 0
      %1805 = vmatpush1.bf16.msra.mxu0 0
      %1806 = vmatprep.subr.bf16.mxu0 0
      %1807 = vmatpush1.bf16.msra.mxu0 0
      %1808 = vmatprep.subr.bf16.mxu0 0
      %1809 = vmatpush1.bf16.msra.mxu0 0
      %1810 = vmatprep.subr.bf16.mxu0 0
      %1811 = vmatpush1.bf16.msra.mxu0 %v1789
      %1812 = vmatprep.subr.bf16.mxu0 0
      %1813 = vmatpush1.bf16.msra.mxu0 %v1787
      %1814 = vmatprep.subr.bf16.mxu0 0
      %1815 = vmatpush2.bf16.msra.mxu0 0
      %1816 = vmatprep.subr.bf16.mxu0 0
      %1817 = vmatpush2.bf16.msra.mxu0 0
      %1818 = vmatprep.subr.bf16.mxu0 0
      %1819 = vmatpush2.bf16.msra.mxu0 0
      %1820 = vmatprep.subr.bf16.mxu0 0
      %1821 = vmatpush2.bf16.msra.mxu0 0
      %1822 = vmatprep.subr.bf16.mxu0 0
      %1823 = vmatpush2.bf16.msra.mxu0 0
      %1824 = vmatprep.subr.bf16.mxu0 0
      %1825 = vmatpush2.bf16.msra.mxu0 0
      %1826 = vmatprep.subr.bf16.mxu0 0
      %1827 = vmatpush2.bf16.msra.mxu0 0
      %1828 = vmatprep.subr.bf16.mxu0 0
      %1829 = vmatpush2.bf16.msra.mxu0 0
      %1830 = vmatprep.mubr.bf16.mxu0 0
      %1831 = vmatmul.mubr.bf16.gmra.mxu0 %v1793
      %v1832 = vpop.f32.mrf.mxu0
      %v1833 = vadd.f32 0.0, %v1832
      %v1834 = vpop.f32.mrf.mxu0
      %v1835 = vpop.f32.mrf.mxu0
      %v1836 = vadd.f32 0.0, %v1835
      %v1837 = vpop.f32.mrf.mxu0
      %1838 = vmatprep.mubr.bf16.mxu0 0
      %1839 = vmatmul.mubr.bf16.gmra.mxu0 %v1796
      %v1840 = vpop.f32.mrf.mxu0
      %v1841 = vadd.f32 0.0, %v1840
      %v1842 = vpop.f32.mrf.mxu0
      %v1843 = vpop.f32.mrf.mxu0
      %v1844 = vadd.f32 0.0, %v1843
      %v1845 = vpop.f32.mrf.mxu0
      %1846 = vdwg.mxu0
      %1851 = vrot.lane.b32.xlu0 %v1833, 7
      %v1852 = vpop.permute.xlu0 %1851
      %1853 = vrot.lane.b32.xlu0 %v1836, 7
      %v1854 = vpop.permute.xlu0 %1853
      %1855 = vrot.lane.b32.xlu0 %v1841, 7
      %v1856 = vpop.permute.xlu0 %1855
      %1857 = vrot.lane.b32.xlu0 %v1844, 7
      %v1858 = vpop.permute.xlu0 %1857
      %v1863 = vadd.f32 %v1767, %v1852
      %v1864 = vadd.f32 %v1768, %v1854
      %v1865 = vadd.f32 %v1769, %v1856
      %v1866 = vadd.f32 %v1770, %v1858
      %s1867 = scalar_lea.vmem %s2, 128
      %v1868 = vld [vmem:[%s1867] sm:$0xf]
      %v1869 = vld [vmem:[%s1867 + $0x4] sm:$0xf]
      %v1870 = vld [vmem:[%s1867 + $0x8] sm:$0xf]
      %v1871 = vld [vmem:[%s1867 + $0xc] sm:$0xf]
      %v1876 = vunpack.c.l.b16 %v1868
      %v1877 = vunpack.c.l.b16 %v1869
      %v1878 = vunpack.c.l.b16 %v1870
      %v1879 = vunpack.c.l.b16 %v1871
      %v1880 = vpack.c.b16 %v1877, %v1876
      %v1881 = vpack.c.b16 %v1879, %v1878
      %1882 = vrot.lane.b32.xlu0 %v1116, 114
      %v1883 = vpop.permute.xlu0 %1882
      %1884 = vrot.lane.b32.xlu0 %v1117, 114
      %v1885 = vpop.permute.xlu0 %1884
      %v1889 = vsel %vm266, %v1880, 0
      %v1892 = vsel %vm266, %v1881, 0
      %1894 = vmatprep.subr.bf16.mxu0 0
      %1895 = vmatpush1.bf16.msra.mxu0 0
      %1896 = vmatprep.subr.bf16.mxu0 0
      %1897 = vmatpush1.bf16.msra.mxu0 0
      %1898 = vmatprep.subr.bf16.mxu0 0
      %1899 = vmatpush1.bf16.msra.mxu0 0
      %1900 = vmatprep.subr.bf16.mxu0 0
      %1901 = vmatpush1.bf16.msra.mxu0 0
      %1902 = vmatprep.subr.bf16.mxu0 0
      %1903 = vmatpush1.bf16.msra.mxu0 0
      %1904 = vmatprep.subr.bf16.mxu0 0
      %1905 = vmatpush1.bf16.msra.mxu0 0
      %1906 = vmatprep.subr.bf16.mxu0 0
      %1907 = vmatpush1.bf16.msra.mxu0 %v1885
      %1908 = vmatprep.subr.bf16.mxu0 0
      %1909 = vmatpush1.bf16.msra.mxu0 %v1883
      %1910 = vmatprep.subr.bf16.mxu0 0
      %1911 = vmatpush2.bf16.msra.mxu0 0
      %1912 = vmatprep.subr.bf16.mxu0 0
      %1913 = vmatpush2.bf16.msra.mxu0 0
      %1914 = vmatprep.subr.bf16.mxu0 0
      %1915 = vmatpush2.bf16.msra.mxu0 0
      %1916 = vmatprep.subr.bf16.mxu0 0
      %1917 = vmatpush2.bf16.msra.mxu0 0
      %1918 = vmatprep.subr.bf16.mxu0 0
      %1919 = vmatpush2.bf16.msra.mxu0 0
      %1920 = vmatprep.subr.bf16.mxu0 0
      %1921 = vmatpush2.bf16.msra.mxu0 0
      %1922 = vmatprep.subr.bf16.mxu0 0
      %1923 = vmatpush2.bf16.msra.mxu0 0
      %1924 = vmatprep.subr.bf16.mxu0 0
      %1925 = vmatpush2.bf16.msra.mxu0 0
      %1926 = vmatprep.mubr.bf16.mxu0 0
      %1927 = vmatmul.mubr.bf16.gmra.mxu0 %v1889
      %v1928 = vpop.f32.mrf.mxu0
      %v1929 = vadd.f32 0.0, %v1928
      %v1930 = vpop.f32.mrf.mxu0
      %v1931 = vpop.f32.mrf.mxu0
      %v1932 = vadd.f32 0.0, %v1931
      %v1933 = vpop.f32.mrf.mxu0
      %1934 = vmatprep.mubr.bf16.mxu0 0
      %1935 = vmatmul.mubr.bf16.gmra.mxu0 %v1892
      %v1936 = vpop.f32.mrf.mxu0
      %v1937 = vadd.f32 0.0, %v1936
      %v1938 = vpop.f32.mrf.mxu0
      %v1939 = vpop.f32.mrf.mxu0
      %v1940 = vadd.f32 0.0, %v1939
      %v1941 = vpop.f32.mrf.mxu0
      %1942 = vdwg.mxu0
      %1947 = vrot.lane.b32.xlu0 %v1929, 7
      %v1948 = vpop.permute.xlu0 %1947
      %1949 = vrot.lane.b32.xlu0 %v1932, 7
      %v1950 = vpop.permute.xlu0 %1949
      %1951 = vrot.lane.b32.xlu0 %v1937, 7
      %v1952 = vpop.permute.xlu0 %1951
      %1953 = vrot.lane.b32.xlu0 %v1940, 7
      %v1954 = vpop.permute.xlu0 %1953
      %v1959 = vadd.f32 %v1863, %v1948
      %v1960 = vadd.f32 %v1864, %v1950
      %v1961 = vadd.f32 %v1865, %v1952
      %v1962 = vadd.f32 %v1866, %v1954
      %1963 = vst.msk [vmem:[%s224] sm:$0xf] %vm1020, 0
      %1964 = vst.msk [vmem:[%s224 + $0x4] sm:$0xf] %vm1020, 0
      %1965 = vst.msk [vmem:[%s224 + $0x8] sm:$0xf] %vm1020, 0
      %1966 = vst.msk [vmem:[%s224 + $0xc] sm:$0xf] %vm1020, 0
      %1967 = vrot.lane.b32.xlu0 %v953, 7
      %v1968 = vpop.permute.xlu0 %1967
      %v1970 = vmul.f32 %v1959, %v1968
      %v1971 = vmul.f32 %v1960, %v1968
      %v1972 = vmul.f32 %v1961, %v1968
      %v1973 = vmul.f32 %v1962, %v1968
      %v1974 = vpack.c.bf16 %v1971, %v1970
      %v1975 = vpack.c.bf16 %v1973, %v1972
      %v1978 = vunpack.c.l.b16 %v1974
      %v1979 = vunpack.c.h.b16 %v1974
      %v1980 = vunpack.c.l.b16 %v1975
      %v1981 = vunpack.c.h.b16 %v1975
      %v1982 = vpack.c.b16 %v1978, %v1978
      %v1983 = vpack.c.b16 %v1979, %v1979
      %v1984 = vpack.c.b16 %v1980, %v1980
      %v1985 = vpack.c.b16 %v1981, %v1981
      %1990 = vst.msk [vmem:[%s224] sm:$0xf] %vm1049, %v1982
      %1991 = vst.msk [vmem:[%s224 + $0x4] sm:$0xf] %vm1049, %v1983
      %1992 = vst.msk [vmem:[%s224 + $0x8] sm:$0xf] %vm1049, %v1984
      %1993 = vst.msk [vmem:[%s224 + $0xc] sm:$0xf] %vm1049, %v1985
      %p1994 = scmp.lt.s32.totalorder %s16, 1
      %s1995 = scalar_select %p1994, %s16, 1
      %s1996 = smul.addr %s1995, 4
      %s1997 = smul.addr %s1996, 4
      %s1998 = scalar_lea.vmem %s5, %s1997
      // Predicated region
      $region41: #{_lambda_.10} parent=39 // pred_check
        %p1999 = pneg %p144
      $region42: #{_lambda_.10} parent=39 // pred_check_branch
        %2001 = sbr.rel (%p1999) target = $region44
      $region43: #{_lambda_.10} parent=39 // pred_region
        _
      $region44: #{_lambda_.10} parent=39 // pred_fallthru
        _
    $region40: #{_lambda_.10} parent=5 // pred_fallthru
      _
    %p2002 = scmp.le.s32.totalorder 2, %s11
    // Predicated region
    $region45: #{_lambda_.10} parent=5 // pred_check
      %p2003 = pneg %p2002
    $region46: #{_lambda_.10} parent=5 // pred_check_branch
      %2005 = sbr.rel (%p2003) target = $region48
    $region47: #{_lambda_.10} parent=5 // pred_region
      %s2006 = ssub.s32 %s11, 2
      // Predicated region
      $region49: #{_lambda_.10} parent=47 // pred_check
        %p2007 = pneg %p150
      $region50: #{_lambda_.10} parent=47 // pred_check_branch
        %2009 = sbr.rel (%p2007) target = $region52
      $region51: #{_lambda_.10} parent=47 // pred_region
        %p2010 = scmp.lt.s32.totalorder %s17, 1
        %s2011 = scalar_select %p2010, %s17, 1
        %s2012 = smul.addr %s2011, 4
        %s2013 = smul.addr %s2012, 4
        %s2014 = scalar_lea.vmem %s5, %s2013
      $region52: #{_lambda_.10} parent=47 // pred_fallthru
        _
    $region48: #{_lambda_.10} parent=5 // pred_fallthru
      _
  $region6: #{_lambda_.10} parent=0 // loop_footer
    %s15 = sadd.s32 1, %s11
  $region7: #{_lambda_.10} parent=0 // loop_footer_branch
    %10 = sbr.rel target = $region3
  $region8: #{_lambda_.10} parent=0 // loop_exit
    _

// kernel: _lambda_.13
$region0: #{_lambda_.13}
  #allocation0 [shape = 'u32[]', space=smem, size = 0x4, offset = 0x4, fixed_abs, tag = 'smem constant byte address 0x4 - core index']
  #allocation1 [shape = 'u32[144,128]{1,0:T(1,128)}', space=vmem, size = 0x12000, scoped, tag = 'internal scratch']
  #allocation2 [shape = 'bf16[32,42]{1,0:T(8,128)(2,1)}', space=vmem, size = 0x2000, scoped, tag = 'scratch operand']
  %s0 = inlined_call_operand.vmem [shape: bf16[2,32,42], index: 0, kind: input, shape index: {}]
  %s1 = inlined_call_operand.vmem [shape: bf16[9,32,32], index: 1, kind: input, shape index: {}]
  %s2 = inlined_call_operand.vmem [shape: bf16[9,32,32], index: 2, kind: input, shape index: {}]
  %s3 = inlined_call_operand.vmem [shape: f32[32,1], index: 3, kind: input, shape index: {}]
  %s4 = inlined_call_operand.vmem [shape: f32[1,24], index: 4, kind: input, shape index: {}]
  %s5 = inlined_call_operand.vmem [shape: f32[2,32,42], index: 5, kind: output, shape index: {}]
  %s6 = sld [smem:[#allocation0]]
  $region53: #{_lambda_.13} parent=0
    _
  %s8 = ssub.s32 1, %s6
  %s9 = scalar_select 0, %s8, %s6
  loop: start=0, step=1, limit=4
  $region2: #{_lambda_.13} parent=0 // loop_pre_header
    _
  $region3: #{_lambda_.13} parent=0 // loop_header
    %s11 = sphi 0, %s15
    %p12 = scmp.ge.s32.totalorder %s11, 4
    %s21 = sphi 0, %s23
    %s24 = sphi 0, %s21
    %s25 = sphi 0, %s24
    %s41 = sphi 0, %s25
    %s45 = sphi 0, %s45
    %s47 = sphi 0, %s45
    %s48 = sphi 0, %s47
    %s62 = sphi 0, %s48
    %s66 = sphi 0, %s66
    %s68 = sphi 0, %s66
    %s69 = sphi 0, %s68
    %s83 = sphi 0, %s69
    %s87 = sphi 0, %s87
    %s89 = sphi 0, %s87
    %s90 = sphi 0, %s89
    %s104 = sphi 0, %s90
    %s108 = sphi 0, %s108
    %s110 = sphi 0, %s108
    %s111 = sphi 0, %s110
    %s125 = sphi 0, %s111
    %s131 = sphi 0, %s133
    %s134 = sphi 0, %s131
    %s135 = sphi 0, %s134
    %s151 = sphi 0, %s135
  $region4: #{_lambda_.13} parent=0 // loop_header_branch
    %14 = sbr.rel (%p12) target = $region8
  $region5: #{_lambda_.13} parent=0 // loop_body
    %s16 = ssub.s32 %s11, 1
    %s17 = ssub.s32 %s11, 2
    %s18 = sadd.s32 %s11, 1
    %s19 = ssub.s32 %s11, %s18
    %p20 = scmp.eq.s32.totalorder %s19, 0
    %s22 = sadd.s32 %s21, 1
    %s23 = scalar_select %p20, %s21, %s22
    %p26 = pneg %p20
    %p27 = scmp.eq.s32.totalorder %s11, 1
    %p28 = por %p26, %p27
    %p29 = scmp.ne.s32.totalorder %s21, %s24
    %p30 = scmp.eq.s32.totalorder %s11, 0
    %p31 = por %p29, %p30
    %p32 = scmp.ne.s32.totalorder %s21, %s24
    %p33 = scmp.eq.s32.totalorder %s16, 1
    %p34 = por %p32, %p33
    %p35 = scmp.ne.s32.totalorder %s24, %s25
    %p36 = scmp.eq.s32.totalorder %s16, 0
    %p37 = por %p35, %p36
    %p38 = scmp.ne.s32.totalorder %s24, %s25
    %p39 = scmp.eq.s32.totalorder %s17, 1
    %p40 = por %p38, %p39
    %p42 = scmp.ne.s32.totalorder %s25, %s41
    %p43 = scmp.eq.s32.totalorder %s17, 0
    %p44 = por %p42, %p43
    %s46 = sadd.s32 %s45, 1
    %p49 = scmp.eq.s32.totalorder %s11, 1
    %p50 = scmp.ne.s32.totalorder %s45, %s47
    %p51 = scmp.eq.s32.totalorder %s11, 0
    %p52 = por %p50, %p51
    %p53 = scmp.ne.s32.totalorder %s45, %s47
    %p54 = scmp.eq.s32.totalorder %s16, 1
    %p55 = por %p53, %p54
    %p56 = scmp.ne.s32.totalorder %s47, %s48
    %p57 = scmp.eq.s32.totalorder %s16, 0
    %p58 = por %p56, %p57
    %p59 = scmp.ne.s32.totalorder %s47, %s48
    %p60 = scmp.eq.s32.totalorder %s17, 1
    %p61 = por %p59, %p60
    %p63 = scmp.ne.s32.totalorder %s48, %s62
    %p64 = scmp.eq.s32.totalorder %s17, 0
    %p65 = por %p63, %p64
    %s67 = sadd.s32 %s66, 1
    %p70 = scmp.eq.s32.totalorder %s11, 1
    %p71 = scmp.ne.s32.totalorder %s66, %s68
    %p72 = scmp.eq.s32.totalorder %s11, 0
    %p73 = por %p71, %p72
    %p74 = scmp.ne.s32.totalorder %s66, %s68
    %p75 = scmp.eq.s32.totalorder %s16, 1
    %p76 = por %p74, %p75
    %p77 = scmp.ne.s32.totalorder %s68, %s69
    %p78 = scmp.eq.s32.totalorder %s16, 0
    %p79 = por %p77, %p78
    %p80 = scmp.ne.s32.totalorder %s68, %s69
    %p81 = scmp.eq.s32.totalorder %s17, 1
    %p82 = por %p80, %p81
    %p84 = scmp.ne.s32.totalorder %s69, %s83
    %p85 = scmp.eq.s32.totalorder %s17, 0
    %p86 = por %p84, %p85
    %s88 = sadd.s32 %s87, 1
    %p91 = scmp.eq.s32.totalorder %s11, 1
    %p92 = scmp.ne.s32.totalorder %s87, %s89
    %p93 = scmp.eq.s32.totalorder %s11, 0
    %p94 = por %p92, %p93
    %p95 = scmp.ne.s32.totalorder %s87, %s89
    %p96 = scmp.eq.s32.totalorder %s16, 1
    %p97 = por %p95, %p96
    %p98 = scmp.ne.s32.totalorder %s89, %s90
    %p99 = scmp.eq.s32.totalorder %s16, 0
    %p100 = por %p98, %p99
    %p101 = scmp.ne.s32.totalorder %s89, %s90
    %p102 = scmp.eq.s32.totalorder %s17, 1
    %p103 = por %p101, %p102
    %p105 = scmp.ne.s32.totalorder %s90, %s104
    %p106 = scmp.eq.s32.totalorder %s17, 0
    %p107 = por %p105, %p106
    %s109 = sadd.s32 %s108, 1
    %p112 = scmp.eq.s32.totalorder %s11, 1
    %p113 = scmp.ne.s32.totalorder %s108, %s110
    %p114 = scmp.eq.s32.totalorder %s11, 0
    %p115 = por %p113, %p114
    %p116 = scmp.ne.s32.totalorder %s108, %s110
    %p117 = scmp.eq.s32.totalorder %s16, 1
    %p118 = por %p116, %p117
    %p119 = scmp.ne.s32.totalorder %s110, %s111
    %p120 = scmp.eq.s32.totalorder %s16, 0
    %p121 = por %p119, %p120
    %p122 = scmp.ne.s32.totalorder %s110, %s111
    %p123 = scmp.eq.s32.totalorder %s17, 1
    %p124 = por %p122, %p123
    %p126 = scmp.ne.s32.totalorder %s111, %s125
    %p127 = scmp.eq.s32.totalorder %s17, 0
    %p128 = por %p126, %p127
    %s129 = ssub.s32 %s11, %s18
    %p130 = scmp.eq.s32.totalorder %s129, 0
    %s132 = sadd.s32 %s131, 1
    %s133 = scalar_select %p130, %s131, %s132
    %p136 = pneg %p130
    %p137 = scmp.eq.s32.totalorder %s11, 1
    %p138 = por %p136, %p137
    %p139 = scmp.ne.s32.totalorder %s131, %s134
    %p140 = scmp.eq.s32.totalorder %s11, 0
    %p141 = por %p139, %p140
    %p142 = scmp.ne.s32.totalorder %s131, %s134
    %p143 = scmp.eq.s32.totalorder %s16, 1
    %p144 = por %p142, %p143
    %p145 = scmp.ne.s32.totalorder %s134, %s135
    %p146 = scmp.eq.s32.totalorder %s16, 0
    %p147 = por %p145, %p146
    %p148 = scmp.ne.s32.totalorder %s134, %s135
    %p149 = scmp.eq.s32.totalorder %s17, 1
    %p150 = por %p148, %p149
    %p152 = scmp.ne.s32.totalorder %s135, %s151
    %p153 = scmp.eq.s32.totalorder %s17, 0
    %p154 = por %p152, %p153
    %p155 = scmp.le.s32.totalorder 1, %s11
    %p156 = scmp.lt.s32.totalorder %s11, 3
    %p157 = pnand %p155, %p156
    %p158 = pneg %p157
    // Predicated region
    $region9: #{_lambda_.13} parent=5 // pred_check
      _
    $region10: #{_lambda_.13} parent=5 // pred_check_branch
      %160 = sbr.rel (%p157) target = $region12
    $region11: #{_lambda_.13} parent=5 // pred_region
      %s161 = ssub.s32 %s11, 1
      // Predicated region
      $region13: #{_lambda_.13} parent=11 // pred_check
        %p162 = pneg %p58
      $region14: #{_lambda_.13} parent=11 // pred_check_branch
        %164 = sbr.rel (%p162) target = $region16
      $region15: #{_lambda_.13} parent=11 // pred_region
        _
      $region16: #{_lambda_.13} parent=11 // pred_fallthru
        _
      // Predicated region
      $region17: #{_lambda_.13} parent=11 // pred_check
        %p165 = pneg %p79
      $region18: #{_lambda_.13} parent=11 // pred_check_branch
        %167 = sbr.rel (%p165) target = $region20
      $region19: #{_lambda_.13} parent=11 // pred_region
        _
      $region20: #{_lambda_.13} parent=11 // pred_fallthru
        _
      // Predicated region
      $region21: #{_lambda_.13} parent=11 // pred_check
        %p168 = pneg %p100
      $region22: #{_lambda_.13} parent=11 // pred_check_branch
        %170 = sbr.rel (%p168) target = $region24
      $region23: #{_lambda_.13} parent=11 // pred_region
        _
      $region24: #{_lambda_.13} parent=11 // pred_fallthru
        _
      // Predicated region
      $region25: #{_lambda_.13} parent=11 // pred_check
        %p171 = pneg %p121
      $region26: #{_lambda_.13} parent=11 // pred_check_branch
        %173 = sbr.rel (%p171) target = $region28
      $region27: #{_lambda_.13} parent=11 // pred_region
        _
      $region28: #{_lambda_.13} parent=11 // pred_fallthru
        _
    $region12: #{_lambda_.13} parent=5 // pred_fallthru
      _
    %p174 = scmp.lt.s32.totalorder %s11, 2
    // Predicated region
    $region29: #{_lambda_.13} parent=5 // pred_check
      %p175 = pneg %p174
    $region30: #{_lambda_.13} parent=5 // pred_check_branch
      %177 = sbr.rel (%p175) target = $region32
    $region31: #{_lambda_.13} parent=5 // pred_region
      // Predicated region
      $region33: #{_lambda_.13} parent=31 // pred_check
        %p178 = pneg %p31
      $region34: #{_lambda_.13} parent=31 // pred_check_branch
        %180 = sbr.rel (%p178) target = $region36
      $region35: #{_lambda_.13} parent=31 // pred_region
        %p181 = scmp.lt.s32.totalorder %s11, 1
        %s182 = scalar_select %p181, %s11, 1
        %s183 = smul.addr %s182, 4
        %s184 = smul.addr %s183, 4
        %s185 = scalar_lea.vmem %s0, %s184
      $region36: #{_lambda_.13} parent=31 // pred_fallthru
        _
    $region32: #{_lambda_.13} parent=5 // pred_fallthru
      _
    %p186 = scmp.le.s32.totalorder 1, %s11
    %p187 = scmp.lt.s32.totalorder %s11, 3
    %p188 = pnand %p186, %p187
    %p189 = pneg %p188
    // Predicated region
    $region37: #{_lambda_.13} parent=5 // pred_check
      _
    $region38: #{_lambda_.13} parent=5 // pred_check_branch
      %191 = sbr.rel (%p188) target = $region40
    $region39: #{_lambda_.13} parent=5 // pred_region
      %s192 = ssub.s32 %s11, 1
      %p193 = scmp.lt.s32.totalorder %s16, 1
      %s194 = scalar_select %p193, %s16, 1
      %s195 = smul.addr %s194, 4
      %s196 = smul.addr %s195, 4
      %s197 = scalar_lea.vmem %s0, %s196
      %p198 = pneg %p37
      %p199 = pneg %p34
      %p200 = pneg %p58
      %p201 = pneg %p55
      %p202 = pneg %p79
      %p203 = pneg %p76
      %p204 = pneg %p100
      %p205 = pneg %p97
      %p206 = pneg %p121
      %p207 = pneg %p118
      %p208 = pneg %p147
      %p209 = pneg %p144
      %p210 = scmp.lt.s32.totalorder %s16, 1
      %s211 = scalar_select %p210, %s16, 1
      %s212 = smul.addr %s211, 4
      %s213 = smul.addr %s212, 8
      %s214 = scalar_lea.vmem %s5, %s213
      %p215 = scmp.lt.s32.totalorder %s16, 1
      %s216 = scalar_select %p215, %s16, 1
      %s217 = smul.addr %s216, 4
      %s218 = smul.addr %s217, 4
      %s219 = scalar_lea.vmem %s0, %s218
      %p220 = scmp.lt.s32.totalorder %s16, 1
      %s221 = scalar_select %p220, %s16, 1
      %s222 = smul.addr %s221, 4
      %s223 = smul.addr %s222, 8
      %s224 = scalar_lea.vmem %s5, %s223
      %v226 = vld [vmem:[%s4] sm:$0x1]
      %v227 = vld [vmem:[%s1] sm:$0xf]
      %v228 = vld [vmem:[%s1 + $0x4] sm:$0xf]
      %v229 = vld [vmem:[%s1 + $0x8] sm:$0xf]
      %v230 = vld [vmem:[%s1 + $0xc] sm:$0xf]
      %v231 = vld [vmem:[%s219] sm:$0xf]
      %v232 = vld [vmem:[%s219 + $0x4] sm:$0xf]
      %v233 = vld [vmem:[%s219 + $0x8] sm:$0xf]
      %v234 = vld [vmem:[%s219 + $0xc] sm:$0xf]
      %s235 = scalar_lea.vmem %s1, 16
      %v236 = vld [vmem:[%s235] sm:$0xf]
      %v237 = vld [vmem:[%s235 + $0x4] sm:$0xf]
      %v238 = vld [vmem:[%s235 + $0x8] sm:$0xf]
      %v239 = vld [vmem:[%s235 + $0xc] sm:$0xf]
      %v244 = vunpack.c.l.b16 %v236
      %v245 = vunpack.c.l.b16 %v237
      %v246 = vunpack.c.l.b16 %v238
      %v247 = vunpack.c.l.b16 %v239
      %v248 = vpack.c.b16 %v245, %v244
      %v249 = vpack.c.b16 %v247, %v246
      %v254 = vunpack.c.l.b16 %v231
      %v255 = vunpack.c.l.b16 %v232
      %v256 = vunpack.c.l.b16 %v233
      %v257 = vunpack.c.l.b16 %v234
      %v258 = vpack.c.b16 %v255, %v254
      %v259 = vpack.c.b16 %v257, %v256
      %260 = vrot.lane.b32.xlu0 %v258, 127
      %v261 = vpop.permute.xlu0 %260
      %262 = vrot.lane.b32.xlu0 %v259, 127
      %v263 = vpop.permute.xlu0 %262
      %vm266 = vcmask 261120
      %v268 = vsel %vm266, %v248, 0
      %v271 = vsel %vm266, %v249, 0
      %273 = vmatprep.subr.bf16.mxu0 0
      %274 = vmatpush1.bf16.msra.mxu0 0
      %275 = vmatprep.subr.bf16.mxu0 0
      %276 = vmatpush1.bf16.msra.mxu0 0
      %277 = vmatprep.subr.bf16.mxu0 0
      %278 = vmatpush1.bf16.msra.mxu0 0
      %279 = vmatprep.subr.bf16.mxu0 0
      %280 = vmatpush1.bf16.msra.mxu0 0
      %281 = vmatprep.subr.bf16.mxu0 0
      %282 = vmatpush1.bf16.msra.mxu0 0
      %283 = vmatprep.subr.bf16.mxu0 0
      %284 = vmatpush1.bf16.msra.mxu0 0
      %285 = vmatprep.subr.bf16.mxu0 0
      %286 = vmatpush1.bf16.msra.mxu0 %v263
      %287 = vmatprep.subr.bf16.mxu0 0
      %288 = vmatpush1.bf16.msra.mxu0 %v261
      %289 = vmatprep.subr.bf16.mxu0 0
      %290 = vmatpush2.bf16.msra.mxu0 0
      %291 = vmatprep.subr.bf16.mxu0 0
      %292 = vmatpush2.bf16.msra.mxu0 0
      %293 = vmatprep.subr.bf16.mxu0 0
      %294 = vmatpush2.bf16.msra.mxu0 0
      %295 = vmatprep.subr.bf16.mxu0 0
      %296 = vmatpush2.bf16.msra.mxu0 0
      %297 = vmatprep.subr.bf16.mxu0 0
      %298 = vmatpush2.bf16.msra.mxu0 0
      %299 = vmatprep.subr.bf16.mxu0 0
      %300 = vmatpush2.bf16.msra.mxu0 0
      %301 = vmatprep.subr.bf16.mxu0 0
      %302 = vmatpush2.bf16.msra.mxu0 0
      %303 = vmatprep.subr.bf16.mxu0 0
      %304 = vmatpush2.bf16.msra.mxu0 0
      %305 = vmatprep.mubr.bf16.mxu0 0
      %306 = vmatmul.mubr.bf16.gmra.mxu0 %v268
      %v307 = vpop.f32.mrf.mxu0
      %v308 = vadd.f32 0.0, %v307
      %v309 = vpop.f32.mrf.mxu0
      %v310 = vpop.f32.mrf.mxu0
      %v311 = vadd.f32 0.0, %v310
      %v312 = vpop.f32.mrf.mxu0
      %313 = vmatprep.mubr.bf16.mxu0 0
      %314 = vmatmul.mubr.bf16.gmra.mxu0 %v271
      %v315 = vpop.f32.mrf.mxu0
      %v316 = vadd.f32 0.0, %v315
      %v317 = vpop.f32.mrf.mxu0
      %v318 = vpop.f32.mrf.mxu0
      %v319 = vadd.f32 0.0, %v318
      %v320 = vpop.f32.mrf.mxu0
      %321 = vdwg.mxu0
      %v326 = vunpack.c.l.b16 %v227
      %v327 = vunpack.c.l.b16 %v228
      %v328 = vunpack.c.l.b16 %v229
      %v329 = vunpack.c.l.b16 %v230
      %v330 = vpack.c.b16 %v327, %v326
      %v331 = vpack.c.b16 %v329, %v328
      %v335 = vsel %vm266, %v330, 0
      %v338 = vsel %vm266, %v331, 0
      %340 = vmatprep.subr.bf16.mxu0 0
      %341 = vmatpush1.bf16.msra.mxu0 0
      %342 = vmatprep.subr.bf16.mxu0 0
      %343 = vmatpush1.bf16.msra.mxu0 0
      %344 = vmatprep.subr.bf16.mxu0 0
      %345 = vmatpush1.bf16.msra.mxu0 0
      %346 = vmatprep.subr.bf16.mxu0 0
      %347 = vmatpush1.bf16.msra.mxu0 0
      %348 = vmatprep.subr.bf16.mxu0 0
      %349 = vmatpush1.bf16.msra.mxu0 0
      %350 = vmatprep.subr.bf16.mxu0 0
      %351 = vmatpush1.bf16.msra.mxu0 0
      %352 = vmatprep.subr.bf16.mxu0 0
      %353 = vmatpush1.bf16.msra.mxu0 %v259
      %354 = vmatprep.subr.bf16.mxu0 0
      %355 = vmatpush1.bf16.msra.mxu0 %v258
      %356 = vmatprep.subr.bf16.mxu0 0
      %357 = vmatpush2.bf16.msra.mxu0 0
      %358 = vmatprep.subr.bf16.mxu0 0
      %359 = vmatpush2.bf16.msra.mxu0 0
      %360 = vmatprep.subr.bf16.mxu0 0
      %361 = vmatpush2.bf16.msra.mxu0 0
      %362 = vmatprep.subr.bf16.mxu0 0
      %363 = vmatpush2.bf16.msra.mxu0 0
      %364 = vmatprep.subr.bf16.mxu0 0
      %365 = vmatpush2.bf16.msra.mxu0 0
      %366 = vmatprep.subr.bf16.mxu0 0
      %367 = vmatpush2.bf16.msra.mxu0 0
      %368 = vmatprep.subr.bf16.mxu0 0
      %369 = vmatpush2.bf16.msra.mxu0 0
      %370 = vmatprep.subr.bf16.mxu0 0
      %371 = vmatpush2.bf16.msra.mxu0 0
      %372 = vmatprep.mubr.bf16.mxu0 0
      %373 = vmatmul.mubr.bf16.gmra.mxu0 %v335
      %v374 = vpop.f32.mrf.mxu0
      %v375 = vadd.f32 %v308, %v374
      %v376 = vpop.f32.mrf.mxu0
      %v377 = vpop.f32.mrf.mxu0
      %v378 = vadd.f32 %v311, %v377
      %v379 = vpop.f32.mrf.mxu0
      %380 = vmatprep.mubr.bf16.mxu0 0
      %381 = vmatmul.mubr.bf16.gmra.mxu0 %v338
      %v382 = vpop.f32.mrf.mxu0
      %v383 = vadd.f32 %v316, %v382
      %v384 = vpop.f32.mrf.mxu0
      %v385 = vpop.f32.mrf.mxu0
      %v386 = vadd.f32 %v319, %v385
      %v387 = vpop.f32.mrf.mxu0
      %388 = vdwg.mxu0
      %s389 = scalar_lea.vmem %s1, 32
      %v390 = vld [vmem:[%s389] sm:$0xf]
      %v391 = vld [vmem:[%s389 + $0x4] sm:$0xf]
      %v392 = vld [vmem:[%s389 + $0x8] sm:$0xf]
      %v393 = vld [vmem:[%s389 + $0xc] sm:$0xf]
      %v398 = vunpack.c.l.b16 %v390
      %v399 = vunpack.c.l.b16 %v391
      %v400 = vunpack.c.l.b16 %v392
      %v401 = vunpack.c.l.b16 %v393
      %v402 = vpack.c.b16 %v399, %v398
      %v403 = vpack.c.b16 %v401, %v400
      %404 = vrot.lane.b32.xlu0 %v258, 126
      %v405 = vpop.permute.xlu0 %404
      %406 = vrot.lane.b32.xlu0 %v259, 126
      %v407 = vpop.permute.xlu0 %406
      %v411 = vsel %vm266, %v402, 0
      %v414 = vsel %vm266, %v403, 0
      %416 = vmatprep.subr.bf16.mxu0 0
      %417 = vmatpush1.bf16.msra.mxu0 0
      %418 = vmatprep.subr.bf16.mxu0 0
      %419 = vmatpush1.bf16.msra.mxu0 0
      %420 = vmatprep.subr.bf16.mxu0 0
      %421 = vmatpush1.bf16.msra.mxu0 0
      %422 = vmatprep.subr.bf16.mxu0 0
      %423 = vmatpush1.bf16.msra.mxu0 0
      %424 = vmatprep.subr.bf16.mxu0 0
      %425 = vmatpush1.bf16.msra.mxu0 0
      %426 = vmatprep.subr.bf16.mxu0 0
      %427 = vmatpush1.bf16.msra.mxu0 0
      %428 = vmatprep.subr.bf16.mxu0 0
      %429 = vmatpush1.bf16.msra.mxu0 %v407
      %430 = vmatprep.subr.bf16.mxu0 0
      %431 = vmatpush1.bf16.msra.mxu0 %v405
      %432 = vmatprep.subr.bf16.mxu0 0
      %433 = vmatpush2.bf16.msra.mxu0 0
      %434 = vmatprep.subr.bf16.mxu0 0
      %435 = vmatpush2.bf16.msra.mxu0 0
      %436 = vmatprep.subr.bf16.mxu0 0
      %437 = vmatpush2.bf16.msra.mxu0 0
      %438 = vmatprep.subr.bf16.mxu0 0
      %439 = vmatpush2.bf16.msra.mxu0 0
      %440 = vmatprep.subr.bf16.mxu0 0
      %441 = vmatpush2.bf16.msra.mxu0 0
      %442 = vmatprep.subr.bf16.mxu0 0
      %443 = vmatpush2.bf16.msra.mxu0 0
      %444 = vmatprep.subr.bf16.mxu0 0
      %445 = vmatpush2.bf16.msra.mxu0 0
      %446 = vmatprep.subr.bf16.mxu0 0
      %447 = vmatpush2.bf16.msra.mxu0 0
      %448 = vmatprep.mubr.bf16.mxu0 0
      %449 = vmatmul.mubr.bf16.gmra.mxu0 %v411
      %v450 = vpop.f32.mrf.mxu0
      %v451 = vadd.f32 0.0, %v450
      %v452 = vpop.f32.mrf.mxu0
      %v453 = vpop.f32.mrf.mxu0
      %v454 = vadd.f32 0.0, %v453
      %v455 = vpop.f32.mrf.mxu0
      %456 = vmatprep.mubr.bf16.mxu0 0
      %457 = vmatmul.mubr.bf16.gmra.mxu0 %v414
      %v458 = vpop.f32.mrf.mxu0
      %v459 = vadd.f32 0.0, %v458
      %v460 = vpop.f32.mrf.mxu0
      %v461 = vpop.f32.mrf.mxu0
      %v462 = vadd.f32 0.0, %v461
      %v463 = vpop.f32.mrf.mxu0
      %464 = vdwg.mxu0
      %v465 = vadd.f32 %v375, %v451
      %v466 = vadd.f32 %v378, %v454
      %v467 = vadd.f32 %v383, %v459
      %v468 = vadd.f32 %v386, %v462
      %s469 = scalar_lea.vmem %s1, 48
      %v470 = vld [vmem:[%s469] sm:$0xf]
      %v471 = vld [vmem:[%s469 + $0x4] sm:$0xf]
      %v472 = vld [vmem:[%s469 + $0x8] sm:$0xf]
      %v473 = vld [vmem:[%s469 + $0xc] sm:$0xf]
      %v478 = vunpack.c.l.b16 %v470
      %v479 = vunpack.c.l.b16 %v471
      %v480 = vunpack.c.l.b16 %v472
      %v481 = vunpack.c.l.b16 %v473
      %v482 = vpack.c.b16 %v479, %v478
      %v483 = vpack.c.b16 %v481, %v480
      %484 = vrot.lane.b32.xlu0 %v258, 122
      %v485 = vpop.permute.xlu0 %484
      %486 = vrot.lane.b32.xlu0 %v259, 122
      %v487 = vpop.permute.xlu0 %486
      %v491 = vsel %vm266, %v482, 0
      %v494 = vsel %vm266, %v483, 0
      %496 = vmatprep.subr.bf16.mxu0 0
      %497 = vmatpush1.bf16.msra.mxu0 0
      %498 = vmatprep.subr.bf16.mxu0 0
      %499 = vmatpush1.bf16.msra.mxu0 0
      %500 = vmatprep.subr.bf16.mxu0 0
      %501 = vmatpush1.bf16.msra.mxu0 0
      %502 = vmatprep.subr.bf16.mxu0 0
      %503 = vmatpush1.bf16.msra.mxu0 0
      %504 = vmatprep.subr.bf16.mxu0 0
      %505 = vmatpush1.bf16.msra.mxu0 0
      %506 = vmatprep.subr.bf16.mxu0 0
      %507 = vmatpush1.bf16.msra.mxu0 0
      %508 = vmatprep.subr.bf16.mxu0 0
      %509 = vmatpush1.bf16.msra.mxu0 %v487
      %510 = vmatprep.subr.bf16.mxu0 0
      %511 = vmatpush1.bf16.msra.mxu0 %v485
      %512 = vmatprep.subr.bf16.mxu0 0
      %513 = vmatpush2.bf16.msra.mxu0 0
      %514 = vmatprep.subr.bf16.mxu0 0
      %515 = vmatpush2.bf16.msra.mxu0 0
      %516 = vmatprep.subr.bf16.mxu0 0
      %517 = vmatpush2.bf16.msra.mxu0 0
      %518 = vmatprep.subr.bf16.mxu0 0
      %519 = vmatpush2.bf16.msra.mxu0 0
      %520 = vmatprep.subr.bf16.mxu0 0
      %521 = vmatpush2.bf16.msra.mxu0 0
      %522 = vmatprep.subr.bf16.mxu0 0
      %523 = vmatpush2.bf16.msra.mxu0 0
      %524 = vmatprep.subr.bf16.mxu0 0
      %525 = vmatpush2.bf16.msra.mxu0 0
      %526 = vmatprep.subr.bf16.mxu0 0
      %527 = vmatpush2.bf16.msra.mxu0 0
      %528 = vmatprep.mubr.bf16.mxu0 0
      %529 = vmatmul.mubr.bf16.gmra.mxu0 %v491
      %v530 = vpop.f32.mrf.mxu0
      %v531 = vadd.f32 0.0, %v530
      %v532 = vpop.f32.mrf.mxu0
      %v533 = vpop.f32.mrf.mxu0
      %v534 = vadd.f32 0.0, %v533
      %v535 = vpop.f32.mrf.mxu0
      %536 = vmatprep.mubr.bf16.mxu0 0
      %537 = vmatmul.mubr.bf16.gmra.mxu0 %v494
      %v538 = vpop.f32.mrf.mxu0
      %v539 = vadd.f32 0.0, %v538
      %v540 = vpop.f32.mrf.mxu0
      %v541 = vpop.f32.mrf.mxu0
      %v542 = vadd.f32 0.0, %v541
      %v543 = vpop.f32.mrf.mxu0
      %544 = vdwg.mxu0
      %v545 = vadd.f32 %v465, %v531
      %v546 = vadd.f32 %v466, %v534
      %v547 = vadd.f32 %v467, %v539
      %v548 = vadd.f32 %v468, %v542
      %s549 = scalar_lea.vmem %s1, 64
      %v550 = vld [vmem:[%s549] sm:$0xf]
      %v551 = vld [vmem:[%s549 + $0x4] sm:$0xf]
      %v552 = vld [vmem:[%s549 + $0x8] sm:$0xf]
      %v553 = vld [vmem:[%s549 + $0xc] sm:$0xf]
      %v558 = vunpack.c.l.b16 %v550
      %v559 = vunpack.c.l.b16 %v551
      %v560 = vunpack.c.l.b16 %v552
      %v561 = vunpack.c.l.b16 %v553
      %v562 = vpack.c.b16 %v559, %v558
      %v563 = vpack.c.b16 %v561, %v560
      %564 = vrot.lane.b32.xlu0 %v258, 121
      %v565 = vpop.permute.xlu0 %564
      %566 = vrot.lane.b32.xlu0 %v259, 121
      %v567 = vpop.permute.xlu0 %566
      %v571 = vsel %vm266, %v562, 0
      %v574 = vsel %vm266, %v563, 0
      %576 = vmatprep.subr.bf16.mxu0 0
      %577 = vmatpush1.bf16.msra.mxu0 0
      %578 = vmatprep.subr.bf16.mxu0 0
      %579 = vmatpush1.bf16.msra.mxu0 0
      %580 = vmatprep.subr.bf16.mxu0 0
      %581 = vmatpush1.bf16.msra.mxu0 0
      %582 = vmatprep.subr.bf16.mxu0 0
      %583 = vmatpush1.bf16.msra.mxu0 0
      %584 = vmatprep.subr.bf16.mxu0 0
      %585 = vmatpush1.bf16.msra.mxu0 0
      %586 = vmatprep.subr.bf16.mxu0 0
      %587 = vmatpush1.bf16.msra.mxu0 0
      %588 = vmatprep.subr.bf16.mxu0 0
      %589 = vmatpush1.bf16.msra.mxu0 %v567
      %590 = vmatprep.subr.bf16.mxu0 0
      %591 = vmatpush1.bf16.msra.mxu0 %v565
      %592 = vmatprep.subr.bf16.mxu0 0
      %593 = vmatpush2.bf16.msra.mxu0 0
      %594 = vmatprep.subr.bf16.mxu0 0
      %595 = vmatpush2.bf16.msra.mxu0 0
      %596 = vmatprep.subr.bf16.mxu0 0
      %597 = vmatpush2.bf16.msra.mxu0 0
      %598 = vmatprep.subr.bf16.mxu0 0
      %599 = vmatpush2.bf16.msra.mxu0 0
      %600 = vmatprep.subr.bf16.mxu0 0
      %601 = vmatpush2.bf16.msra.mxu0 0
      %602 = vmatprep.subr.bf16.mxu0 0
      %603 = vmatpush2.bf16.msra.mxu0 0
      %604 = vmatprep.subr.bf16.mxu0 0
      %605 = vmatpush2.bf16.msra.mxu0 0
      %606 = vmatprep.subr.bf16.mxu0 0
      %607 = vmatpush2.bf16.msra.mxu0 0
      %608 = vmatprep.mubr.bf16.mxu0 0
      %609 = vmatmul.mubr.bf16.gmra.mxu0 %v571
      %v610 = vpop.f32.mrf.mxu0
      %v611 = vadd.f32 0.0, %v610
      %v612 = vpop.f32.mrf.mxu0
      %v613 = vpop.f32.mrf.mxu0
      %v614 = vadd.f32 0.0, %v613
      %v615 = vpop.f32.mrf.mxu0
      %616 = vmatprep.mubr.bf16.mxu0 0
      %617 = vmatmul.mubr.bf16.gmra.mxu0 %v574
      %v618 = vpop.f32.mrf.mxu0
      %v619 = vadd.f32 0.0, %v618
      %v620 = vpop.f32.mrf.mxu0
      %v621 = vpop.f32.mrf.mxu0
      %v622 = vadd.f32 0.0, %v621
      %v623 = vpop.f32.mrf.mxu0
      %624 = vdwg.mxu0
      %v625 = vadd.f32 %v545, %v611
      %v626 = vadd.f32 %v546, %v614
      %v627 = vadd.f32 %v547, %v619
      %v628 = vadd.f32 %v548, %v622
      %s629 = scalar_lea.vmem %s1, 80
      %v630 = vld [vmem:[%s629] sm:$0xf]
      %v631 = vld [vmem:[%s629 + $0x4] sm:$0xf]
      %v632 = vld [vmem:[%s629 + $0x8] sm:$0xf]
      %v633 = vld [vmem:[%s629 + $0xc] sm:$0xf]
      %v638 = vunpack.c.l.b16 %v630
      %v639 = vunpack.c.l.b16 %v631
      %v640 = vunpack.c.l.b16 %v632
      %v641 = vunpack.c.l.b16 %v633
      %v642 = vpack.c.b16 %v639, %v638
      %v643 = vpack.c.b16 %v641, %v640
      %644 = vrot.lane.b32.xlu0 %v258, 120
      %v645 = vpop.permute.xlu0 %644
      %646 = vrot.lane.b32.xlu0 %v259, 120
      %v647 = vpop.permute.xlu0 %646
      %v651 = vsel %vm266, %v642, 0
      %v654 = vsel %vm266, %v643, 0
      %656 = vmatprep.subr.bf16.mxu0 0
      %657 = vmatpush1.bf16.msra.mxu0 0
      %658 = vmatprep.subr.bf16.mxu0 0
      %659 = vmatpush1.bf16.msra.mxu0 0
      %660 = vmatprep.subr.bf16.mxu0 0
      %661 = vmatpush1.bf16.msra.mxu0 0
      %662 = vmatprep.subr.bf16.mxu0 0
      %663 = vmatpush1.bf16.msra.mxu0 0
      %664 = vmatprep.subr.bf16.mxu0 0
      %665 = vmatpush1.bf16.msra.mxu0 0
      %666 = vmatprep.subr.bf16.mxu0 0
      %667 = vmatpush1.bf16.msra.mxu0 0
      %668 = vmatprep.subr.bf16.mxu0 0
      %669 = vmatpush1.bf16.msra.mxu0 %v647
      %670 = vmatprep.subr.bf16.mxu0 0
      %671 = vmatpush1.bf16.msra.mxu0 %v645
      %672 = vmatprep.subr.bf16.mxu0 0
      %673 = vmatpush2.bf16.msra.mxu0 0
      %674 = vmatprep.subr.bf16.mxu0 0
      %675 = vmatpush2.bf16.msra.mxu0 0
      %676 = vmatprep.subr.bf16.mxu0 0
      %677 = vmatpush2.bf16.msra.mxu0 0
      %678 = vmatprep.subr.bf16.mxu0 0
      %679 = vmatpush2.bf16.msra.mxu0 0
      %680 = vmatprep.subr.bf16.mxu0 0
      %681 = vmatpush2.bf16.msra.mxu0 0
      %682 = vmatprep.subr.bf16.mxu0 0
      %683 = vmatpush2.bf16.msra.mxu0 0
      %684 = vmatprep.subr.bf16.mxu0 0
      %685 = vmatpush2.bf16.msra.mxu0 0
      %686 = vmatprep.subr.bf16.mxu0 0
      %687 = vmatpush2.bf16.msra.mxu0 0
      %688 = vmatprep.mubr.bf16.mxu0 0
      %689 = vmatmul.mubr.bf16.gmra.mxu0 %v651
      %v690 = vpop.f32.mrf.mxu0
      %v691 = vadd.f32 0.0, %v690
      %v692 = vpop.f32.mrf.mxu0
      %v693 = vpop.f32.mrf.mxu0
      %v694 = vadd.f32 0.0, %v693
      %v695 = vpop.f32.mrf.mxu0
      %696 = vmatprep.mubr.bf16.mxu0 0
      %697 = vmatmul.mubr.bf16.gmra.mxu0 %v654
      %v698 = vpop.f32.mrf.mxu0
      %v699 = vadd.f32 0.0, %v698
      %v700 = vpop.f32.mrf.mxu0
      %v701 = vpop.f32.mrf.mxu0
      %v702 = vadd.f32 0.0, %v701
      %v703 = vpop.f32.mrf.mxu0
      %704 = vdwg.mxu0
      %v705 = vadd.f32 %v625, %v691
      %v706 = vadd.f32 %v626, %v694
      %v707 = vadd.f32 %v627, %v699
      %v708 = vadd.f32 %v628, %v702
      %s709 = scalar_lea.vmem %s1, 96
      %v710 = vld [vmem:[%s709] sm:$0xf]
      %v711 = vld [vmem:[%s709 + $0x4] sm:$0xf]
      %v712 = vld [vmem:[%s709 + $0x8] sm:$0xf]
      %v713 = vld [vmem:[%s709 + $0xc] sm:$0xf]
      %v718 = vunpack.c.l.b16 %v710
      %v719 = vunpack.c.l.b16 %v711
      %v720 = vunpack.c.l.b16 %v712
      %v721 = vunpack.c.l.b16 %v713
      %v722 = vpack.c.b16 %v719, %v718
      %v723 = vpack.c.b16 %v721, %v720
      %724 = vrot.lane.b32.xlu0 %v258, 116
      %v725 = vpop.permute.xlu0 %724
      %726 = vrot.lane.b32.xlu0 %v259, 116
      %v727 = vpop.permute.xlu0 %726
      %v731 = vsel %vm266, %v722, 0
      %v734 = vsel %vm266, %v723, 0
      %736 = vmatprep.subr.bf16.mxu0 0
      %737 = vmatpush1.bf16.msra.mxu0 0
      %738 = vmatprep.subr.bf16.mxu0 0
      %739 = vmatpush1.bf16.msra.mxu0 0
      %740 = vmatprep.subr.bf16.mxu0 0
      %741 = vmatpush1.bf16.msra.mxu0 0
      %742 = vmatprep.subr.bf16.mxu0 0
      %743 = vmatpush1.bf16.msra.mxu0 0
      %744 = vmatprep.subr.bf16.mxu0 0
      %745 = vmatpush1.bf16.msra.mxu0 0
      %746 = vmatprep.subr.bf16.mxu0 0
      %747 = vmatpush1.bf16.msra.mxu0 0
      %748 = vmatprep.subr.bf16.mxu0 0
      %749 = vmatpush1.bf16.msra.mxu0 %v727
      %750 = vmatprep.subr.bf16.mxu0 0
      %751 = vmatpush1.bf16.msra.mxu0 %v725
      %752 = vmatprep.subr.bf16.mxu0 0
      %753 = vmatpush2.bf16.msra.mxu0 0
      %754 = vmatprep.subr.bf16.mxu0 0
      %755 = vmatpush2.bf16.msra.mxu0 0
      %756 = vmatprep.subr.bf16.mxu0 0
      %757 = vmatpush2.bf16.msra.mxu0 0
      %758 = vmatprep.subr.bf16.mxu0 0
      %759 = vmatpush2.bf16.msra.mxu0 0
      %760 = vmatprep.subr.bf16.mxu0 0
      %761 = vmatpush2.bf16.msra.mxu0 0
      %762 = vmatprep.subr.bf16.mxu0 0
      %763 = vmatpush2.bf16.msra.mxu0 0
      %764 = vmatprep.subr.bf16.mxu0 0
      %765 = vmatpush2.bf16.msra.mxu0 0
      %766 = vmatprep.subr.bf16.mxu0 0
      %767 = vmatpush2.bf16.msra.mxu0 0
      %768 = vmatprep.mubr.bf16.mxu0 0
      %769 = vmatmul.mubr.bf16.gmra.mxu0 %v731
      %v770 = vpop.f32.mrf.mxu0
      %v771 = vadd.f32 0.0, %v770
      %v772 = vpop.f32.mrf.mxu0
      %v773 = vpop.f32.mrf.mxu0
      %v774 = vadd.f32 0.0, %v773
      %v775 = vpop.f32.mrf.mxu0
      %776 = vmatprep.mubr.bf16.mxu0 0
      %777 = vmatmul.mubr.bf16.gmra.mxu0 %v734
      %v778 = vpop.f32.mrf.mxu0
      %v779 = vadd.f32 0.0, %v778
      %v780 = vpop.f32.mrf.mxu0
      %v781 = vpop.f32.mrf.mxu0
      %v782 = vadd.f32 0.0, %v781
      %v783 = vpop.f32.mrf.mxu0
      %784 = vdwg.mxu0
      %v785 = vadd.f32 %v705, %v771
      %v786 = vadd.f32 %v706, %v774
      %v787 = vadd.f32 %v707, %v779
      %v788 = vadd.f32 %v708, %v782
      %s789 = scalar_lea.vmem %s1, 112
      %v790 = vld [vmem:[%s789] sm:$0xf]
      %v791 = vld [vmem:[%s789 + $0x4] sm:$0xf]
      %v792 = vld [vmem:[%s789 + $0x8] sm:$0xf]
      %v793 = vld [vmem:[%s789 + $0xc] sm:$0xf]
      %v798 = vunpack.c.l.b16 %v790
      %v799 = vunpack.c.l.b16 %v791
      %v800 = vunpack.c.l.b16 %v792
      %v801 = vunpack.c.l.b16 %v793
      %v802 = vpack.c.b16 %v799, %v798
      %v803 = vpack.c.b16 %v801, %v800
      %804 = vrot.lane.b32.xlu0 %v258, 115
      %v805 = vpop.permute.xlu0 %804
      %806 = vrot.lane.b32.xlu0 %v259, 115
      %v807 = vpop.permute.xlu0 %806
      %v811 = vsel %vm266, %v802, 0
      %v814 = vsel %vm266, %v803, 0
      %816 = vmatprep.subr.bf16.mxu0 0
      %817 = vmatpush1.bf16.msra.mxu0 0
      %818 = vmatprep.subr.bf16.mxu0 0
      %819 = vmatpush1.bf16.msra.mxu0 0
      %820 = vmatprep.subr.bf16.mxu0 0
      %821 = vmatpush1.bf16.msra.mxu0 0
      %822 = vmatprep.subr.bf16.mxu0 0
      %823 = vmatpush1.bf16.msra.mxu0 0
      %824 = vmatprep.subr.bf16.mxu0 0
      %825 = vmatpush1.bf16.msra.mxu0 0
      %826 = vmatprep.subr.bf16.mxu0 0
      %827 = vmatpush1.bf16.msra.mxu0 0
      %828 = vmatprep.subr.bf16.mxu0 0
      %829 = vmatpush1.bf16.msra.mxu0 %v807
      %830 = vmatprep.subr.bf16.mxu0 0
      %831 = vmatpush1.bf16.msra.mxu0 %v805
      %832 = vmatprep.subr.bf16.mxu0 0
      %833 = vmatpush2.bf16.msra.mxu0 0
      %834 = vmatprep.subr.bf16.mxu0 0
      %835 = vmatpush2.bf16.msra.mxu0 0
      %836 = vmatprep.subr.bf16.mxu0 0
      %837 = vmatpush2.bf16.msra.mxu0 0
      %838 = vmatprep.subr.bf16.mxu0 0
      %839 = vmatpush2.bf16.msra.mxu0 0
      %840 = vmatprep.subr.bf16.mxu0 0
      %841 = vmatpush2.bf16.msra.mxu0 0
      %842 = vmatprep.subr.bf16.mxu0 0
      %843 = vmatpush2.bf16.msra.mxu0 0
      %844 = vmatprep.subr.bf16.mxu0 0
      %845 = vmatpush2.bf16.msra.mxu0 0
      %846 = vmatprep.subr.bf16.mxu0 0
      %847 = vmatpush2.bf16.msra.mxu0 0
      %848 = vmatprep.mubr.bf16.mxu0 0
      %849 = vmatmul.mubr.bf16.gmra.mxu0 %v811
      %v850 = vpop.f32.mrf.mxu0
      %v851 = vadd.f32 0.0, %v850
      %v852 = vpop.f32.mrf.mxu0
      %v853 = vpop.f32.mrf.mxu0
      %v854 = vadd.f32 0.0, %v853
      %v855 = vpop.f32.mrf.mxu0
      %856 = vmatprep.mubr.bf16.mxu0 0
      %857 = vmatmul.mubr.bf16.gmra.mxu0 %v814
      %v858 = vpop.f32.mrf.mxu0
      %v859 = vadd.f32 0.0, %v858
      %v860 = vpop.f32.mrf.mxu0
      %v861 = vpop.f32.mrf.mxu0
      %v862 = vadd.f32 0.0, %v861
      %v863 = vpop.f32.mrf.mxu0
      %864 = vdwg.mxu0
      %v865 = vadd.f32 %v785, %v851
      %v866 = vadd.f32 %v786, %v854
      %v867 = vadd.f32 %v787, %v859
      %v868 = vadd.f32 %v788, %v862
      %s869 = scalar_lea.vmem %s1, 128
      %v870 = vld [vmem:[%s869] sm:$0xf]
      %v871 = vld [vmem:[%s869 + $0x4] sm:$0xf]
      %v872 = vld [vmem:[%s869 + $0x8] sm:$0xf]
      %v873 = vld [vmem:[%s869 + $0xc] sm:$0xf]
      %v878 = vunpack.c.l.b16 %v870
      %v879 = vunpack.c.l.b16 %v871
      %v880 = vunpack.c.l.b16 %v872
      %v881 = vunpack.c.l.b16 %v873
      %v882 = vpack.c.b16 %v879, %v878
      %v883 = vpack.c.b16 %v881, %v880
      %884 = vrot.lane.b32.xlu0 %v258, 114
      %v885 = vpop.permute.xlu0 %884
      %886 = vrot.lane.b32.xlu0 %v259, 114
      %v887 = vpop.permute.xlu0 %886
      %v891 = vsel %vm266, %v882, 0
      %v894 = vsel %vm266, %v883, 0
      %896 = vmatprep.subr.bf16.mxu0 0
      %897 = vmatpush1.bf16.msra.mxu0 0
      %898 = vmatprep.subr.bf16.mxu0 0
      %899 = vmatpush1.bf16.msra.mxu0 0
      %900 = vmatprep.subr.bf16.mxu0 0
      %901 = vmatpush1.bf16.msra.mxu0 0
      %902 = vmatprep.subr.bf16.mxu0 0
      %903 = vmatpush1.bf16.msra.mxu0 0
      %904 = vmatprep.subr.bf16.mxu0 0
      %905 = vmatpush1.bf16.msra.mxu0 0
      %906 = vmatprep.subr.bf16.mxu0 0
      %907 = vmatpush1.bf16.msra.mxu0 0
      %908 = vmatprep.subr.bf16.mxu0 0
      %909 = vmatpush1.bf16.msra.mxu0 %v887
      %910 = vmatprep.subr.bf16.mxu0 0
      %911 = vmatpush1.bf16.msra.mxu0 %v885
      %912 = vmatprep.subr.bf16.mxu0 0
      %913 = vmatpush2.bf16.msra.mxu0 0
      %914 = vmatprep.subr.bf16.mxu0 0
      %915 = vmatpush2.bf16.msra.mxu0 0
      %916 = vmatprep.subr.bf16.mxu0 0
      %917 = vmatpush2.bf16.msra.mxu0 0
      %918 = vmatprep.subr.bf16.mxu0 0
      %919 = vmatpush2.bf16.msra.mxu0 0
      %920 = vmatprep.subr.bf16.mxu0 0
      %921 = vmatpush2.bf16.msra.mxu0 0
      %922 = vmatprep.subr.bf16.mxu0 0
      %923 = vmatpush2.bf16.msra.mxu0 0
      %924 = vmatprep.subr.bf16.mxu0 0
      %925 = vmatpush2.bf16.msra.mxu0 0
      %926 = vmatprep.subr.bf16.mxu0 0
      %927 = vmatpush2.bf16.msra.mxu0 0
      %928 = vmatprep.mubr.bf16.mxu0 0
      %929 = vmatmul.mubr.bf16.gmra.mxu0 %v891
      %v930 = vpop.f32.mrf.mxu0
      %v931 = vadd.f32 0.0, %v930
      %v932 = vpop.f32.mrf.mxu0
      %v933 = vpop.f32.mrf.mxu0
      %v934 = vadd.f32 0.0, %v933
      %v935 = vpop.f32.mrf.mxu0
      %936 = vmatprep.mubr.bf16.mxu0 0
      %937 = vmatmul.mubr.bf16.gmra.mxu0 %v894
      %v938 = vpop.f32.mrf.mxu0
      %v939 = vadd.f32 0.0, %v938
      %v940 = vpop.f32.mrf.mxu0
      %v941 = vpop.f32.mrf.mxu0
      %v942 = vadd.f32 0.0, %v941
      %v943 = vpop.f32.mrf.mxu0
      %944 = vdwg.mxu0
      %v945 = vadd.f32 %v865, %v931
      %v946 = vadd.f32 %v866, %v934
      %v947 = vadd.f32 %v867, %v939
      %v948 = vadd.f32 %v868, %v942
      %v950 = vlaneseq
      %v951 = vshrl.u32 %v950, 7
      %v952 = vsub.s32 0, %v951
      %v953 = vrot.slane %v226, %v952
      %v955 = vmul.f32 %v945, %v953
      %v956 = vmul.f32 %v946, %v953
      %v957 = vmul.f32 %v947, %v953
      %v958 = vmul.f32 %v948, %v953
      %vm959 = vcmask 195584
      %v960 = vsel %vm959, %v955, 0.0
      %961 = vadd.xlane.f32.xlu0 %v960
      %v962 = vpop.xlane.xlu0 %961
      %v963 = vsel %vm959, %v956, 0.0
      %964 = vadd.xlane.f32.xlu0 %v963
      %v965 = vpop.xlane.xlu0 %964
      %v966 = vsel %vm959, %v957, 0.0
      %967 = vadd.xlane.f32.xlu0 %v966
      %v968 = vpop.xlane.xlu0 %967
      %v969 = vsel %vm959, %v958, 0.0
      %970 = vadd.xlane.f32.xlu0 %v969
      %v971 = vpop.xlane.xlu0 %970
      %v972 = vmul.f32 %v962, 0.0625
      %v973 = vmul.f32 %v965, 0.0625
      %v974 = vmul.f32 %v968, 0.0625
      %v975 = vmul.f32 %v971, 0.0625
      %v976 = vsub.f32 %v945, %v972
      %v977 = vsub.f32 %v946, %v973
      %v978 = vsub.f32 %v947, %v974
      %v979 = vsub.f32 %v948, %v975
      %v980 = vmul.f32 %v976, %v953
      %v981 = vmul.f32 %v977, %v953
      %v982 = vmul.f32 %v978, %v953
      %v983 = vmul.f32 %v979, %v953
      %v984 = vmul.f32 %v980, %v980
      %v985 = vmul.f32 %v981, %v981
      %v986 = vmul.f32 %v982, %v982
      %v987 = vmul.f32 %v983, %v983
      %v988 = vsel %vm959, %v984, 0.0
      %989 = vadd.xlane.f32.xlu0 %v988
      %v990 = vpop.xlane.xlu0 %989
      %v991 = vsel %vm959, %v985, 0.0
      %992 = vadd.xlane.f32.xlu0 %v991
      %v993 = vpop.xlane.xlu0 %992
      %v994 = vsel %vm959, %v986, 0.0
      %995 = vadd.xlane.f32.xlu0 %v994
      %v996 = vpop.xlane.xlu0 %995
      %v997 = vsel %vm959, %v987, 0.0
      %998 = vadd.xlane.f32.xlu0 %v997
      %v999 = vpop.xlane.xlu0 %998
      %v1000 = vmul.f32 %v990, 0.0625
      %v1001 = vmul.f32 %v993, 0.0625
      %v1002 = vmul.f32 %v996, 0.0625
      %v1003 = vmul.f32 %v999, 0.0625
      %v1004 = vadd.f32 %v1000, 1e-05
      %v1005 = vadd.f32 %v1001, 1e-05
      %v1006 = vadd.f32 %v1002, 1e-05
      %v1007 = vadd.f32 %v1003, 1e-05
      %v1008 = vrsqrt.pop %v1004
      %v1009 = vrsqrt.pop %v1005
      %v1010 = vrsqrt.pop %v1006
      %v1011 = vrsqrt.pop %v1007
      %v1012 = vmul.f32 %v980, %v1008
      %v1013 = vmul.f32 %v981, %v1009
      %v1014 = vmul.f32 %v982, %v1010
      %v1015 = vmul.f32 %v983, %v1011
      %v1016 = vmax.f32 %v1012, 0.0
      %v1017 = vmax.f32 %v1013, 0.0
      %v1018 = vmax.f32 %v1014, 0.0
      %v1019 = vmax.f32 %v1015, 0.0
      %vm1020 = vcmask 338944
      %1021 = vst.msk [vmem:[#allocation2] sm:$0xf] %vm1020, 0
      %1022 = vst.msk [vmem:[#allocation2 + $0x4] sm:$0xf] %vm1020, 0
      %1023 = vst.msk [vmem:[#allocation2 + $0x8] sm:$0xf] %vm1020, 0
      %1024 = vst.msk [vmem:[#allocation2 + $0xc] sm:$0xf] %vm1020, 0
      %v1025 = vpack.c.bf16 %v1017, %v1016
      %v1026 = vpack.c.bf16 %v1019, %v1018
      %v1029 = vunpack.c.l.b16 %v1025
      %v1030 = vunpack.c.h.b16 %v1025
      %v1031 = vunpack.c.l.b16 %v1026
      %v1032 = vunpack.c.h.b16 %v1026
      %v1033 = vpack.c.b16 %v1029, %v1029
      %v1034 = vpack.c.b16 %v1030, %v1030
      %v1035 = vpack.c.b16 %v1031, %v1031
      %v1036 = vpack.c.b16 %v1032, %v1032
      %1037 = vrot.lane.b32.xlu0 %v1033, 7
      %v1038 = vpop.permute.xlu0 %1037
      %1039 = vrot.lane.b32.xlu0 %v1034, 7
      %v1040 = vpop.permute.xlu0 %1039
      %1041 = vrot.lane.b32.xlu0 %v1035, 7
      %v1042 = vpop.permute.xlu0 %1041
      %1043 = vrot.lane.b32.xlu0 %v1036, 7
      %v1044 = vpop.permute.xlu0 %1043
      %vm1049 = vcmask 248888
      %1050 = vst.msk [vmem:[#allocation2] sm:$0xf] %vm1049, %v1038
      %1051 = vst.msk [vmem:[#allocation2 + $0x4] sm:$0xf] %vm1049, %v1040
      %1052 = vst.msk [vmem:[#allocation2 + $0x8] sm:$0xf] %vm1049, %v1042
      %1053 = vst.msk [vmem:[#allocation2 + $0xc] sm:$0xf] %vm1049, %v1044
      %v1054 = vld [vmem:[%s3] sm:$0xff]
      %v1055 = vld [vmem:[%s3 + $0x8] sm:$0xff]
      %v1056 = vld [vmem:[%s3 + $0x10] sm:$0xff]
      %v1057 = vld [vmem:[%s3 + $0x18] sm:$0xff]
      %v1058 = vld [vmem:[%s219] sm:$0xf]
      %v1059 = vld [vmem:[%s219 + $0x4] sm:$0xf]
      %v1060 = vld [vmem:[%s219 + $0x8] sm:$0xf]
      %v1061 = vld [vmem:[%s219 + $0xc] sm:$0xf]
      %v1062 = vunpack.c.l.bf16 %v1058
      %v1063 = vunpack.c.l.bf16 %v1059
      %v1064 = vunpack.c.l.bf16 %v1060
      %v1065 = vunpack.c.l.bf16 %v1061
      %1067 = vset.pattern.permute.xlu0 0
      %1068 = vperm.xlu0 %1067, %v1054
      %v1069 = vpop.permute.xlu0 %1068
      %1072 = vset.pattern.permute.xlu0 0
      %1073 = vperm.xlu0 %1072, %v1055
      %v1074 = vpop.permute.xlu0 %1073
      %1077 = vset.pattern.permute.xlu0 0
      %1078 = vperm.xlu0 %1077, %v1056
      %v1079 = vpop.permute.xlu0 %1078
      %1082 = vset.pattern.permute.xlu0 0
      %1083 = vperm.xlu0 %1082, %v1057
      %v1084 = vpop.permute.xlu0 %1083
      %v1086 = vadd.f32 %v1069, %v1062
      %v1087 = vadd.f32 %v1074, %v1063
      %v1088 = vadd.f32 %v1079, %v1064
      %v1089 = vadd.f32 %v1084, %v1065
      %v1090 = vld [vmem:[%s2] sm:$0xf]
      %v1091 = vld [vmem:[%s2 + $0x4] sm:$0xf]
      %v1092 = vld [vmem:[%s2 + $0x8] sm:$0xf]
      %v1093 = vld [vmem:[%s2 + $0xc] sm:$0xf]
      %v1094 = vld [vmem:[#allocation2] sm:$0xf]
      %v1095 = vld [vmem:[#allocation2 + $0x4] sm:$0xf]
      %v1096 = vld [vmem:[#allocation2 + $0x8] sm:$0xf]
      %v1097 = vld [vmem:[#allocation2 + $0xc] sm:$0xf]
      %v1102 = vunpack.c.l.b16 %v1090
      %v1103 = vunpack.c.l.b16 %v1091
      %v1104 = vunpack.c.l.b16 %v1092
      %v1105 = vunpack.c.l.b16 %v1093
      %v1106 = vpack.c.b16 %v1103, %v1102
      %v1107 = vpack.c.b16 %v1105, %v1104
      %v1112 = vunpack.c.l.b16 %v1094
      %v1113 = vunpack.c.l.b16 %v1095
      %v1114 = vunpack.c.l.b16 %v1096
      %v1115 = vunpack.c.l.b16 %v1097
      %v1116 = vpack.c.b16 %v1113, %v1112
      %v1117 = vpack.c.b16 %v1115, %v1114
      %v1121 = vsel %vm266, %v1106, 0
      %v1124 = vsel %vm266, %v1107, 0
      %1126 = vmatprep.subr.bf16.mxu0 0
      %1127 = vmatpush1.bf16.msra.mxu0 0
      %1128 = vmatprep.subr.bf16.mxu0 0
      %1129 = vmatpush1.bf16.msra.mxu0 0
      %1130 = vmatprep.subr.bf16.mxu0 0
      %1131 = vmatpush1.bf16.msra.mxu0 0
      %1132 = vmatprep.subr.bf16.mxu0 0
      %1133 = vmatpush1.bf16.msra.mxu0 0
      %1134 = vmatprep.subr.bf16.mxu0 0
      %1135 = vmatpush1.bf16.msra.mxu0 0
      %1136 = vmatprep.subr.bf16.mxu0 0
      %1137 = vmatpush1.bf16.msra.mxu0 0
      %1138 = vmatprep.subr.bf16.mxu0 0
      %1139 = vmatpush1.bf16.msra.mxu0 %v1117
      %1140 = vmatprep.subr.bf16.mxu0 0
      %1141 = vmatpush1.bf16.msra.mxu0 %v1116
      %1142 = vmatprep.subr.bf16.mxu0 0
      %1143 = vmatpush2.bf16.msra.mxu0 0
      %1144 = vmatprep.subr.bf16.mxu0 0
      %1145 = vmatpush2.bf16.msra.mxu0 0
      %1146 = vmatprep.subr.bf16.mxu0 0
      %1147 = vmatpush2.bf16.msra.mxu0 0
      %1148 = vmatprep.subr.bf16.mxu0 0
      %1149 = vmatpush2.bf16.msra.mxu0 0
      %1150 = vmatprep.subr.bf16.mxu0 0
      %1151 = vmatpush2.bf16.msra.mxu0 0
      %1152 = vmatprep.subr.bf16.mxu0 0
      %1153 = vmatpush2.bf16.msra.mxu0 0
      %1154 = vmatprep.subr.bf16.mxu0 0
      %1155 = vmatpush2.bf16.msra.mxu0 0
      %1156 = vmatprep.subr.bf16.mxu0 0
      %1157 = vmatpush2.bf16.msra.mxu0 0
      %1158 = vmatprep.mubr.bf16.mxu0 0
      %1159 = vmatmul.mubr.bf16.gmra.mxu0 %v1121
      %v1160 = vpop.f32.mrf.mxu0
      %v1161 = vadd.f32 0.0, %v1160
      %v1162 = vpop.f32.mrf.mxu0
      %v1163 = vpop.f32.mrf.mxu0
      %v1164 = vadd.f32 0.0, %v1163
      %v1165 = vpop.f32.mrf.mxu0
      %1166 = vmatprep.mubr.bf16.mxu0 0
      %1167 = vmatmul.mubr.bf16.gmra.mxu0 %v1124
      %v1168 = vpop.f32.mrf.mxu0
      %v1169 = vadd.f32 0.0, %v1168
      %v1170 = vpop.f32.mrf.mxu0
      %v1171 = vpop.f32.mrf.mxu0
      %v1172 = vadd.f32 0.0, %v1171
      %v1173 = vpop.f32.mrf.mxu0
      %1174 = vdwg.mxu0
      %1179 = vrot.lane.b32.xlu0 %v1161, 7
      %v1180 = vpop.permute.xlu0 %1179
      %1181 = vrot.lane.b32.xlu0 %v1164, 7
      %v1182 = vpop.permute.xlu0 %1181
      %1183 = vrot.lane.b32.xlu0 %v1169, 7
      %v1184 = vpop.permute.xlu0 %1183
      %1185 = vrot.lane.b32.xlu0 %v1172, 7
      %v1186 = vpop.permute.xlu0 %1185
      %v1191 = vadd.f32 %v1086, %v1180
      %v1192 = vadd.f32 %v1087, %v1182
      %v1193 = vadd.f32 %v1088, %v1184
      %v1194 = vadd.f32 %v1089, %v1186
      %s1195 = scalar_lea.vmem %s2, 16
      %v1196 = vld [vmem:[%s1195] sm:$0xf]
      %v1197 = vld [vmem:[%s1195 + $0x4] sm:$0xf]
      %v1198 = vld [vmem:[%s1195 + $0x8] sm:$0xf]
      %v1199 = vld [vmem:[%s1195 + $0xc] sm:$0xf]
      %v1204 = vunpack.c.l.b16 %v1196
      %v1205 = vunpack.c.l.b16 %v1197
      %v1206 = vunpack.c.l.b16 %v1198
      %v1207 = vunpack.c.l.b16 %v1199
      %v1208 = vpack.c.b16 %v1205, %v1204
      %v1209 = vpack.c.b16 %v1207, %v1206
      %1210 = vrot.lane.b32.xlu0 %v1116, 127
      %v1211 = vpop.permute.xlu0 %1210
      %1212 = vrot.lane.b32.xlu0 %v1117, 127
      %v1213 = vpop.permute.xlu0 %1212
      %v1217 = vsel %vm266, %v1208, 0
      %v1220 = vsel %vm266, %v1209, 0
      %1222 = vmatprep.subr.bf16.mxu0 0
      %1223 = vmatpush1.bf16.msra.mxu0 0
      %1224 = vmatprep.subr.bf16.mxu0 0
      %1225 = vmatpush1.bf16.msra.mxu0 0
      %1226 = vmatprep.subr.bf16.mxu0 0
      %1227 = vmatpush1.bf16.msra.mxu0 0
      %1228 = vmatprep.subr.bf16.mxu0 0
      %1229 = vmatpush1.bf16.msra.mxu0 0
      %1230 = vmatprep.subr.bf16.mxu0 0
      %1231 = vmatpush1.bf16.msra.mxu0 0
      %1232 = vmatprep.subr.bf16.mxu0 0
      %1233 = vmatpush1.bf16.msra.mxu0 0
      %1234 = vmatprep.subr.bf16.mxu0 0
      %1235 = vmatpush1.bf16.msra.mxu0 %v1213
      %1236 = vmatprep.subr.bf16.mxu0 0
      %1237 = vmatpush1.bf16.msra.mxu0 %v1211
      %1238 = vmatprep.subr.bf16.mxu0 0
      %1239 = vmatpush2.bf16.msra.mxu0 0
      %1240 = vmatprep.subr.bf16.mxu0 0
      %1241 = vmatpush2.bf16.msra.mxu0 0
      %1242 = vmatprep.subr.bf16.mxu0 0
      %1243 = vmatpush2.bf16.msra.mxu0 0
      %1244 = vmatprep.subr.bf16.mxu0 0
      %1245 = vmatpush2.bf16.msra.mxu0 0
      %1246 = vmatprep.subr.bf16.mxu0 0
      %1247 = vmatpush2.bf16.msra.mxu0 0
      %1248 = vmatprep.subr.bf16.mxu0 0
      %1249 = vmatpush2.bf16.msra.mxu0 0
      %1250 = vmatprep.subr.bf16.mxu0 0
      %1251 = vmatpush2.bf16.msra.mxu0 0
      %1252 = vmatprep.subr.bf16.mxu0 0
      %1253 = vmatpush2.bf16.msra.mxu0 0
      %1254 = vmatprep.mubr.bf16.mxu0 0
      %1255 = vmatmul.mubr.bf16.gmra.mxu0 %v1217
      %v1256 = vpop.f32.mrf.mxu0
      %v1257 = vadd.f32 0.0, %v1256
      %v1258 = vpop.f32.mrf.mxu0
      %v1259 = vpop.f32.mrf.mxu0
      %v1260 = vadd.f32 0.0, %v1259
      %v1261 = vpop.f32.mrf.mxu0
      %1262 = vmatprep.mubr.bf16.mxu0 0
      %1263 = vmatmul.mubr.bf16.gmra.mxu0 %v1220
      %v1264 = vpop.f32.mrf.mxu0
      %v1265 = vadd.f32 0.0, %v1264
      %v1266 = vpop.f32.mrf.mxu0
      %v1267 = vpop.f32.mrf.mxu0
      %v1268 = vadd.f32 0.0, %v1267
      %v1269 = vpop.f32.mrf.mxu0
      %1270 = vdwg.mxu0
      %1275 = vrot.lane.b32.xlu0 %v1257, 7
      %v1276 = vpop.permute.xlu0 %1275
      %1277 = vrot.lane.b32.xlu0 %v1260, 7
      %v1278 = vpop.permute.xlu0 %1277
      %1279 = vrot.lane.b32.xlu0 %v1265, 7
      %v1280 = vpop.permute.xlu0 %1279
      %1281 = vrot.lane.b32.xlu0 %v1268, 7
      %v1282 = vpop.permute.xlu0 %1281
      %v1287 = vadd.f32 %v1191, %v1276
      %v1288 = vadd.f32 %v1192, %v1278
      %v1289 = vadd.f32 %v1193, %v1280
      %v1290 = vadd.f32 %v1194, %v1282
      %s1291 = scalar_lea.vmem %s2, 32
      %v1292 = vld [vmem:[%s1291] sm:$0xf]
      %v1293 = vld [vmem:[%s1291 + $0x4] sm:$0xf]
      %v1294 = vld [vmem:[%s1291 + $0x8] sm:$0xf]
      %v1295 = vld [vmem:[%s1291 + $0xc] sm:$0xf]
      %v1300 = vunpack.c.l.b16 %v1292
      %v1301 = vunpack.c.l.b16 %v1293
      %v1302 = vunpack.c.l.b16 %v1294
      %v1303 = vunpack.c.l.b16 %v1295
      %v1304 = vpack.c.b16 %v1301, %v1300
      %v1305 = vpack.c.b16 %v1303, %v1302
      %1306 = vrot.lane.b32.xlu0 %v1116, 126
      %v1307 = vpop.permute.xlu0 %1306
      %1308 = vrot.lane.b32.xlu0 %v1117, 126
      %v1309 = vpop.permute.xlu0 %1308
      %v1313 = vsel %vm266, %v1304, 0
      %v1316 = vsel %vm266, %v1305, 0
      %1318 = vmatprep.subr.bf16.mxu0 0
      %1319 = vmatpush1.bf16.msra.mxu0 0
      %1320 = vmatprep.subr.bf16.mxu0 0
      %1321 = vmatpush1.bf16.msra.mxu0 0
      %1322 = vmatprep.subr.bf16.mxu0 0
      %1323 = vmatpush1.bf16.msra.mxu0 0
      %1324 = vmatprep.subr.bf16.mxu0 0
      %1325 = vmatpush1.bf16.msra.mxu0 0
      %1326 = vmatprep.subr.bf16.mxu0 0
      %1327 = vmatpush1.bf16.msra.mxu0 0
      %1328 = vmatprep.subr.bf16.mxu0 0
      %1329 = vmatpush1.bf16.msra.mxu0 0
      %1330 = vmatprep.subr.bf16.mxu0 0
      %1331 = vmatpush1.bf16.msra.mxu0 %v1309
      %1332 = vmatprep.subr.bf16.mxu0 0
      %1333 = vmatpush1.bf16.msra.mxu0 %v1307
      %1334 = vmatprep.subr.bf16.mxu0 0
      %1335 = vmatpush2.bf16.msra.mxu0 0
      %1336 = vmatprep.subr.bf16.mxu0 0
      %1337 = vmatpush2.bf16.msra.mxu0 0
      %1338 = vmatprep.subr.bf16.mxu0 0
      %1339 = vmatpush2.bf16.msra.mxu0 0
      %1340 = vmatprep.subr.bf16.mxu0 0
      %1341 = vmatpush2.bf16.msra.mxu0 0
      %1342 = vmatprep.subr.bf16.mxu0 0
      %1343 = vmatpush2.bf16.msra.mxu0 0
      %1344 = vmatprep.subr.bf16.mxu0 0
      %1345 = vmatpush2.bf16.msra.mxu0 0
      %1346 = vmatprep.subr.bf16.mxu0 0
      %1347 = vmatpush2.bf16.msra.mxu0 0
      %1348 = vmatprep.subr.bf16.mxu0 0
      %1349 = vmatpush2.bf16.msra.mxu0 0
      %1350 = vmatprep.mubr.bf16.mxu0 0
      %1351 = vmatmul.mubr.bf16.gmra.mxu0 %v1313
      %v1352 = vpop.f32.mrf.mxu0
      %v1353 = vadd.f32 0.0, %v1352
      %v1354 = vpop.f32.mrf.mxu0
      %v1355 = vpop.f32.mrf.mxu0
      %v1356 = vadd.f32 0.0, %v1355
      %v1357 = vpop.f32.mrf.mxu0
      %1358 = vmatprep.mubr.bf16.mxu0 0
      %1359 = vmatmul.mubr.bf16.gmra.mxu0 %v1316
      %v1360 = vpop.f32.mrf.mxu0
      %v1361 = vadd.f32 0.0, %v1360
      %v1362 = vpop.f32.mrf.mxu0
      %v1363 = vpop.f32.mrf.mxu0
      %v1364 = vadd.f32 0.0, %v1363
      %v1365 = vpop.f32.mrf.mxu0
      %1366 = vdwg.mxu0
      %1371 = vrot.lane.b32.xlu0 %v1353, 7
      %v1372 = vpop.permute.xlu0 %1371
      %1373 = vrot.lane.b32.xlu0 %v1356, 7
      %v1374 = vpop.permute.xlu0 %1373
      %1375 = vrot.lane.b32.xlu0 %v1361, 7
      %v1376 = vpop.permute.xlu0 %1375
      %1377 = vrot.lane.b32.xlu0 %v1364, 7
      %v1378 = vpop.permute.xlu0 %1377
      %v1383 = vadd.f32 %v1287, %v1372
      %v1384 = vadd.f32 %v1288, %v1374
      %v1385 = vadd.f32 %v1289, %v1376
      %v1386 = vadd.f32 %v1290, %v1378
      %s1387 = scalar_lea.vmem %s2, 48
      %v1388 = vld [vmem:[%s1387] sm:$0xf]
      %v1389 = vld [vmem:[%s1387 + $0x4] sm:$0xf]
      %v1390 = vld [vmem:[%s1387 + $0x8] sm:$0xf]
      %v1391 = vld [vmem:[%s1387 + $0xc] sm:$0xf]
      %v1396 = vunpack.c.l.b16 %v1388
      %v1397 = vunpack.c.l.b16 %v1389
      %v1398 = vunpack.c.l.b16 %v1390
      %v1399 = vunpack.c.l.b16 %v1391
      %v1400 = vpack.c.b16 %v1397, %v1396
      %v1401 = vpack.c.b16 %v1399, %v1398
      %1402 = vrot.lane.b32.xlu0 %v1116, 122
      %v1403 = vpop.permute.xlu0 %1402
      %1404 = vrot.lane.b32.xlu0 %v1117, 122
      %v1405 = vpop.permute.xlu0 %1404
      %v1409 = vsel %vm266, %v1400, 0
      %v1412 = vsel %vm266, %v1401, 0
      %1414 = vmatprep.subr.bf16.mxu0 0
      %1415 = vmatpush1.bf16.msra.mxu0 0
      %1416 = vmatprep.subr.bf16.mxu0 0
      %1417 = vmatpush1.bf16.msra.mxu0 0
      %1418 = vmatprep.subr.bf16.mxu0 0
      %1419 = vmatpush1.bf16.msra.mxu0 0
      %1420 = vmatprep.subr.bf16.mxu0 0
      %1421 = vmatpush1.bf16.msra.mxu0 0
      %1422 = vmatprep.subr.bf16.mxu0 0
      %1423 = vmatpush1.bf16.msra.mxu0 0
      %1424 = vmatprep.subr.bf16.mxu0 0
      %1425 = vmatpush1.bf16.msra.mxu0 0
      %1426 = vmatprep.subr.bf16.mxu0 0
      %1427 = vmatpush1.bf16.msra.mxu0 %v1405
      %1428 = vmatprep.subr.bf16.mxu0 0
      %1429 = vmatpush1.bf16.msra.mxu0 %v1403
      %1430 = vmatprep.subr.bf16.mxu0 0
      %1431 = vmatpush2.bf16.msra.mxu0 0
      %1432 = vmatprep.subr.bf16.mxu0 0
      %1433 = vmatpush2.bf16.msra.mxu0 0
      %1434 = vmatprep.subr.bf16.mxu0 0
      %1435 = vmatpush2.bf16.msra.mxu0 0
      %1436 = vmatprep.subr.bf16.mxu0 0
      %1437 = vmatpush2.bf16.msra.mxu0 0
      %1438 = vmatprep.subr.bf16.mxu0 0
      %1439 = vmatpush2.bf16.msra.mxu0 0
      %1440 = vmatprep.subr.bf16.mxu0 0
      %1441 = vmatpush2.bf16.msra.mxu0 0
      %1442 = vmatprep.subr.bf16.mxu0 0
      %1443 = vmatpush2.bf16.msra.mxu0 0
      %1444 = vmatprep.subr.bf16.mxu0 0
      %1445 = vmatpush2.bf16.msra.mxu0 0
      %1446 = vmatprep.mubr.bf16.mxu0 0
      %1447 = vmatmul.mubr.bf16.gmra.mxu0 %v1409
      %v1448 = vpop.f32.mrf.mxu0
      %v1449 = vadd.f32 0.0, %v1448
      %v1450 = vpop.f32.mrf.mxu0
      %v1451 = vpop.f32.mrf.mxu0
      %v1452 = vadd.f32 0.0, %v1451
      %v1453 = vpop.f32.mrf.mxu0
      %1454 = vmatprep.mubr.bf16.mxu0 0
      %1455 = vmatmul.mubr.bf16.gmra.mxu0 %v1412
      %v1456 = vpop.f32.mrf.mxu0
      %v1457 = vadd.f32 0.0, %v1456
      %v1458 = vpop.f32.mrf.mxu0
      %v1459 = vpop.f32.mrf.mxu0
      %v1460 = vadd.f32 0.0, %v1459
      %v1461 = vpop.f32.mrf.mxu0
      %1462 = vdwg.mxu0
      %1467 = vrot.lane.b32.xlu0 %v1449, 7
      %v1468 = vpop.permute.xlu0 %1467
      %1469 = vrot.lane.b32.xlu0 %v1452, 7
      %v1470 = vpop.permute.xlu0 %1469
      %1471 = vrot.lane.b32.xlu0 %v1457, 7
      %v1472 = vpop.permute.xlu0 %1471
      %1473 = vrot.lane.b32.xlu0 %v1460, 7
      %v1474 = vpop.permute.xlu0 %1473
      %v1479 = vadd.f32 %v1383, %v1468
      %v1480 = vadd.f32 %v1384, %v1470
      %v1481 = vadd.f32 %v1385, %v1472
      %v1482 = vadd.f32 %v1386, %v1474
      %s1483 = scalar_lea.vmem %s2, 64
      %v1484 = vld [vmem:[%s1483] sm:$0xf]
      %v1485 = vld [vmem:[%s1483 + $0x4] sm:$0xf]
      %v1486 = vld [vmem:[%s1483 + $0x8] sm:$0xf]
      %v1487 = vld [vmem:[%s1483 + $0xc] sm:$0xf]
      %v1492 = vunpack.c.l.b16 %v1484
      %v1493 = vunpack.c.l.b16 %v1485
      %v1494 = vunpack.c.l.b16 %v1486
      %v1495 = vunpack.c.l.b16 %v1487
      %v1496 = vpack.c.b16 %v1493, %v1492
      %v1497 = vpack.c.b16 %v1495, %v1494
      %1498 = vrot.lane.b32.xlu0 %v1116, 121
      %v1499 = vpop.permute.xlu0 %1498
      %1500 = vrot.lane.b32.xlu0 %v1117, 121
      %v1501 = vpop.permute.xlu0 %1500
      %v1505 = vsel %vm266, %v1496, 0
      %v1508 = vsel %vm266, %v1497, 0
      %1510 = vmatprep.subr.bf16.mxu0 0
      %1511 = vmatpush1.bf16.msra.mxu0 0
      %1512 = vmatprep.subr.bf16.mxu0 0
      %1513 = vmatpush1.bf16.msra.mxu0 0
      %1514 = vmatprep.subr.bf16.mxu0 0
      %1515 = vmatpush1.bf16.msra.mxu0 0
      %1516 = vmatprep.subr.bf16.mxu0 0
      %1517 = vmatpush1.bf16.msra.mxu0 0
      %1518 = vmatprep.subr.bf16.mxu0 0
      %1519 = vmatpush1.bf16.msra.mxu0 0
      %1520 = vmatprep.subr.bf16.mxu0 0
      %1521 = vmatpush1.bf16.msra.mxu0 0
      %1522 = vmatprep.subr.bf16.mxu0 0
      %1523 = vmatpush1.bf16.msra.mxu0 %v1501
      %1524 = vmatprep.subr.bf16.mxu0 0
      %1525 = vmatpush1.bf16.msra.mxu0 %v1499
      %1526 = vmatprep.subr.bf16.mxu0 0
      %1527 = vmatpush2.bf16.msra.mxu0 0
      %1528 = vmatprep.subr.bf16.mxu0 0
      %1529 = vmatpush2.bf16.msra.mxu0 0
      %1530 = vmatprep.subr.bf16.mxu0 0
      %1531 = vmatpush2.bf16.msra.mxu0 0
      %1532 = vmatprep.subr.bf16.mxu0 0
      %1533 = vmatpush2.bf16.msra.mxu0 0
      %1534 = vmatprep.subr.bf16.mxu0 0
      %1535 = vmatpush2.bf16.msra.mxu0 0
      %1536 = vmatprep.subr.bf16.mxu0 0
      %1537 = vmatpush2.bf16.msra.mxu0 0
      %1538 = vmatprep.subr.bf16.mxu0 0
      %1539 = vmatpush2.bf16.msra.mxu0 0
      %1540 = vmatprep.subr.bf16.mxu0 0
      %1541 = vmatpush2.bf16.msra.mxu0 0
      %1542 = vmatprep.mubr.bf16.mxu0 0
      %1543 = vmatmul.mubr.bf16.gmra.mxu0 %v1505
      %v1544 = vpop.f32.mrf.mxu0
      %v1545 = vadd.f32 0.0, %v1544
      %v1546 = vpop.f32.mrf.mxu0
      %v1547 = vpop.f32.mrf.mxu0
      %v1548 = vadd.f32 0.0, %v1547
      %v1549 = vpop.f32.mrf.mxu0
      %1550 = vmatprep.mubr.bf16.mxu0 0
      %1551 = vmatmul.mubr.bf16.gmra.mxu0 %v1508
      %v1552 = vpop.f32.mrf.mxu0
      %v1553 = vadd.f32 0.0, %v1552
      %v1554 = vpop.f32.mrf.mxu0
      %v1555 = vpop.f32.mrf.mxu0
      %v1556 = vadd.f32 0.0, %v1555
      %v1557 = vpop.f32.mrf.mxu0
      %1558 = vdwg.mxu0
      %1563 = vrot.lane.b32.xlu0 %v1545, 7
      %v1564 = vpop.permute.xlu0 %1563
      %1565 = vrot.lane.b32.xlu0 %v1548, 7
      %v1566 = vpop.permute.xlu0 %1565
      %1567 = vrot.lane.b32.xlu0 %v1553, 7
      %v1568 = vpop.permute.xlu0 %1567
      %1569 = vrot.lane.b32.xlu0 %v1556, 7
      %v1570 = vpop.permute.xlu0 %1569
      %v1575 = vadd.f32 %v1479, %v1564
      %v1576 = vadd.f32 %v1480, %v1566
      %v1577 = vadd.f32 %v1481, %v1568
      %v1578 = vadd.f32 %v1482, %v1570
      %s1579 = scalar_lea.vmem %s2, 80
      %v1580 = vld [vmem:[%s1579] sm:$0xf]
      %v1581 = vld [vmem:[%s1579 + $0x4] sm:$0xf]
      %v1582 = vld [vmem:[%s1579 + $0x8] sm:$0xf]
      %v1583 = vld [vmem:[%s1579 + $0xc] sm:$0xf]
      %v1588 = vunpack.c.l.b16 %v1580
      %v1589 = vunpack.c.l.b16 %v1581
      %v1590 = vunpack.c.l.b16 %v1582
      %v1591 = vunpack.c.l.b16 %v1583
      %v1592 = vpack.c.b16 %v1589, %v1588
      %v1593 = vpack.c.b16 %v1591, %v1590
      %1594 = vrot.lane.b32.xlu0 %v1116, 120
      %v1595 = vpop.permute.xlu0 %1594
      %1596 = vrot.lane.b32.xlu0 %v1117, 120
      %v1597 = vpop.permute.xlu0 %1596
      %v1601 = vsel %vm266, %v1592, 0
      %v1604 = vsel %vm266, %v1593, 0
      %1606 = vmatprep.subr.bf16.mxu0 0
      %1607 = vmatpush1.bf16.msra.mxu0 0
      %1608 = vmatprep.subr.bf16.mxu0 0
      %1609 = vmatpush1.bf16.msra.mxu0 0
      %1610 = vmatprep.subr.bf16.mxu0 0
      %1611 = vmatpush1.bf16.msra.mxu0 0
      %1612 = vmatprep.subr.bf16.mxu0 0
      %1613 = vmatpush1.bf16.msra.mxu0 0
      %1614 = vmatprep.subr.bf16.mxu0 0
      %1615 = vmatpush1.bf16.msra.mxu0 0
      %1616 = vmatprep.subr.bf16.mxu0 0
      %1617 = vmatpush1.bf16.msra.mxu0 0
      %1618 = vmatprep.subr.bf16.mxu0 0
      %1619 = vmatpush1.bf16.msra.mxu0 %v1597
      %1620 = vmatprep.subr.bf16.mxu0 0
      %1621 = vmatpush1.bf16.msra.mxu0 %v1595
      %1622 = vmatprep.subr.bf16.mxu0 0
      %1623 = vmatpush2.bf16.msra.mxu0 0
      %1624 = vmatprep.subr.bf16.mxu0 0
      %1625 = vmatpush2.bf16.msra.mxu0 0
      %1626 = vmatprep.subr.bf16.mxu0 0
      %1627 = vmatpush2.bf16.msra.mxu0 0
      %1628 = vmatprep.subr.bf16.mxu0 0
      %1629 = vmatpush2.bf16.msra.mxu0 0
      %1630 = vmatprep.subr.bf16.mxu0 0
      %1631 = vmatpush2.bf16.msra.mxu0 0
      %1632 = vmatprep.subr.bf16.mxu0 0
      %1633 = vmatpush2.bf16.msra.mxu0 0
      %1634 = vmatprep.subr.bf16.mxu0 0
      %1635 = vmatpush2.bf16.msra.mxu0 0
      %1636 = vmatprep.subr.bf16.mxu0 0
      %1637 = vmatpush2.bf16.msra.mxu0 0
      %1638 = vmatprep.mubr.bf16.mxu0 0
      %1639 = vmatmul.mubr.bf16.gmra.mxu0 %v1601
      %v1640 = vpop.f32.mrf.mxu0
      %v1641 = vadd.f32 0.0, %v1640
      %v1642 = vpop.f32.mrf.mxu0
      %v1643 = vpop.f32.mrf.mxu0
      %v1644 = vadd.f32 0.0, %v1643
      %v1645 = vpop.f32.mrf.mxu0
      %1646 = vmatprep.mubr.bf16.mxu0 0
      %1647 = vmatmul.mubr.bf16.gmra.mxu0 %v1604
      %v1648 = vpop.f32.mrf.mxu0
      %v1649 = vadd.f32 0.0, %v1648
      %v1650 = vpop.f32.mrf.mxu0
      %v1651 = vpop.f32.mrf.mxu0
      %v1652 = vadd.f32 0.0, %v1651
      %v1653 = vpop.f32.mrf.mxu0
      %1654 = vdwg.mxu0
      %1659 = vrot.lane.b32.xlu0 %v1641, 7
      %v1660 = vpop.permute.xlu0 %1659
      %1661 = vrot.lane.b32.xlu0 %v1644, 7
      %v1662 = vpop.permute.xlu0 %1661
      %1663 = vrot.lane.b32.xlu0 %v1649, 7
      %v1664 = vpop.permute.xlu0 %1663
      %1665 = vrot.lane.b32.xlu0 %v1652, 7
      %v1666 = vpop.permute.xlu0 %1665
      %v1671 = vadd.f32 %v1575, %v1660
      %v1672 = vadd.f32 %v1576, %v1662
      %v1673 = vadd.f32 %v1577, %v1664
      %v1674 = vadd.f32 %v1578, %v1666
      %s1675 = scalar_lea.vmem %s2, 96
      %v1676 = vld [vmem:[%s1675] sm:$0xf]
      %v1677 = vld [vmem:[%s1675 + $0x4] sm:$0xf]
      %v1678 = vld [vmem:[%s1675 + $0x8] sm:$0xf]
      %v1679 = vld [vmem:[%s1675 + $0xc] sm:$0xf]
      %v1684 = vunpack.c.l.b16 %v1676
      %v1685 = vunpack.c.l.b16 %v1677
      %v1686 = vunpack.c.l.b16 %v1678
      %v1687 = vunpack.c.l.b16 %v1679
      %v1688 = vpack.c.b16 %v1685, %v1684
      %v1689 = vpack.c.b16 %v1687, %v1686
      %1690 = vrot.lane.b32.xlu0 %v1116, 116
      %v1691 = vpop.permute.xlu0 %1690
      %1692 = vrot.lane.b32.xlu0 %v1117, 116
      %v1693 = vpop.permute.xlu0 %1692
      %v1697 = vsel %vm266, %v1688, 0
      %v1700 = vsel %vm266, %v1689, 0
      %1702 = vmatprep.subr.bf16.mxu0 0
      %1703 = vmatpush1.bf16.msra.mxu0 0
      %1704 = vmatprep.subr.bf16.mxu0 0
      %1705 = vmatpush1.bf16.msra.mxu0 0
      %1706 = vmatprep.subr.bf16.mxu0 0
      %1707 = vmatpush1.bf16.msra.mxu0 0
      %1708 = vmatprep.subr.bf16.mxu0 0
      %1709 = vmatpush1.bf16.msra.mxu0 0
      %1710 = vmatprep.subr.bf16.mxu0 0
      %1711 = vmatpush1.bf16.msra.mxu0 0
      %1712 = vmatprep.subr.bf16.mxu0 0
      %1713 = vmatpush1.bf16.msra.mxu0 0
      %1714 = vmatprep.subr.bf16.mxu0 0
      %1715 = vmatpush1.bf16.msra.mxu0 %v1693
      %1716 = vmatprep.subr.bf16.mxu0 0
      %1717 = vmatpush1.bf16.msra.mxu0 %v1691
      %1718 = vmatprep.subr.bf16.mxu0 0
      %1719 = vmatpush2.bf16.msra.mxu0 0
      %1720 = vmatprep.subr.bf16.mxu0 0
      %1721 = vmatpush2.bf16.msra.mxu0 0
      %1722 = vmatprep.subr.bf16.mxu0 0
      %1723 = vmatpush2.bf16.msra.mxu0 0
      %1724 = vmatprep.subr.bf16.mxu0 0
      %1725 = vmatpush2.bf16.msra.mxu0 0
      %1726 = vmatprep.subr.bf16.mxu0 0
      %1727 = vmatpush2.bf16.msra.mxu0 0
      %1728 = vmatprep.subr.bf16.mxu0 0
      %1729 = vmatpush2.bf16.msra.mxu0 0
      %1730 = vmatprep.subr.bf16.mxu0 0
      %1731 = vmatpush2.bf16.msra.mxu0 0
      %1732 = vmatprep.subr.bf16.mxu0 0
      %1733 = vmatpush2.bf16.msra.mxu0 0
      %1734 = vmatprep.mubr.bf16.mxu0 0
      %1735 = vmatmul.mubr.bf16.gmra.mxu0 %v1697
      %v1736 = vpop.f32.mrf.mxu0
      %v1737 = vadd.f32 0.0, %v1736
      %v1738 = vpop.f32.mrf.mxu0
      %v1739 = vpop.f32.mrf.mxu0
      %v1740 = vadd.f32 0.0, %v1739
      %v1741 = vpop.f32.mrf.mxu0
      %1742 = vmatprep.mubr.bf16.mxu0 0
      %1743 = vmatmul.mubr.bf16.gmra.mxu0 %v1700
      %v1744 = vpop.f32.mrf.mxu0
      %v1745 = vadd.f32 0.0, %v1744
      %v1746 = vpop.f32.mrf.mxu0
      %v1747 = vpop.f32.mrf.mxu0
      %v1748 = vadd.f32 0.0, %v1747
      %v1749 = vpop.f32.mrf.mxu0
      %1750 = vdwg.mxu0
      %1755 = vrot.lane.b32.xlu0 %v1737, 7
      %v1756 = vpop.permute.xlu0 %1755
      %1757 = vrot.lane.b32.xlu0 %v1740, 7
      %v1758 = vpop.permute.xlu0 %1757
      %1759 = vrot.lane.b32.xlu0 %v1745, 7
      %v1760 = vpop.permute.xlu0 %1759
      %1761 = vrot.lane.b32.xlu0 %v1748, 7
      %v1762 = vpop.permute.xlu0 %1761
      %v1767 = vadd.f32 %v1671, %v1756
      %v1768 = vadd.f32 %v1672, %v1758
      %v1769 = vadd.f32 %v1673, %v1760
      %v1770 = vadd.f32 %v1674, %v1762
      %s1771 = scalar_lea.vmem %s2, 112
      %v1772 = vld [vmem:[%s1771] sm:$0xf]
      %v1773 = vld [vmem:[%s1771 + $0x4] sm:$0xf]
      %v1774 = vld [vmem:[%s1771 + $0x8] sm:$0xf]
      %v1775 = vld [vmem:[%s1771 + $0xc] sm:$0xf]
      %v1780 = vunpack.c.l.b16 %v1772
      %v1781 = vunpack.c.l.b16 %v1773
      %v1782 = vunpack.c.l.b16 %v1774
      %v1783 = vunpack.c.l.b16 %v1775
      %v1784 = vpack.c.b16 %v1781, %v1780
      %v1785 = vpack.c.b16 %v1783, %v1782
      %1786 = vrot.lane.b32.xlu0 %v1116, 115
      %v1787 = vpop.permute.xlu0 %1786
      %1788 = vrot.lane.b32.xlu0 %v1117, 115
      %v1789 = vpop.permute.xlu0 %1788
      %v1793 = vsel %vm266, %v1784, 0
      %v1796 = vsel %vm266, %v1785, 0
      %1798 = vmatprep.subr.bf16.mxu0 0
      %1799 = vmatpush1.bf16.msra.mxu0 0
      %1800 = vmatprep.subr.bf16.mxu0 0
      %1801 = vmatpush1.bf16.msra.mxu0 0
      %1802 = vmatprep.subr.bf16.mxu0 0
      %1803 = vmatpush1.bf16.msra.mxu0 0
      %1804 = vmatprep.subr.bf16.mxu0 0
      %1805 = vmatpush1.bf16.msra.mxu0 0
      %1806 = vmatprep.subr.bf16.mxu0 0
      %1807 = vmatpush1.bf16.msra.mxu0 0
      %1808 = vmatprep.subr.bf16.mxu0 0
      %1809 = vmatpush1.bf16.msra.mxu0 0
      %1810 = vmatprep.subr.bf16.mxu0 0
      %1811 = vmatpush1.bf16.msra.mxu0 %v1789
      %1812 = vmatprep.subr.bf16.mxu0 0
      %1813 = vmatpush1.bf16.msra.mxu0 %v1787
      %1814 = vmatprep.subr.bf16.mxu0 0
      %1815 = vmatpush2.bf16.msra.mxu0 0
      %1816 = vmatprep.subr.bf16.mxu0 0
      %1817 = vmatpush2.bf16.msra.mxu0 0
      %1818 = vmatprep.subr.bf16.mxu0 0
      %1819 = vmatpush2.bf16.msra.mxu0 0
      %1820 = vmatprep.subr.bf16.mxu0 0
      %1821 = vmatpush2.bf16.msra.mxu0 0
      %1822 = vmatprep.subr.bf16.mxu0 0
      %1823 = vmatpush2.bf16.msra.mxu0 0
      %1824 = vmatprep.subr.bf16.mxu0 0
      %1825 = vmatpush2.bf16.msra.mxu0 0
      %1826 = vmatprep.subr.bf16.mxu0 0
      %1827 = vmatpush2.bf16.msra.mxu0 0
      %1828 = vmatprep.subr.bf16.mxu0 0
      %1829 = vmatpush2.bf16.msra.mxu0 0
      %1830 = vmatprep.mubr.bf16.mxu0 0
      %1831 = vmatmul.mubr.bf16.gmra.mxu0 %v1793
      %v1832 = vpop.f32.mrf.mxu0
      %v1833 = vadd.f32 0.0, %v1832
      %v1834 = vpop.f32.mrf.mxu0
      %v1835 = vpop.f32.mrf.mxu0
      %v1836 = vadd.f32 0.0, %v1835
      %v1837 = vpop.f32.mrf.mxu0
      %1838 = vmatprep.mubr.bf16.mxu0 0
      %1839 = vmatmul.mubr.bf16.gmra.mxu0 %v1796
      %v1840 = vpop.f32.mrf.mxu0
      %v1841 = vadd.f32 0.0, %v1840
      %v1842 = vpop.f32.mrf.mxu0
      %v1843 = vpop.f32.mrf.mxu0
      %v1844 = vadd.f32 0.0, %v1843
      %v1845 = vpop.f32.mrf.mxu0
      %1846 = vdwg.mxu0
      %1851 = vrot.lane.b32.xlu0 %v1833, 7
      %v1852 = vpop.permute.xlu0 %1851
      %1853 = vrot.lane.b32.xlu0 %v1836, 7
      %v1854 = vpop.permute.xlu0 %1853
      %1855 = vrot.lane.b32.xlu0 %v1841, 7
      %v1856 = vpop.permute.xlu0 %1855
      %1857 = vrot.lane.b32.xlu0 %v1844, 7
      %v1858 = vpop.permute.xlu0 %1857
      %v1863 = vadd.f32 %v1767, %v1852
      %v1864 = vadd.f32 %v1768, %v1854
      %v1865 = vadd.f32 %v1769, %v1856
      %v1866 = vadd.f32 %v1770, %v1858
      %s1867 = scalar_lea.vmem %s2, 128
      %v1868 = vld [vmem:[%s1867] sm:$0xf]
      %v1869 = vld [vmem:[%s1867 + $0x4] sm:$0xf]
      %v1870 = vld [vmem:[%s1867 + $0x8] sm:$0xf]
      %v1871 = vld [vmem:[%s1867 + $0xc] sm:$0xf]
      %v1876 = vunpack.c.l.b16 %v1868
      %v1877 = vunpack.c.l.b16 %v1869
      %v1878 = vunpack.c.l.b16 %v1870
      %v1879 = vunpack.c.l.b16 %v1871
      %v1880 = vpack.c.b16 %v1877, %v1876
      %v1881 = vpack.c.b16 %v1879, %v1878
      %1882 = vrot.lane.b32.xlu0 %v1116, 114
      %v1883 = vpop.permute.xlu0 %1882
      %1884 = vrot.lane.b32.xlu0 %v1117, 114
      %v1885 = vpop.permute.xlu0 %1884
      %v1889 = vsel %vm266, %v1880, 0
      %v1892 = vsel %vm266, %v1881, 0
      %1894 = vmatprep.subr.bf16.mxu0 0
      %1895 = vmatpush1.bf16.msra.mxu0 0
      %1896 = vmatprep.subr.bf16.mxu0 0
      %1897 = vmatpush1.bf16.msra.mxu0 0
      %1898 = vmatprep.subr.bf16.mxu0 0
      %1899 = vmatpush1.bf16.msra.mxu0 0
      %1900 = vmatprep.subr.bf16.mxu0 0
      %1901 = vmatpush1.bf16.msra.mxu0 0
      %1902 = vmatprep.subr.bf16.mxu0 0
      %1903 = vmatpush1.bf16.msra.mxu0 0
      %1904 = vmatprep.subr.bf16.mxu0 0
      %1905 = vmatpush1.bf16.msra.mxu0 0
      %1906 = vmatprep.subr.bf16.mxu0 0
      %1907 = vmatpush1.bf16.msra.mxu0 %v1885
      %1908 = vmatprep.subr.bf16.mxu0 0
      %1909 = vmatpush1.bf16.msra.mxu0 %v1883
      %1910 = vmatprep.subr.bf16.mxu0 0
      %1911 = vmatpush2.bf16.msra.mxu0 0
      %1912 = vmatprep.subr.bf16.mxu0 0
      %1913 = vmatpush2.bf16.msra.mxu0 0
      %1914 = vmatprep.subr.bf16.mxu0 0
      %1915 = vmatpush2.bf16.msra.mxu0 0
      %1916 = vmatprep.subr.bf16.mxu0 0
      %1917 = vmatpush2.bf16.msra.mxu0 0
      %1918 = vmatprep.subr.bf16.mxu0 0
      %1919 = vmatpush2.bf16.msra.mxu0 0
      %1920 = vmatprep.subr.bf16.mxu0 0
      %1921 = vmatpush2.bf16.msra.mxu0 0
      %1922 = vmatprep.subr.bf16.mxu0 0
      %1923 = vmatpush2.bf16.msra.mxu0 0
      %1924 = vmatprep.subr.bf16.mxu0 0
      %1925 = vmatpush2.bf16.msra.mxu0 0
      %1926 = vmatprep.mubr.bf16.mxu0 0
      %1927 = vmatmul.mubr.bf16.gmra.mxu0 %v1889
      %v1928 = vpop.f32.mrf.mxu0
      %v1929 = vadd.f32 0.0, %v1928
      %v1930 = vpop.f32.mrf.mxu0
      %v1931 = vpop.f32.mrf.mxu0
      %v1932 = vadd.f32 0.0, %v1931
      %v1933 = vpop.f32.mrf.mxu0
      %1934 = vmatprep.mubr.bf16.mxu0 0
      %1935 = vmatmul.mubr.bf16.gmra.mxu0 %v1892
      %v1936 = vpop.f32.mrf.mxu0
      %v1937 = vadd.f32 0.0, %v1936
      %v1938 = vpop.f32.mrf.mxu0
      %v1939 = vpop.f32.mrf.mxu0
      %v1940 = vadd.f32 0.0, %v1939
      %v1941 = vpop.f32.mrf.mxu0
      %1942 = vdwg.mxu0
      %1947 = vrot.lane.b32.xlu0 %v1929, 7
      %v1948 = vpop.permute.xlu0 %1947
      %1949 = vrot.lane.b32.xlu0 %v1932, 7
      %v1950 = vpop.permute.xlu0 %1949
      %1951 = vrot.lane.b32.xlu0 %v1937, 7
      %v1952 = vpop.permute.xlu0 %1951
      %1953 = vrot.lane.b32.xlu0 %v1940, 7
      %v1954 = vpop.permute.xlu0 %1953
      %v1959 = vadd.f32 %v1863, %v1948
      %v1960 = vadd.f32 %v1864, %v1950
      %v1961 = vadd.f32 %v1865, %v1952
      %v1962 = vadd.f32 %v1866, %v1954
      %vm1963 = vcmask 343040
      %1964 = vst.msk [vmem:[%s224] sm:$0xff] %vm1963, 0.0
      %1965 = vst.msk [vmem:[%s224 + $0x8] sm:$0xff] %vm1963, 0.0
      %1966 = vst.msk [vmem:[%s224 + $0x10] sm:$0xff] %vm1963, 0.0
      %1967 = vst.msk [vmem:[%s224 + $0x18] sm:$0xff] %vm1963, 0.0
      %1968 = vrot.lane.b32.xlu0 %v953, 7
      %v1969 = vpop.permute.xlu0 %1968
      %v1971 = vmul.f32 %v1959, %v1969
      %v1972 = vmul.f32 %v1960, %v1969
      %v1973 = vmul.f32 %v1961, %v1969
      %v1974 = vmul.f32 %v1962, %v1969
      %vm1975 = vcmask 252984
      %1976 = vst.msk [vmem:[%s224] sm:$0xff] %vm1975, %v1971
      %1977 = vst.msk [vmem:[%s224 + $0x8] sm:$0xff] %vm1975, %v1972
      %1978 = vst.msk [vmem:[%s224 + $0x10] sm:$0xff] %vm1975, %v1973
      %1979 = vst.msk [vmem:[%s224 + $0x18] sm:$0xff] %vm1975, %v1974
      %p1980 = scmp.lt.s32.totalorder %s16, 1
      %s1981 = scalar_select %p1980, %s16, 1
      %s1982 = smul.addr %s1981, 4
      %s1983 = smul.addr %s1982, 8
      %s1984 = scalar_lea.vmem %s5, %s1983
      // Predicated region
      $region41: #{_lambda_.13} parent=39 // pred_check
        %p1985 = pneg %p144
      $region42: #{_lambda_.13} parent=39 // pred_check_branch
        %1987 = sbr.rel (%p1985) target = $region44
      $region43: #{_lambda_.13} parent=39 // pred_region
        _
      $region44: #{_lambda_.13} parent=39 // pred_fallthru
        _
    $region40: #{_lambda_.13} parent=5 // pred_fallthru
      _
    %p1988 = scmp.le.s32.totalorder 2, %s11
    // Predicated region
    $region45: #{_lambda_.13} parent=5 // pred_check
      %p1989 = pneg %p1988
    $region46: #{_lambda_.13} parent=5 // pred_check_branch
      %1991 = sbr.rel (%p1989) target = $region48
    $region47: #{_lambda_.13} parent=5 // pred_region
      %s1992 = ssub.s32 %s11, 2
      // Predicated region
      $region49: #{_lambda_.13} parent=47 // pred_check
        %p1993 = pneg %p150
      $region50: #{_lambda_.13} parent=47 // pred_check_branch
        %1995 = sbr.rel (%p1993) target = $region52
      $region51: #{_lambda_.13} parent=47 // pred_region
        %p1996 = scmp.lt.s32.totalorder %s17, 1
        %s1997 = scalar_select %p1996, %s17, 1
        %s1998 = smul.addr %s1997, 4
        %s1999 = smul.addr %s1998, 8
        %s2000 = scalar_lea.vmem %s5, %s1999
      $region52: #{_lambda_.13} parent=47 // pred_fallthru
        _
    $region48: #{_lambda_.13} parent=5 // pred_fallthru
      _
  $region6: #{_lambda_.13} parent=0 // loop_footer
    %s15 = sadd.s32 1, %s11
  $region7: #{_lambda_.13} parent=0 // loop_footer_branch
    %10 = sbr.rel target = $region3
  $region8: #{_lambda_.13} parent=0 // loop_exit
    _

</llo_original>
